<compile_context>
chip_gen: v6e
topology: v6e:2x2x1
jax: 0.10.0
libtpu: 0.0.40
codegen_flags: <defaults>
</compile_context>

<pallas_src>
import jax
import jax.numpy as jnp
from jax.experimental import pallas as pl
from jax.experimental.pallas import tpu as pltpu


# ----------------------------------------------------------------------------
# Kernel
# ----------------------------------------------------------------------------
def _layer_norm(x, w, b, eps=1e-5):
    mu = jnp.mean(x, axis=-1, keepdims=True)
    var = jnp.mean((x - mu) ** 2, axis=-1, keepdims=True)
    return (x - mu) * jax.lax.rsqrt(var + eps) * w + b


def encoder_kernel(x_ref,                      # (TB, S, E)        bf16
                   pe_ref,                     # (S, d)            f32  (pe@Wpe + b_in)
                   w_word_ref,                 # (E, d)            bf16
                   qkv_w_ref,  qkv_b_ref,      # (1, d, 3d) bf16 / (1, 1, 3d) f32
                   out_w_ref,  out_b_ref,      # (1, nh, hd, d) bf16 / (1, 1, d) f32
                   ln1_w_ref,  ln1_b_ref,      # (1, 1, d) f32
                   ff1_w_ref,  ff1_b_ref,      # (1, d, dff) bf16 / (1, 1, dff) f32
                   ff2_w_ref,  ff2_b_ref,      # (1, dff, d) bf16 / (1, 1, d) f32
                   ln2_w_ref,  ln2_b_ref,      # (1, 1, d) f32
                   head_w_ref, head_b_ref,     # (d, 2*doc) bf16 / (1, 2*doc) f32
                   o_ref,                      # (1, TB, 2*doc)    f32
                   h_ref):                     # scratch (TB*S, d) f32
    l = pl.program_id(1)                       # layer index (grid axis 1)
    tb, S, E = x_ref.shape
    d_model = w_word_ref.shape[1]
    nhead, hd = out_w_ref.shape[1], out_w_ref.shape[2]
    n = tb * S                                 # rows fed to every matmul
    mm_dt = qkv_w_ref.dtype                    # MXU operand dtype (bf16)

    # ---- input linear (+ positional-code bias) + relu, first layer step only
    @pl.when(l == 0)
    def _():
        x = x_ref[...].reshape(n, E)
        xw = jnp.dot(x, w_word_ref[...], preferred_element_type=jnp.float32)
        h_ref[...] = jnp.maximum(
            (xw.reshape(tb, S, d_model) + pe_ref[...][None]).reshape(n, d_model),
            0.0)

    h = h_ref[...]                                                   # (n, d) f32

    # ---- one transformer encoder layer (post-norm, relu FFN, eval mode) ----
    # fused QKV projection (1/sqrt(hd) already folded into W_q / b_q)
    qkv = jnp.dot(h.astype(mm_dt), qkv_w_ref[0],
                  preferred_element_type=jnp.float32) + qkv_b_ref[0]  # (n, 3d)
    qkv16 = qkv.astype(mm_dt)

    def split_heads(off):                       # (n, d) lanes -> (nh*tb, S, hd)
        return jnp.concatenate(
            [qkv16[:, off + j * hd: off + (j + 1) * hd].reshape(tb, S, hd)
             for j in range(nhead)],
            axis=0)

    q = split_heads(0)
    k = split_heads(d_model)
    v = split_heads(2 * d_model)

    # one batched QK^T over all (head, batch-row) pairs, bf16 in / f32 acc
    s = jnp.einsum('bqd,bkd->bqk', q, k,
                   preferred_element_type=jnp.float32)      # (nh*tb, S, S)
    s = s - jnp.max(s, axis=-1, keepdims=True)
    p = jnp.exp(s)
    p = p * pl.reciprocal(jnp.sum(p, axis=-1, keepdims=True), approx=True)

    # one batched P@V, bf16 in / f32 acc
    ctx = jnp.einsum('bqk,bkd->bqd', p.astype(mm_dt), v,
                     preferred_element_type=jnp.float32)    # (nh*tb, S, hd)

    # head merge folded into the out-projection: head-batched matmul + sum,
    # no lane-axis concat
    ctx3 = ctx.astype(mm_dt).reshape(nhead, n, hd)
    attn_h = jnp.einsum('hnc,hcd->hnd', ctx3, out_w_ref[0],
                        preferred_element_type=jnp.float32)  # (nh, n, d)
    attn = attn_h[0]
    for j in range(1, nhead):
        attn = attn + attn_h[j]
    attn = attn + out_b_ref[0]

    h = _layer_norm(h + attn, ln1_w_ref[0], ln1_b_ref[0])

    # feed-forward (relu activation, dim_feedforward = PyTorch default)
    ff = jnp.maximum(
        jnp.dot(h.astype(mm_dt), ff1_w_ref[0],
                preferred_element_type=jnp.float32) + ff1_b_ref[0],
        0.0)
    ff = jnp.dot(ff.astype(mm_dt), ff2_w_ref[0],
                 preferred_element_type=jnp.float32) + ff2_b_ref[0]

    h = _layer_norm(h + ff, ln2_w_ref[0], ln2_b_ref[0])
    h_ref[...] = h

    # ---- last layer: relu, mean over sequence FIRST, then fused E/logV head
    @pl.when(l == pl.num_programs(1) - 1)
    def _():
        m = jnp.mean(jnp.maximum(h, 0.0).reshape(tb, S, d_model), axis=1)  # (TB, d)
        ev = jnp.dot(m.astype(head_w_ref.dtype), head_w_ref[...],
                     preferred_element_type=jnp.float32) + head_b_ref[...]
        o_ref[0] = ev                                                      # (TB, 2doc)


# ----------------------------------------------------------------------------
# Parameter initialization (deterministic, PyTorch-Linear-style uniform)
# ----------------------------------------------------------------------------
def init_params(key, word_embedding_size, document_embedding_size, d_model,
                nhead, num_layers, max_log2len=8, dim_feedforward=2048,
                logvar_init=-100.0):
    def linear(k, fan_in, fan_out):
        k1, k2 = jax.random.split(k)
        bound = 1.0 / float(fan_in) ** 0.5
        w = jax.random.uniform(k1, (fan_out, fan_in), jnp.float32, -bound, bound)
        b = jax.random.uniform(k2, (fan_out,), jnp.float32, -bound, bound)
        return w, b

    keys = jax.random.split(key, 4 + num_layers)
    p = {}

    w_in, b_in = linear(keys[0], word_embedding_size + max_log2len, d_model)
    p["w_word_t"] = w_in[:, :word_embedding_size].T        # (E, d)
    p["w_pe_t"] = w_in[:, word_embedding_size:].T          # (P, d)
    p["b_in"] = b_in[None, :]                              # (1, d)

    # fold the attention softmax scale 1/sqrt(head_dim) into W_q / b_q once
    # here (host side) -- mathematically identical, removes one per-layer
    # (n, d) multiply from the kernel.
    scale = 1.0 / float(d_model // nhead) ** 0.5

    qkv_w, qkv_b, out_w, out_b = [], [], [], []
    ln1_w, ln1_b, ln2_w, ln2_b = [], [], [], []
    ff1_w, ff1_b, ff2_w, ff2_b = [], [], [], []
    for l in range(num_layers):
        lk = jax.random.split(keys[1 + l], 4)
        w, b = linear(lk[0], d_model, 3 * d_model)   # fused in_proj (q|k|v)
        wt = w.T.at[:, :d_model].multiply(scale)     # scale the Q columns
        b = b.at[:d_model].multiply(scale)           # ... and the Q bias
        qkv_w.append(wt); qkv_b.append(b)
        w, b = linear(lk[1], d_model, d_model)       # out_proj
        out_w.append(w.T); out_b.append(b)
        w, b = linear(lk[2], d_model, dim_feedforward)
        ff1_w.append(w.T); ff1_b.append(b)
        w, b = linear(lk[3], dim_feedforward, d_model)
        ff2_w.append(w.T); ff2_b.append(b)
        ln1_w.append(jnp.ones((d_model,), jnp.float32))
        ln1_b.append(jnp.zeros((d_model,), jnp.float32))
        ln2_w.append(jnp.ones((d_model,), jnp.float32))
        ln2_b.append(jnp.zeros((d_model,), jnp.float32))

    stack = lambda xs: jnp.stack(xs, axis=0)
    p["qkv_w_t"], p["qkv_b"] = stack(qkv_w), stack(qkv_b)
    p["out_w_t"], p["out_b"] = stack(out_w), stack(out_b)
    p["ln1_w"], p["ln1_b"] = stack(ln1_w), stack(ln1_b)
    p["ff1_w_t"], p["ff1_b"] = stack(ff1_w), stack(ff1_b)
    p["ff2_w_t"], p["ff2_b"] = stack(ff2_w), stack(ff2_b)
    p["ln2_w"], p["ln2_b"] = stack(ln2_w), stack(ln2_b)

    # fused expectation / logvariance heads
    w_e, b_e = linear(keys[-2], d_model, document_embedding_size)
    w_v, b_v = linear(keys[-1], d_model, document_embedding_size)
    p["head_w_t"] = jnp.concatenate([w_e.T, w_v.T], axis=1)             # (d, 2doc)
    p["head_b"] = jnp.concatenate([b_e, b_v + logvar_init])[None, :]    # (1, 2doc)
    return p


# ----------------------------------------------------------------------------
# Wrapper
# ----------------------------------------------------------------------------
def encoder_forward(params, X, *, nhead, num_layers, max_log2len=8,
                    keepdim=False, return_variance=False,
                    batch_tile=None, weight_dtype=jnp.bfloat16,
                    vmem_limit_bytes=None):
    """X: (B, S, word_embedding_size) float32, batch-first like PyTorch."""
    B, S, E = X.shape
    d_model = params["w_word_t"].shape[1]
    assert d_model % nhead == 0
    hd = d_model // nhead
    dff = params["ff1_w_t"].shape[2]
    doc = params["head_w_t"].shape[1] // 2
    L = num_layers

    # TODO(synk): PositionEncoding class was not provided; using a deterministic
    # binary positional code of width max_log2len (consistent with
    # Linear(word_embedding_size + max_log2len, d_model)).  Its contribution
    # through the input linear is just a per-position bias, precomputed here
    # once as a tiny (S, d_model) input instead of materializing (B, S, Din).
    bits = ((jnp.arange(S)[:, None] >> jnp.arange(max_log2len)[None, :]) & 1
            ).astype(jnp.float32)                                   # (S, P)
    pe_bias = (bits @ params["w_pe_t"] + params["b_in"]).astype(jnp.float32)

    # Batch tiling: target ~256 rows per grid step (fills the 256-wide MXU on
    # v6e/v7x and amortizes per-step overhead) but keep G >= 2 when B allows
    # it so both v7x TensorCores get work.  Override with batch_tile=.
    if batch_tile is None:
        batch_tile = max(1, pl.cdiv(256, S))
        if B >= 2:
            batch_tile = min(batch_tile, pl.cdiv(B, 2))
    TB = max(1, min(batch_tile, B))
    G = pl.cdiv(B, TB)
    B_pad = G * TB
    n = TB * S

    Xc = X.astype(jnp.bfloat16)                  # halve streamed HBM bytes
    if B_pad != B:
        Xc = jnp.pad(Xc, ((0, B_pad - B), (0, 0), (0, 0)))

    mm = lambda w: w.astype(weight_dtype)        # big matmul weights (bf16 MXU)
    f32 = lambda w: w.astype(jnp.float32)        # biases / layernorm params
    b3 = lambda w: f32(w).reshape(L, 1, -1)      # (L, dim) -> (L, 1, dim)

    w_word = mm(params["w_word_t"])                                   # (E, d)
    qkv_w = mm(params["qkv_w_t"])                                     # (L, d, 3d)
    out_w = mm(params["out_w_t"]).reshape(L, nhead, hd, d_model)      # (L,nh,hd,d)
    ff1_w = mm(params["ff1_w_t"])                                     # (L, d, dff)
    ff2_w = mm(params["ff2_w_t"])                                     # (L, dff, d)
    head_w = mm(params["head_w_t"])                                   # (d, 2doc)
    head_b = f32(params["head_b"])                                    # (1, 2doc)

    inputs = [
        Xc, pe_bias, w_word,
        qkv_w, b3(params["qkv_b"]),
        out_w, b3(params["out_b"]),
        b3(params["ln1_w"]), b3(params["ln1_b"]),
        ff1_w, b3(params["ff1_b"]),
        ff2_w, b3(params["ff2_b"]),
        b3(params["ln2_w"]), b3(params["ln2_b"]),
        head_w, head_b,
    ]

    def invariant(shape):                 # fetched once, resident for all steps
        nd = len(shape)
        return pl.BlockSpec(shape, lambda g, l: (0,) * nd)

    def per_layer(arr):                   # streamed one layer at a time
        nd = arr.ndim
        return pl.BlockSpec((1,) + arr.shape[1:],
                            lambda g, l: (l,) + (0,) * (nd - 1))

    in_specs = [
        pl.BlockSpec((TB, S, E), lambda g, l: (g, 0, 0)),
        invariant(pe_bias.shape),
        invariant(w_word.shape),
        per_layer(qkv_w), per_layer(inputs[4]),
        per_layer(out_w), per_layer(inputs[6]),
        per_layer(inputs[7]), per_layer(inputs[8]),
        per_layer(ff1_w), per_layer(inputs[10]),
        per_layer(ff2_w), per_layer(inputs[12]),
        per_layer(inputs[13]), per_layer(inputs[14]),
        invariant(head_w.shape),
        invariant(head_b.shape),
    ]

    # Explicit scoped-VMEM limit: resident weights + 2x one layer of streamed
    # weights (double-buffered) + generously over-counted activations.
    if vmem_limit_bytes is None:
        nbytes = lambda a: a.size * a.dtype.itemsize
        per_layer_bytes = sum(nbytes(a) // L for a in (qkv_w, out_w, ff1_w, ff2_w))
        per_layer_bytes += 64 * 1024                         # small per-layer params
        resident_bytes = (nbytes(pe_bias) + nbytes(w_word) + nbytes(head_w)
                          + nbytes(head_b) + 2 * TB * S * E * 2)
        act_bytes = 4 * (n * (10 * d_model + dff) + nhead * TB * S * S)
        vmem_limit_bytes = int(min(max(resident_bytes + 2 * per_layer_bytes
                                       + 4 * act_bytes + (8 << 20),
                                       32 << 20),
                                   64 << 20))

    ev = pl.pallas_call(
        encoder_kernel,
        out_shape=jax.ShapeDtypeStruct((G, TB, 2 * doc), jnp.float32),
        grid=(G, L),
        in_specs=in_specs,
        out_specs=pl.BlockSpec((1, TB, 2 * doc), lambda g, l: (g, 0, 0)),
        scratch_shapes=[pltpu.VMEM((n, d_model), jnp.float32)],
        compiler_params=pltpu.CompilerParams(
            dimension_semantics=("parallel", "arbitrary"),
            vmem_limit_bytes=vmem_limit_bytes),
    )(*inputs)

    ev = ev.reshape(G * TB, 2 * doc)[:B]
    e, v = ev[:, :doc], ev[:, doc:]
    if keepdim:
        e, v = e[:, None, :], v[:, None, :]
    return (e, v) if return_variance else e


# ----------------------------------------------------------------------------
# Demo
# ----------------------------------------------------------------------------
if __name__ == "__main__":
    word_embedding_size = 16
    document_embedding_size = 16
    d_model = 32
    nhead = 4
    num_layers = 2
    max_log2len = 8
    B, S = 2, 8

    key = jax.random.PRNGKey(0)
    pkey, xkey = jax.random.split(key)
    params = init_params(pkey, word_embedding_size, document_embedding_size,
                         d_model, nhead, num_layers, max_log2len=max_log2len)
    X = jax.random.normal(xkey, (B, S, word_embedding_size), jnp.float32)

    E = encoder_forward(params, X, nhead=nhead, num_layers=num_layers,
                        max_log2len=max_log2len)
    E = jax.block_until_ready(E)
    assert E.shape == (B, document_embedding_size), E.shape

    # also exercise the (E, V) path once
    E2, V2 = encoder_forward(params, X, nhead=nhead, num_layers=num_layers,
                             max_log2len=max_log2len, return_variance=True)
    jax.block_until_ready((E2, V2))
    assert V2.shape == (B, document_embedding_size)

    print("KERNEL_OK")
</pallas_src>

<mosaic_0001>
module attributes {stable_mosaic.version = 11 : i64} {
  func.func @encoder_kernel(%arg0: i32, %arg1: i32, %arg2: memref<1x8x16xbf16, #tpu.memory_space<vmem>>, %arg3: memref<8x32xf32, #tpu.memory_space<vmem>>, %arg4: memref<16x32xbf16, #tpu.memory_space<vmem>>, %arg5: memref<1x32x96xbf16, #tpu.memory_space<vmem>>, %arg6: memref<1x1x96xf32, #tpu.memory_space<vmem>>, %arg7: memref<1x4x8x32xbf16, #tpu.memory_space<vmem>>, %arg8: memref<1x1x32xf32, #tpu.memory_space<vmem>>, %arg9: memref<1x1x32xf32, #tpu.memory_space<vmem>>, %arg10: memref<1x1x32xf32, #tpu.memory_space<vmem>>, %arg11: memref<1x32x2048xbf16, #tpu.memory_space<vmem>>, %arg12: memref<1x1x2048xf32, #tpu.memory_space<vmem>>, %arg13: memref<1x2048x32xbf16, #tpu.memory_space<vmem>>, %arg14: memref<1x1x32xf32, #tpu.memory_space<vmem>>, %arg15: memref<1x1x32xf32, #tpu.memory_space<vmem>>, %arg16: memref<1x1x32xf32, #tpu.memory_space<vmem>>, %arg17: memref<32x32xbf16, #tpu.memory_space<vmem>>, %arg18: memref<1x32xf32, #tpu.memory_space<vmem>>, %arg19: memref<1x1x32xf32, #tpu.memory_space<vmem>>, %arg20: memref<8x32xf32, #tpu.memory_space<vmem>>) attributes {dimension_semantics = [#tpu.dimension_semantics<parallel>, #tpu.dimension_semantics<arbitrary>], iteration_bounds = array<i64: 2, 2>, scalar_prefetch = 0 : i64, scratch_operands = 1 : i64, tpu.core_type = #tpu.core_type<tc>, window_params = [{transform_indices = @transform_0, window_bounds = array<i64: 1, 8, 16>}, {pipeline_mode = #tpu.pipeline_mode<synchronous>, transform_indices = @transform_1, window_bounds = array<i64: 8, 32>}, {pipeline_mode = #tpu.pipeline_mode<synchronous>, transform_indices = @transform_2, window_bounds = array<i64: 16, 32>}, {transform_indices = @transform_3, window_bounds = array<i64: 1, 32, 96>}, {transform_indices = @transform_4, window_bounds = array<i64: 1, 1, 96>}, {transform_indices = @transform_5, window_bounds = array<i64: 1, 4, 8, 32>}, {transform_indices = @transform_6, window_bounds = array<i64: 1, 1, 32>}, {transform_indices = @transform_7, window_bounds = array<i64: 1, 1, 32>}, {transform_indices = @transform_8, window_bounds = array<i64: 1, 1, 32>}, {transform_indices = @transform_9, window_bounds = array<i64: 1, 32, 2048>}, {transform_indices = @transform_10, window_bounds = array<i64: 1, 1, 2048>}, {transform_indices = @transform_11, window_bounds = array<i64: 1, 2048, 32>}, {transform_indices = @transform_12, window_bounds = array<i64: 1, 1, 32>}, {transform_indices = @transform_13, window_bounds = array<i64: 1, 1, 32>}, {transform_indices = @transform_14, window_bounds = array<i64: 1, 1, 32>}, {pipeline_mode = #tpu.pipeline_mode<synchronous>, transform_indices = @transform_15, window_bounds = array<i64: 32, 32>}, {pipeline_mode = #tpu.pipeline_mode<synchronous>, transform_indices = @transform_16, window_bounds = array<i64: 1, 32>}, {transform_indices = @transform_17, window_bounds = array<i64: 1, 1, 32>}]} {
    %c0_i32 = arith.constant 0 : i32
    %0 = arith.cmpi eq, %arg1, %c0_i32 : i32
    %1 = arith.extui %0 : i1 to i32
    %c0_i32_0 = arith.constant 0 : i32
    %2 = arith.cmpi ne, %1, %c0_i32_0 : i32
    scf.if %2 {
      %c0_60 = arith.constant 0 : index
      %c0_61 = arith.constant 0 : index
      %c0_62 = arith.constant 0 : index
      %148 = vector.load %arg2[%c0_60, %c0_61, %c0_62] : memref<1x8x16xbf16, #tpu.memory_space<vmem>>, vector<1x8x16xbf16>
      %149 = vector.shape_cast %148 : vector<1x8x16xbf16> to vector<8x16xbf16>
      %c0_63 = arith.constant 0 : index
      %c0_64 = arith.constant 0 : index
      %150 = vector.load %arg4[%c0_63, %c0_64] : memref<16x32xbf16, #tpu.memory_space<vmem>>, vector<16x32xbf16>
      %cst_65 = arith.constant dense<0.000000e+00> : vector<8x32xf32>
      %151 = tpu.matmul %149, %150, %cst_65 {dimension_numbers = #tpu.dot_dimension_numbers<[1], [0], [0], [1], [0, 0, 1, 1], [], []>} : vector<8x16xbf16>, vector<16x32xbf16>, vector<8x32xf32> -> vector<8x32xf32>
      %152 = vector.shape_cast %151 : vector<8x32xf32> to vector<1x8x32xf32>
      %c0_66 = arith.constant 0 : index
      %c0_67 = arith.constant 0 : index
      %153 = vector.load %arg3[%c0_66, %c0_67] : memref<8x32xf32, #tpu.memory_space<vmem>>, vector<8x32xf32>
      %154 = vector.shape_cast %153 : vector<8x32xf32> to vector<1x8x32xf32>
      %155 = arith.addf %152, %154 : vector<1x8x32xf32>
      %156 = vector.shape_cast %155 : vector<1x8x32xf32> to vector<8x32xf32>
      %cst_68 = arith.constant 0.000000e+00 : f32
      %157 = vector.broadcast %cst_68 : f32 to vector<8x32xf32>
      %158 = arith.maximumf %156, %157 : vector<8x32xf32>
      %c0_69 = arith.constant 0 : index
      %c0_70 = arith.constant 0 : index
      %159 = vector.load %arg20[%c0_69, %c0_70] : memref<8x32xf32, #tpu.memory_space<vmem>>, vector<8x32xf32>
      tpu.vector_store %arg20[%c0_69, %c0_70], %158 {strides = array<i32>} : memref<8x32xf32, #tpu.memory_space<vmem>>, vector<8x32xf32>,
    } else {
    }
    %c0 = arith.constant 0 : index
    %c0_1 = arith.constant 0 : index
    %3 = vector.load %arg20[%c0, %c0_1] : memref<8x32xf32, #tpu.memory_space<vmem>>, vector<8x32xf32>
    %4 = arith.truncf %3 : vector<8x32xf32> to vector<8x32xbf16>
    %c0_2 = arith.constant 0 : index
    %c0_3 = arith.constant 0 : index
    %c0_4 = arith.constant 0 : index
    %5 = vector.load %arg5[%c0_2, %c0_3, %c0_4] : memref<1x32x96xbf16, #tpu.memory_space<vmem>>, vector<1x32x96xbf16>
    %6 = vector.shape_cast %5 : vector<1x32x96xbf16> to vector<32x96xbf16>
    %cst = arith.constant dense<0.000000e+00> : vector<8x96xf32>
    %7 = tpu.matmul %4, %6, %cst {dimension_numbers = #tpu.dot_dimension_numbers<[1], [0], [0], [1], [0, 0, 1, 1], [], []>} : vector<8x32xbf16>, vector<32x96xbf16>, vector<8x96xf32> -> vector<8x96xf32>
    %c0_5 = arith.constant 0 : index
    %c0_6 = arith.constant 0 : index
    %c0_7 = arith.constant 0 : index
    %8 = vector.load %arg6[%c0_5, %c0_6, %c0_7] : memref<1x1x96xf32, #tpu.memory_space<vmem>>, vector<1x1x96xf32>
    %9 = vector.shape_cast %8 : vector<1x1x96xf32> to vector<1x96xf32>
    %10 = vector.broadcast %9 : vector<1x96xf32> to vector<8x96xf32>
    %11 = arith.addf %7, %10 : vector<8x96xf32>
    %12 = arith.truncf %11 : vector<8x96xf32> to vector<8x96xbf16>
    %13 = vector.extract_strided_slice %12 {offsets = [0, 0], sizes = [8, 8], strides = [1, 1]} : vector<8x96xbf16> to vector<8x8xbf16>
    %14 = vector.shape_cast %13 : vector<8x8xbf16> to vector<1x8x8xbf16>
    %15 = vector.extract_strided_slice %12 {offsets = [0, 8], sizes = [8, 8], strides = [1, 1]} : vector<8x96xbf16> to vector<8x8xbf16>
    %16 = vector.shape_cast %15 : vector<8x8xbf16> to vector<1x8x8xbf16>
    %17 = vector.extract_strided_slice %12 {offsets = [0, 16], sizes = [8, 8], strides = [1, 1]} : vector<8x96xbf16> to vector<8x8xbf16>
    %18 = vector.shape_cast %17 : vector<8x8xbf16> to vector<1x8x8xbf16>
    %19 = vector.extract_strided_slice %12 {offsets = [0, 24], sizes = [8, 8], strides = [1, 1]} : vector<8x96xbf16> to vector<8x8xbf16>
    %20 = vector.shape_cast %19 : vector<8x8xbf16> to vector<1x8x8xbf16>
    %21 = tpu.concatenate %14, %16, %18, %20 in 0 : vector<1x8x8xbf16>, vector<1x8x8xbf16>, vector<1x8x8xbf16>, vector<1x8x8xbf16> -> vector<4x8x8xbf16>
    %22 = vector.extract_strided_slice %12 {offsets = [0, 32], sizes = [8, 8], strides = [1, 1]} : vector<8x96xbf16> to vector<8x8xbf16>
    %23 = vector.shape_cast %22 : vector<8x8xbf16> to vector<1x8x8xbf16>
    %24 = vector.extract_strided_slice %12 {offsets = [0, 40], sizes = [8, 8], strides = [1, 1]} : vector<8x96xbf16> to vector<8x8xbf16>
    %25 = vector.shape_cast %24 : vector<8x8xbf16> to vector<1x8x8xbf16>
    %26 = vector.extract_strided_slice %12 {offsets = [0, 48], sizes = [8, 8], strides = [1, 1]} : vector<8x96xbf16> to vector<8x8xbf16>
    %27 = vector.shape_cast %26 : vector<8x8xbf16> to vector<1x8x8xbf16>
    %28 = vector.extract_strided_slice %12 {offsets = [0, 56], sizes = [8, 8], strides = [1, 1]} : vector<8x96xbf16> to vector<8x8xbf16>
    %29 = vector.shape_cast %28 : vector<8x8xbf16> to vector<1x8x8xbf16>
    %30 = tpu.concatenate %23, %25, %27, %29 in 0 : vector<1x8x8xbf16>, vector<1x8x8xbf16>, vector<1x8x8xbf16>, vector<1x8x8xbf16> -> vector<4x8x8xbf16>
    %31 = vector.extract_strided_slice %12 {offsets = [0, 64], sizes = [8, 8], strides = [1, 1]} : vector<8x96xbf16> to vector<8x8xbf16>
    %32 = vector.shape_cast %31 : vector<8x8xbf16> to vector<1x8x8xbf16>
    %33 = vector.extract_strided_slice %12 {offsets = [0, 72], sizes = [8, 8], strides = [1, 1]} : vector<8x96xbf16> to vector<8x8xbf16>
    %34 = vector.shape_cast %33 : vector<8x8xbf16> to vector<1x8x8xbf16>
    %35 = vector.extract_strided_slice %12 {offsets = [0, 80], sizes = [8, 8], strides = [1, 1]} : vector<8x96xbf16> to vector<8x8xbf16>
    %36 = vector.shape_cast %35 : vector<8x8xbf16> to vector<1x8x8xbf16>
    %37 = vector.extract_strided_slice %12 {offsets = [0, 88], sizes = [8, 8], strides = [1, 1]} : vector<8x96xbf16> to vector<8x8xbf16>
    %38 = vector.shape_cast %37 : vector<8x8xbf16> to vector<1x8x8xbf16>
    %39 = tpu.concatenate %32, %34, %36, %38 in 0 : vector<1x8x8xbf16>, vector<1x8x8xbf16>, vector<1x8x8xbf16>, vector<1x8x8xbf16> -> vector<4x8x8xbf16>
    "tpu.trace_start"() <{level = 10 : i32, message = "bqd,bkd->bqk"}> : () -> ()
    %cst_8 = arith.constant dense<0.000000e+00> : vector<4x8x8xf32>
    %40 = tpu.matmul %21, %30, %cst_8 {dimension_numbers = #tpu.dot_dimension_numbers<[2], [2], [1], [1], [0, 0, 0, 1, 1, 1], [0], [0]>} : vector<4x8x8xbf16>, vector<4x8x8xbf16>, vector<4x8x8xf32> -> vector<4x8x8xf32>
    "tpu.trace_stop"() : () -> ()
    %cst_9 = arith.constant dense<0xFF800000> : vector<4x8xf32>
    %41 = vector.multi_reduction <maximumf>, %40, %cst_9 [2] : vector<4x8x8xf32> to vector<4x8xf32>
    %42 = vector.shape_cast %41 : vector<4x8xf32> to vector<4x8x1xf32>
    %43 = vector.broadcast %42 : vector<4x8x1xf32> to vector<4x8x8xf32>
    %44 = arith.subf %40, %43 : vector<4x8x8xf32>
    %45 = math.exp %44 : vector<4x8x8xf32>
    %cst_10 = arith.constant dense<0.000000e+00> : vector<4x8xf32>
    %46 = vector.multi_reduction <add>, %45, %cst_10 [2] : vector<4x8x8xf32> to vector<4x8xf32>
    %47 = vector.shape_cast %46 : vector<4x8xf32> to vector<4x8x1xf32>
    %48 = tpu.reciprocal %47 {approx = true} : vector<4x8x1xf32> -> vector<4x8x1xf32>
    %49 = vector.broadcast %48 : vector<4x8x1xf32> to vector<4x8x8xf32>
    %50 = arith.mulf %45, %49 : vector<4x8x8xf32>
    %51 = arith.truncf %50 : vector<4x8x8xf32> to vector<4x8x8xbf16>
    "tpu.trace_start"() <{level = 10 : i32, message = "bqk,bkd->bqd"}> : () -> ()
    %cst_11 = arith.constant dense<0.000000e+00> : vector<4x8x8xf32>
    %52 = tpu.matmul %51, %39, %cst_11 {dimension_numbers = #tpu.dot_dimension_numbers<[2], [1], [1], [2], [0, 0, 0, 1, 1, 2], [0], [0]>} : vector<4x8x8xbf16>, vector<4x8x8xbf16>, vector<4x8x8xf32> -> vector<4x8x8xf32>
    "tpu.trace_stop"() : () -> ()
    %53 = arith.truncf %52 : vector<4x8x8xf32> to vector<4x8x8xbf16>
    %c0_12 = arith.constant 0 : index
    %c0_13 = arith.constant 0 : index
    %c0_14 = arith.constant 0 : index
    %c0_15 = arith.constant 0 : index
    %54 = vector.load %arg7[%c0_12, %c0_13, %c0_14, %c0_15] : memref<1x4x8x32xbf16, #tpu.memory_space<vmem>>, vector<1x4x8x32xbf16>
    %55 = vector.shape_cast %54 : vector<1x4x8x32xbf16> to vector<4x8x32xbf16>
    "tpu.trace_start"() <{level = 10 : i32, message = "hnc,hcd->hnd"}> : () -> ()
    %cst_16 = arith.constant dense<0.000000e+00> : vector<4x8x32xf32>
    %56 = tpu.matmul %53, %55, %cst_16 {dimension_numbers = #tpu.dot_dimension_numbers<[2], [1], [1], [2], [0, 0, 0, 1, 1, 2], [0], [0]>} : vector<4x8x8xbf16>, vector<4x8x32xbf16>, vector<4x8x32xf32> -> vector<4x8x32xf32>
    "tpu.trace_stop"() : () -> ()
    %57 = vector.extract_strided_slice %56 {offsets = [0, 0, 0], sizes = [1, 8, 32], strides = [1, 1, 1]} : vector<4x8x32xf32> to vector<1x8x32xf32>
    %58 = vector.shape_cast %57 : vector<1x8x32xf32> to vector<8x32xf32>
    %59 = vector.extract_strided_slice %56 {offsets = [1, 0, 0], sizes = [1, 8, 32], strides = [1, 1, 1]} : vector<4x8x32xf32> to vector<1x8x32xf32>
    %60 = vector.shape_cast %59 : vector<1x8x32xf32> to vector<8x32xf32>
    %61 = arith.addf %58, %60 : vector<8x32xf32>
    %62 = vector.extract_strided_slice %56 {offsets = [2, 0, 0], sizes = [1, 8, 32], strides = [1, 1, 1]} : vector<4x8x32xf32> to vector<1x8x32xf32>
    %63 = vector.shape_cast %62 : vector<1x8x32xf32> to vector<8x32xf32>
    %64 = arith.addf %61, %63 : vector<8x32xf32>
    %65 = vector.extract_strided_slice %56 {offsets = [3, 0, 0], sizes = [1, 8, 32], strides = [1, 1, 1]} : vector<4x8x32xf32> to vector<1x8x32xf32>
    %66 = vector.shape_cast %65 : vector<1x8x32xf32> to vector<8x32xf32>
    %67 = arith.addf %64, %66 : vector<8x32xf32>
    %c0_17 = arith.constant 0 : index
    %c0_18 = arith.constant 0 : index
    %c0_19 = arith.constant 0 : index
    %68 = vector.load %arg8[%c0_17, %c0_18, %c0_19] : memref<1x1x32xf32, #tpu.memory_space<vmem>>, vector<1x1x32xf32>
    %69 = vector.shape_cast %68 : vector<1x1x32xf32> to vector<1x32xf32>
    %70 = vector.broadcast %69 : vector<1x32xf32> to vector<8x32xf32>
    %71 = arith.addf %67, %70 : vector<8x32xf32>
    %72 = arith.addf %3, %71 : vector<8x32xf32>
    %c0_20 = arith.constant 0 : index
    %c0_21 = arith.constant 0 : index
    %c0_22 = arith.constant 0 : index
    %73 = vector.load %arg9[%c0_20, %c0_21, %c0_22] : memref<1x1x32xf32, #tpu.memory_space<vmem>>, vector<1x1x32xf32>
    %74 = vector.shape_cast %73 : vector<1x1x32xf32> to vector<1x32xf32>
    %c0_23 = arith.constant 0 : index
    %c0_24 = arith.constant 0 : index
    %c0_25 = arith.constant 0 : index
    %75 = vector.load %arg10[%c0_23, %c0_24, %c0_25] : memref<1x1x32xf32, #tpu.memory_space<vmem>>, vector<1x1x32xf32>
    %76 = vector.shape_cast %75 : vector<1x1x32xf32> to vector<1x32xf32>
    %cst_26 = arith.constant dense<0.000000e+00> : vector<8xf32>
    %77 = vector.multi_reduction <add>, %72, %cst_26 [1] : vector<8x32xf32> to vector<8xf32>
    %78 = vector.shape_cast %77 : vector<8xf32> to vector<8x1xf32>
    %cst_27 = arith.constant 3.200000e+01 : f32
    %79 = vector.broadcast %cst_27 : f32 to vector<8x1xf32>
    %80 = arith.divf %78, %79 : vector<8x1xf32>
    %81 = vector.broadcast %80 : vector<8x1xf32> to vector<8x32xf32>
    %82 = arith.subf %72, %81 : vector<8x32xf32>
    %83 = arith.mulf %82, %82 : vector<8x32xf32>
    %cst_28 = arith.constant dense<0.000000e+00> : vector<8xf32>
    %84 = vector.multi_reduction <add>, %83, %cst_28 [1] : vector<8x32xf32> to vector<8xf32>
    %85 = vector.shape_cast %84 : vector<8xf32> to vector<8x1xf32>
    %cst_29 = arith.constant 3.200000e+01 : f32
    %86 = vector.broadcast %cst_29 : f32 to vector<8x1xf32>
    %87 = arith.divf %85, %86 : vector<8x1xf32>
    %88 = vector.broadcast %80 : vector<8x1xf32> to vector<8x32xf32>
    %89 = arith.subf %72, %88 : vector<8x32xf32>
    %cst_30 = arith.constant 9.99999974E-6 : f32
    %90 = vector.broadcast %cst_30 : f32 to vector<8x1xf32>
    %91 = arith.addf %87, %90 : vector<8x1xf32>
    %92 = math.rsqrt %91 : vector<8x1xf32>
    %93 = vector.broadcast %92 : vector<8x1xf32> to vector<8x32xf32>
    %94 = arith.mulf %89, %93 : vector<8x32xf32>
    %95 = vector.broadcast %74 : vector<1x32xf32> to vector<8x32xf32>
    %96 = arith.mulf %94, %95 : vector<8x32xf32>
    %97 = vector.broadcast %76 : vector<1x32xf32> to vector<8x32xf32>
    %98 = arith.addf %96, %97 : vector<8x32xf32>
    %99 = arith.truncf %98 : vector<8x32xf32> to vector<8x32xbf16>
    %c0_31 = arith.constant 0 : index
    %c0_32 = arith.constant 0 : index
    %c0_33 = arith.constant 0 : index
    %100 = vector.load %arg11[%c0_31, %c0_32, %c0_33] : memref<1x32x2048xbf16, #tpu.memory_space<vmem>>, vector<1x32x2048xbf16>
    %101 = vector.shape_cast %100 : vector<1x32x2048xbf16> to vector<32x2048xbf16>
    %cst_34 = arith.constant dense<0.000000e+00> : vector<8x2048xf32>
    %102 = tpu.matmul %99, %101, %cst_34 {dimension_numbers = #tpu.dot_dimension_numbers<[1], [0], [0], [1], [0, 0, 1, 1], [], []>} : vector<8x32xbf16>, vector<32x2048xbf16>, vector<8x2048xf32> -> vector<8x2048xf32>
    %c0_35 = arith.constant 0 : index
    %c0_36 = arith.constant 0 : index
    %c0_37 = arith.constant 0 : index
    %103 = vector.load %arg12[%c0_35, %c0_36, %c0_37] : memref<1x1x2048xf32, #tpu.memory_space<vmem>>, vector<1x1x2048xf32>
    %104 = vector.shape_cast %103 : vector<1x1x2048xf32> to vector<1x2048xf32>
    %105 = vector.broadcast %104 : vector<1x2048xf32> to vector<8x2048xf32>
    %106 = arith.addf %102, %105 : vector<8x2048xf32>
    %cst_38 = arith.constant 0.000000e+00 : f32
    %107 = vector.broadcast %cst_38 : f32 to vector<8x2048xf32>
    %108 = arith.maximumf %106, %107 : vector<8x2048xf32>
    %109 = arith.truncf %108 : vector<8x2048xf32> to vector<8x2048xbf16>
    %c0_39 = arith.constant 0 : index
    %c0_40 = arith.constant 0 : index
    %c0_41 = arith.constant 0 : index
    %110 = vector.load %arg13[%c0_39, %c0_40, %c0_41] : memref<1x2048x32xbf16, #tpu.memory_space<vmem>>, vector<1x2048x32xbf16>
    %111 = vector.shape_cast %110 : vector<1x2048x32xbf16> to vector<2048x32xbf16>
    %cst_42 = arith.constant dense<0.000000e+00> : vector<8x32xf32>
    %112 = tpu.matmul %109, %111, %cst_42 {dimension_numbers = #tpu.dot_dimension_numbers<[1], [0], [0], [1], [0, 0, 1, 1], [], []>} : vector<8x2048xbf16>, vector<2048x32xbf16>, vector<8x32xf32> -> vector<8x32xf32>
    %c0_43 = arith.constant 0 : index
    %c0_44 = arith.constant 0 : index
    %c0_45 = arith.constant 0 : index
    %113 = vector.load %arg14[%c0_43, %c0_44, %c0_45] : memref<1x1x32xf32, #tpu.memory_space<vmem>>, vector<1x1x32xf32>
    %114 = vector.shape_cast %113 : vector<1x1x32xf32> to vector<1x32xf32>
    %115 = vector.broadcast %114 : vector<1x32xf32> to vector<8x32xf32>
    %116 = arith.addf %112, %115 : vector<8x32xf32>
    %117 = arith.addf %98, %116 : vector<8x32xf32>
    %c0_46 = arith.constant 0 : index
    %c0_47 = arith.constant 0 : index
    %c0_48 = arith.constant 0 : index
    %118 = vector.load %arg15[%c0_46, %c0_47, %c0_48] : memref<1x1x32xf32, #tpu.memory_space<vmem>>, vector<1x1x32xf32>
    %119 = vector.shape_cast %118 : vector<1x1x32xf32> to vector<1x32xf32>
    %c0_49 = arith.constant 0 : index
    %c0_50 = arith.constant 0 : index
    %c0_51 = arith.constant 0 : index
    %120 = vector.load %arg16[%c0_49, %c0_50, %c0_51] : memref<1x1x32xf32, #tpu.memory_space<vmem>>, vector<1x1x32xf32>
    %121 = vector.shape_cast %120 : vector<1x1x32xf32> to vector<1x32xf32>
    %cst_52 = arith.constant dense<0.000000e+00> : vector<8xf32>
    %122 = vector.multi_reduction <add>, %117, %cst_52 [1] : vector<8x32xf32> to vector<8xf32>
    %123 = vector.shape_cast %122 : vector<8xf32> to vector<8x1xf32>
    %cst_53 = arith.constant 3.200000e+01 : f32
    %124 = vector.broadcast %cst_53 : f32 to vector<8x1xf32>
    %125 = arith.divf %123, %124 : vector<8x1xf32>
    %126 = vector.broadcast %125 : vector<8x1xf32> to vector<8x32xf32>
    %127 = arith.subf %117, %126 : vector<8x32xf32>
    %128 = arith.mulf %127, %127 : vector<8x32xf32>
    %cst_54 = arith.constant dense<0.000000e+00> : vector<8xf32>
    %129 = vector.multi_reduction <add>, %128, %cst_54 [1] : vector<8x32xf32> to vector<8xf32>
    %130 = vector.shape_cast %129 : vector<8xf32> to vector<8x1xf32>
    %cst_55 = arith.constant 3.200000e+01 : f32
    %131 = vector.broadcast %cst_55 : f32 to vector<8x1xf32>
    %132 = arith.divf %130, %131 : vector<8x1xf32>
    %133 = vector.broadcast %125 : vector<8x1xf32> to vector<8x32xf32>
    %134 = arith.subf %117, %133 : vector<8x32xf32>
    %cst_56 = arith.constant 9.99999974E-6 : f32
    %135 = vector.broadcast %cst_56 : f32 to vector<8x1xf32>
    %136 = arith.addf %132, %135 : vector<8x1xf32>
    %137 = math.rsqrt %136 : vector<8x1xf32>
    %138 = vector.broadcast %137 : vector<8x1xf32> to vector<8x32xf32>
    %139 = arith.mulf %134, %138 : vector<8x32xf32>
    %140 = vector.broadcast %119 : vector<1x32xf32> to vector<8x32xf32>
    %141 = arith.mulf %139, %140 : vector<8x32xf32>
    %142 = vector.broadcast %121 : vector<1x32xf32> to vector<8x32xf32>
    %143 = arith.addf %141, %142 : vector<8x32xf32>
    %c0_57 = arith.constant 0 : index
    %c0_58 = arith.constant 0 : index
    %144 = vector.load %arg20[%c0_57, %c0_58] : memref<8x32xf32, #tpu.memory_space<vmem>>, vector<8x32xf32>
    tpu.vector_store %arg20[%c0_57, %c0_58], %143 {strides = array<i32>} : memref<8x32xf32, #tpu.memory_space<vmem>>, vector<8x32xf32>,
    %c1_i32 = arith.constant 1 : i32
    %145 = arith.cmpi eq, %arg1, %c1_i32 : i32
    %146 = arith.extui %145 : i1 to i32
    %c0_i32_59 = arith.constant 0 : i32
    %147 = arith.cmpi ne, %146, %c0_i32_59 : i32
    scf.if %147 {
      %cst_60 = arith.constant 0.000000e+00 : f32
      %148 = vector.broadcast %cst_60 : f32 to vector<8x32xf32>
      %149 = arith.maximumf %143, %148 : vector<8x32xf32>
      %150 = vector.shape_cast %149 : vector<8x32xf32> to vector<1x8x32xf32>
      %cst_61 = arith.constant dense<0.000000e+00> : vector<1x32xf32>
      %151 = vector.multi_reduction <add>, %150, %cst_61 [1] : vector<1x8x32xf32> to vector<1x32xf32>
      %cst_62 = arith.constant 8.000000e+00 : f32
      %152 = vector.broadcast %cst_62 : f32 to vector<1x32xf32>
      %153 = arith.divf %151, %152 : vector<1x32xf32>
      %154 = arith.truncf %153 : vector<1x32xf32> to vector<1x32xbf16>
      %c0_63 = arith.constant 0 : index
      %c0_64 = arith.constant 0 : index
      %155 = vector.load %arg17[%c0_63, %c0_64] : memref<32x32xbf16, #tpu.memory_space<vmem>>, vector<32x32xbf16>
      %cst_65 = arith.constant dense<0.000000e+00> : vector<1x32xf32>
      %156 = tpu.matmul %154, %155, %cst_65 {dimension_numbers = #tpu.dot_dimension_numbers<[1], [0], [0], [1], [0, 0, 1, 1], [], []>} : vector<1x32xbf16>, vector<32x32xbf16>, vector<1x32xf32> -> vector<1x32xf32>
      %c0_66 = arith.constant 0 : index
      %c0_67 = arith.constant 0 : index
      %157 = vector.load %arg18[%c0_66, %c0_67] : memref<1x32xf32, #tpu.memory_space<vmem>>, vector<1x32xf32>
      %158 = arith.addf %156, %157 : vector<1x32xf32>
      %c0_68 = arith.constant 0 : index
      %c0_69 = arith.constant 0 : index
      %c0_70 = arith.constant 0 : index
      %159 = vector.load %arg19[%c0_68, %c0_69, %c0_70] : memref<1x1x32xf32, #tpu.memory_space<vmem>>, vector<1x1x32xf32>
      %160 = vector.shape_cast %159 : vector<1x1x32xf32> to vector<1x32xf32>
      %161 = vector.shape_cast %158 : vector<1x32xf32> to vector<1x1x32xf32>
      tpu.vector_store %arg19[%c0_68, %c0_69, %c0_70], %161 {strides = array<i32>} : memref<1x1x32xf32, #tpu.memory_space<vmem>>, vector<1x1x32xf32>,
    } else {
    }
    return
  }
  func.func @transform_0(%arg0: i32, %arg1: i32) -> (i32, i32, i32) {
    %c0_i32 = arith.constant 0 : i32
    %c0_i32_0 = arith.constant 0 : i32
    %c0_i32_1 = arith.constant 0 : i32
    return %arg0, %c0_i32, %c0_i32_0 : i32, i32, i32
  }
  func.func @transform_1(%arg0: i32, %arg1: i32) -> (i32, i32) {
    %c0_i32 = arith.constant 0 : i32
    %c0_i32_0 = arith.constant 0 : i32
    %c0_i32_1 = arith.constant 0 : i32
    return %c0_i32, %c0_i32_0 : i32, i32
  }
  func.func @transform_2(%arg0: i32, %arg1: i32) -> (i32, i32) {
    %c0_i32 = arith.constant 0 : i32
    %c0_i32_0 = arith.constant 0 : i32
    %c0_i32_1 = arith.constant 0 : i32
    return %c0_i32, %c0_i32_0 : i32, i32
  }
  func.func @transform_3(%arg0: i32, %arg1: i32) -> (i32, i32, i32) {
    %c0_i32 = arith.constant 0 : i32
    %c0_i32_0 = arith.constant 0 : i32
    %c0_i32_1 = arith.constant 0 : i32
    return %arg1, %c0_i32, %c0_i32_0 : i32, i32, i32
  }
  func.func @transform_4(%arg0: i32, %arg1: i32) -> (i32, i32, i32) {
    %c0_i32 = arith.constant 0 : i32
    %c0_i32_0 = arith.constant 0 : i32
    %c0_i32_1 = arith.constant 0 : i32
    return %arg1, %c0_i32, %c0_i32_0 : i32, i32, i32
  }
  func.func @transform_5(%arg0: i32, %arg1: i32) -> (i32, i32, i32, i32) {
    %c0_i32 = arith.constant 0 : i32
    %c0_i32_0 = arith.constant 0 : i32
    %c0_i32_1 = arith.constant 0 : i32
    %c0_i32_2 = arith.constant 0 : i32
    return %arg1, %c0_i32, %c0_i32_0, %c0_i32_1 : i32, i32, i32, i32
  }
  func.func @transform_6(%arg0: i32, %arg1: i32) -> (i32, i32, i32) {
    %c0_i32 = arith.constant 0 : i32
    %c0_i32_0 = arith.constant 0 : i32
    %c0_i32_1 = arith.constant 0 : i32
    return %arg1, %c0_i32, %c0_i32_0 : i32, i32, i32
  }
  func.func @transform_7(%arg0: i32, %arg1: i32) -> (i32, i32, i32) {
    %c0_i32 = arith.constant 0 : i32
    %c0_i32_0 = arith.constant 0 : i32
    %c0_i32_1 = arith.constant 0 : i32
    return %arg1, %c0_i32, %c0_i32_0 : i32, i32, i32
  }
  func.func @transform_8(%arg0: i32, %arg1: i32) -> (i32, i32, i32) {
    %c0_i32 = arith.constant 0 : i32
    %c0_i32_0 = arith.constant 0 : i32
    %c0_i32_1 = arith.constant 0 : i32
    return %arg1, %c0_i32, %c0_i32_0 : i32, i32, i32
  }
  func.func @transform_9(%arg0: i32, %arg1: i32) -> (i32, i32, i32) {
    %c0_i32 = arith.constant 0 : i32
    %c0_i32_0 = arith.constant 0 : i32
    %c0_i32_1 = arith.constant 0 : i32
    return %arg1, %c0_i32, %c0_i32_0 : i32, i32, i32
  }
  func.func @transform_10(%arg0: i32, %arg1: i32) -> (i32, i32, i32) {
    %c0_i32 = arith.constant 0 : i32
    %c0_i32_0 = arith.constant 0 : i32
    %c0_i32_1 = arith.constant 0 : i32
    return %arg1, %c0_i32, %c0_i32_0 : i32, i32, i32
  }
  func.func @transform_11(%arg0: i32, %arg1: i32) -> (i32, i32, i32) {
    %c0_i32 = arith.constant 0 : i32
    %c0_i32_0 = arith.constant 0 : i32
    %c0_i32_1 = arith.constant 0 : i32
    return %arg1, %c0_i32, %c0_i32_0 : i32, i32, i32
  }
  func.func @transform_12(%arg0: i32, %arg1: i32) -> (i32, i32, i32) {
    %c0_i32 = arith.constant 0 : i32
    %c0_i32_0 = arith.constant 0 : i32
    %c0_i32_1 = arith.constant 0 : i32
    return %arg1, %c0_i32, %c0_i32_0 : i32, i32, i32
  }
  func.func @transform_13(%arg0: i32, %arg1: i32) -> (i32, i32, i32) {
    %c0_i32 = arith.constant 0 : i32
    %c0_i32_0 = arith.constant 0 : i32
    %c0_i32_1 = arith.constant 0 : i32
    return %arg1, %c0_i32, %c0_i32_0 : i32, i32, i32
  }
  func.func @transform_14(%arg0: i32, %arg1: i32) -> (i32, i32, i32) {
    %c0_i32 = arith.constant 0 : i32
    %c0_i32_0 = arith.constant 0 : i32
    %c0_i32_1 = arith.constant 0 : i32
    return %arg1, %c0_i32, %c0_i32_0 : i32, i32, i32
  }
  func.func @transform_15(%arg0: i32, %arg1: i32) -> (i32, i32) {
    %c0_i32 = arith.constant 0 : i32
    %c0_i32_0 = arith.constant 0 : i32
    %c0_i32_1 = arith.constant 0 : i32
    return %c0_i32, %c0_i32_0 : i32, i32
  }
  func.func @transform_16(%arg0: i32, %arg1: i32) -> (i32, i32) {
    %c0_i32 = arith.constant 0 : i32
    %c0_i32_0 = arith.constant 0 : i32
    %c0_i32_1 = arith.constant 0 : i32
    return %c0_i32, %c0_i32_0 : i32, i32
  }
  func.func @transform_17(%arg0: i32, %arg1: i32) -> (i32, i32, i32) {
    %c0_i32 = arith.constant 0 : i32
    %c0_i32_0 = arith.constant 0 : i32
    %c0_i32_1 = arith.constant 0 : i32
    return %arg0, %c0_i32, %c0_i32_0 : i32, i32, i32
  }
}

</mosaic_0001>

<llo_original>
// kernel: tpu_custom_call.1
$region0: #{tpu_custom_call.1}
  #allocation0 [shape = 'u32[]', space=smem, size = 0x4, offset = 0x4, fixed_abs, tag = 'smem constant byte address 0x4 - core index']
  #allocation1 [shape = 'u32[144,128]{1,0:T(1,128)}', space=vmem, size = 0x12000, scoped, tag = 'internal scratch']
  #allocation2 [shape = 'f32[8,32]{1,0:T(8,128)}', space=vmem, size = 0x1000, scoped, tag = 'scratch operand']
  %s0 = inlined_call_operand.vmem [shape: bf16[2,8,16], index: 0, kind: input, shape index: {}]
  %s1 = inlined_call_operand.vmem [shape: f32[8,32], index: 1, kind: input, shape index: {}]
  %s2 = inlined_call_operand.vmem [shape: bf16[16,32], index: 2, kind: input, shape index: {}]
  %s3 = inlined_call_operand.vmem [shape: bf16[2,32,96], index: 3, kind: input, shape index: {}]
  %s4 = inlined_call_operand.vmem [shape: f32[2,1,96], index: 4, kind: input, shape index: {}]
  %s5 = inlined_call_operand.vmem [shape: bf16[2,4,8,32], index: 5, kind: input, shape index: {}]
  %s6 = inlined_call_operand.vmem [shape: f32[2,1,32], index: 6, kind: input, shape index: {}]
  %s7 = inlined_call_operand.vmem [shape: f32[2,1,32], index: 7, kind: input, shape index: {}]
  %s8 = inlined_call_operand.vmem [shape: f32[2,1,32], index: 8, kind: input, shape index: {}]
  %s9 = inlined_call_operand.vmem [shape: bf16[2,32,2048], index: 9, kind: input, shape index: {}]
  %s10 = inlined_call_operand.vmem [shape: f32[2,1,2048], index: 10, kind: input, shape index: {}]
  %s11 = inlined_call_operand.vmem [shape: bf16[2,2048,32], index: 11, kind: input, shape index: {}]
  %s12 = inlined_call_operand.vmem [shape: f32[2,1,32], index: 12, kind: input, shape index: {}]
  %s13 = inlined_call_operand.vmem [shape: f32[2,1,32], index: 13, kind: input, shape index: {}]
  %s14 = inlined_call_operand.vmem [shape: f32[2,1,32], index: 14, kind: input, shape index: {}]
  %s15 = inlined_call_operand.vmem [shape: bf16[32,32], index: 15, kind: input, shape index: {}]
  %s16 = inlined_call_operand.vmem [shape: f32[1,32], index: 16, kind: input, shape index: {}]
  %s17 = inlined_call_operand.hbm [shape: f32[2,1,32], index: 17, kind: output, shape index: {}]
  %s18 = sld [smem:[#allocation0]]
  $region109: #{tpu_custom_call.1} parent=0
    _
  %s20 = ssub.s32 1, %s18
  %s21 = scalar_select 0, %s20, %s18
  $region1: #{tpu_custom_call.1} parent=0
    #allocation3 [shape = 'u8[1024]{0}', space=vmem, size = 0x400, scoped, tag = 'output window, operand 0']
    #allocation4 [shape = 's32[2]{0}', space=sflag, size = 0x8, scoped, tag = 'scoped memory for tpu_custom_call.1']
    %22 = vsyncpa [#allocation4], 0
    %s23 = scalar_lea.sflag [#allocation4], 1
    %24 = vsyncpa %s23, 0
    loop: start=0, step=1, limit=6
    $region2: #{tpu_custom_call.1} parent=1 // loop_pre_header
      _
    $region3: #{tpu_custom_call.1} parent=1 // loop_header
      %s26 = sphi 0, %s30
      %p27 = scmp.ge.s32.totalorder %s26, 6
      %s33 = sphi 0, %s45
      %s34 = sphi 0, %s41
      %s35 = sphi 0, %s33
      %s36 = sphi 0, %s34
      %s37 = sphi 0, %s35
      %s38 = sphi 0, %s36
      %s48 = sphi 0, %s50
      %s51 = sphi 0, %s48
      %s52 = sphi 0, %s51
      %s68 = sphi 0, %s52
      %s72 = sphi 0, %s72
      %s74 = sphi 0, %s72
      %s75 = sphi 0, %s74
      %s89 = sphi 0, %s75
      %s93 = sphi 0, %s93
      %s95 = sphi 0, %s93
      %s96 = sphi 0, %s95
      %s110 = sphi 0, %s96
      %s116 = sphi 0, %s118
      %s119 = sphi 0, %s116
      %s120 = sphi 0, %s119
      %s136 = sphi 0, %s120
      %s142 = sphi 0, %s144
      %s145 = sphi 0, %s142
      %s146 = sphi 0, %s145
      %s162 = sphi 0, %s146
      %s168 = sphi 0, %s170
      %s171 = sphi 0, %s168
      %s172 = sphi 0, %s171
      %s188 = sphi 0, %s172
      %s194 = sphi 0, %s196
      %s197 = sphi 0, %s194
      %s198 = sphi 0, %s197
      %s214 = sphi 0, %s198
      %s220 = sphi 0, %s222
      %s223 = sphi 0, %s220
      %s224 = sphi 0, %s223
      %s240 = sphi 0, %s224
      %s246 = sphi 0, %s248
      %s249 = sphi 0, %s246
      %s250 = sphi 0, %s249
      %s266 = sphi 0, %s250
      %s272 = sphi 0, %s274
      %s275 = sphi 0, %s272
      %s276 = sphi 0, %s275
      %s292 = sphi 0, %s276
      %s298 = sphi 0, %s300
      %s301 = sphi 0, %s298
      %s302 = sphi 0, %s301
      %s318 = sphi 0, %s302
      %s324 = sphi 0, %s326
      %s327 = sphi 0, %s324
      %s328 = sphi 0, %s327
      %s344 = sphi 0, %s328
      %s350 = sphi 0, %s352
      %s353 = sphi 0, %s350
      %s354 = sphi 0, %s353
      %s370 = sphi 0, %s354
      %s376 = sphi 0, %s378
      %s379 = sphi 0, %s376
      %s380 = sphi 0, %s379
      %s396 = sphi 0, %s380
      %s402 = sphi 0, %s404
      %s405 = sphi 0, %s402
      %s406 = sphi 0, %s405
      %s422 = sphi 0, %s406
      %s426 = sphi 0, %s426
      %s428 = sphi 0, %s426
      %s429 = sphi 0, %s428
      %s443 = sphi 0, %s429
      %s447 = sphi 0, %s447
      %s449 = sphi 0, %s447
      %s450 = sphi 0, %s449
      %s464 = sphi 0, %s450
      %s470 = sphi 0, %s472
      %s473 = sphi 0, %s470
      %s474 = sphi 0, %s473
      %s490 = sphi 0, %s474
    $region4: #{tpu_custom_call.1} parent=1 // loop_header_branch
      %29 = sbr.rel (%p27) target = $region8
    $region5: #{tpu_custom_call.1} parent=1 // loop_body
      %s31 = ssub.s32 %s26, 1
      %s32 = ssub.s32 %s26, 2
      %s39 = sadd.s32 1, %s34
      %p40 = scmp.ge.s32.totalorder %s39, 2
      %s41 = scalar_select %p40, 0, %s39
      %s42 = sadd.s32 1, %s33
      %s43 = scalar_select %p40, %s42, %s33
      %p44 = scmp.ge.s32.totalorder %s43, 2
      %s45 = scalar_select %p44, 0, %s43
      %s46 = ssub.s32 %s33, %s45
      %p47 = scmp.eq.s32.totalorder %s46, 0
      %s49 = sadd.s32 %s48, 1
      %s50 = scalar_select %p47, %s48, %s49
      %p53 = pneg %p47
      %p54 = scmp.eq.s32.totalorder %s26, 3
      %p55 = por %p53, %p54
      %p56 = scmp.ne.s32.totalorder %s48, %s51
      %p57 = scmp.eq.s32.totalorder %s26, 0
      %p58 = por %p56, %p57
      %p59 = scmp.ne.s32.totalorder %s48, %s51
      %p60 = scmp.eq.s32.totalorder %s31, 3
      %p61 = por %p59, %p60
      %p62 = scmp.ne.s32.totalorder %s51, %s52
      %p63 = scmp.eq.s32.totalorder %s31, 0
      %p64 = por %p62, %p63
      %p65 = scmp.ne.s32.totalorder %s51, %s52
      %p66 = scmp.eq.s32.totalorder %s32, 3
      %p67 = por %p65, %p66
      %p69 = scmp.ne.s32.totalorder %s52, %s68
      %p70 = scmp.eq.s32.totalorder %s32, 0
      %p71 = por %p69, %p70
      %s73 = sadd.s32 %s72, 1
      %p76 = scmp.eq.s32.totalorder %s26, 3
      %p77 = scmp.ne.s32.totalorder %s72, %s74
      %p78 = scmp.eq.s32.totalorder %s26, 0
      %p79 = por %p77, %p78
      %p80 = scmp.ne.s32.totalorder %s72, %s74
      %p81 = scmp.eq.s32.totalorder %s31, 3
      %p82 = por %p80, %p81
      %p83 = scmp.ne.s32.totalorder %s74, %s75
      %p84 = scmp.eq.s32.totalorder %s31, 0
      %p85 = por %p83, %p84
      %p86 = scmp.ne.s32.totalorder %s74, %s75
      %p87 = scmp.eq.s32.totalorder %s32, 3
      %p88 = por %p86, %p87
      %p90 = scmp.ne.s32.totalorder %s75, %s89
      %p91 = scmp.eq.s32.totalorder %s32, 0
      %p92 = por %p90, %p91
      %s94 = sadd.s32 %s93, 1
      %p97 = scmp.eq.s32.totalorder %s26, 3
      %p98 = scmp.ne.s32.totalorder %s93, %s95
      %p99 = scmp.eq.s32.totalorder %s26, 0
      %p100 = por %p98, %p99
      %p101 = scmp.ne.s32.totalorder %s93, %s95
      %p102 = scmp.eq.s32.totalorder %s31, 3
      %p103 = por %p101, %p102
      %p104 = scmp.ne.s32.totalorder %s95, %s96
      %p105 = scmp.eq.s32.totalorder %s31, 0
      %p106 = por %p104, %p105
      %p107 = scmp.ne.s32.totalorder %s95, %s96
      %p108 = scmp.eq.s32.totalorder %s32, 3
      %p109 = por %p107, %p108
      %p111 = scmp.ne.s32.totalorder %s96, %s110
      %p112 = scmp.eq.s32.totalorder %s32, 0
      %p113 = por %p111, %p112
      %s114 = ssub.s32 %s34, %s41
      %p115 = scmp.eq.s32.totalorder %s114, 0
      %s117 = sadd.s32 %s116, 1
      %s118 = scalar_select %p115, %s116, %s117
      %p121 = pneg %p115
      %p122 = scmp.eq.s32.totalorder %s26, 3
      %p123 = por %p121, %p122
      %p124 = scmp.ne.s32.totalorder %s116, %s119
      %p125 = scmp.eq.s32.totalorder %s26, 0
      %p126 = por %p124, %p125
      %p127 = scmp.ne.s32.totalorder %s116, %s119
      %p128 = scmp.eq.s32.totalorder %s31, 3
      %p129 = por %p127, %p128
      %p130 = scmp.ne.s32.totalorder %s119, %s120
      %p131 = scmp.eq.s32.totalorder %s31, 0
      %p132 = por %p130, %p131
      %p133 = scmp.ne.s32.totalorder %s119, %s120
      %p134 = scmp.eq.s32.totalorder %s32, 3
      %p135 = por %p133, %p134
      %p137 = scmp.ne.s32.totalorder %s120, %s136
      %p138 = scmp.eq.s32.totalorder %s32, 0
      %p139 = por %p137, %p138
      %s140 = ssub.s32 %s34, %s41
      %p141 = scmp.eq.s32.totalorder %s140, 0
      %s143 = sadd.s32 %s142, 1
      %s144 = scalar_select %p141, %s142, %s143
      %p147 = pneg %p141
      %p148 = scmp.eq.s32.totalorder %s26, 3
      %p149 = por %p147, %p148
      %p150 = scmp.ne.s32.totalorder %s142, %s145
      %p151 = scmp.eq.s32.totalorder %s26, 0
      %p152 = por %p150, %p151
      %p153 = scmp.ne.s32.totalorder %s142, %s145
      %p154 = scmp.eq.s32.totalorder %s31, 3
      %p155 = por %p153, %p154
      %p156 = scmp.ne.s32.totalorder %s145, %s146
      %p157 = scmp.eq.s32.totalorder %s31, 0
      %p158 = por %p156, %p157
      %p159 = scmp.ne.s32.totalorder %s145, %s146
      %p160 = scmp.eq.s32.totalorder %s32, 3
      %p161 = por %p159, %p160
      %p163 = scmp.ne.s32.totalorder %s146, %s162
      %p164 = scmp.eq.s32.totalorder %s32, 0
      %p165 = por %p163, %p164
      %s166 = ssub.s32 %s34, %s41
      %p167 = scmp.eq.s32.totalorder %s166, 0
      %s169 = sadd.s32 %s168, 1
      %s170 = scalar_select %p167, %s168, %s169
      %p173 = pneg %p167
      %p174 = scmp.eq.s32.totalorder %s26, 3
      %p175 = por %p173, %p174
      %p176 = scmp.ne.s32.totalorder %s168, %s171
      %p177 = scmp.eq.s32.totalorder %s26, 0
      %p178 = por %p176, %p177
      %p179 = scmp.ne.s32.totalorder %s168, %s171
      %p180 = scmp.eq.s32.totalorder %s31, 3
      %p181 = por %p179, %p180
      %p182 = scmp.ne.s32.totalorder %s171, %s172
      %p183 = scmp.eq.s32.totalorder %s31, 0
      %p184 = por %p182, %p183
      %p185 = scmp.ne.s32.totalorder %s171, %s172
      %p186 = scmp.eq.s32.totalorder %s32, 3
      %p187 = por %p185, %p186
      %p189 = scmp.ne.s32.totalorder %s172, %s188
      %p190 = scmp.eq.s32.totalorder %s32, 0
      %p191 = por %p189, %p190
      %s192 = ssub.s32 %s34, %s41
      %p193 = scmp.eq.s32.totalorder %s192, 0
      %s195 = sadd.s32 %s194, 1
      %s196 = scalar_select %p193, %s194, %s195
      %p199 = pneg %p193
      %p200 = scmp.eq.s32.totalorder %s26, 3
      %p201 = por %p199, %p200
      %p202 = scmp.ne.s32.totalorder %s194, %s197
      %p203 = scmp.eq.s32.totalorder %s26, 0
      %p204 = por %p202, %p203
      %p205 = scmp.ne.s32.totalorder %s194, %s197
      %p206 = scmp.eq.s32.totalorder %s31, 3
      %p207 = por %p205, %p206
      %p208 = scmp.ne.s32.totalorder %s197, %s198
      %p209 = scmp.eq.s32.totalorder %s31, 0
      %p210 = por %p208, %p209
      %p211 = scmp.ne.s32.totalorder %s197, %s198
      %p212 = scmp.eq.s32.totalorder %s32, 3
      %p213 = por %p211, %p212
      %p215 = scmp.ne.s32.totalorder %s198, %s214
      %p216 = scmp.eq.s32.totalorder %s32, 0
      %p217 = por %p215, %p216
      %s218 = ssub.s32 %s34, %s41
      %p219 = scmp.eq.s32.totalorder %s218, 0
      %s221 = sadd.s32 %s220, 1
      %s222 = scalar_select %p219, %s220, %s221
      %p225 = pneg %p219
      %p226 = scmp.eq.s32.totalorder %s26, 3
      %p227 = por %p225, %p226
      %p228 = scmp.ne.s32.totalorder %s220, %s223
      %p229 = scmp.eq.s32.totalorder %s26, 0
      %p230 = por %p228, %p229
      %p231 = scmp.ne.s32.totalorder %s220, %s223
      %p232 = scmp.eq.s32.totalorder %s31, 3
      %p233 = por %p231, %p232
      %p234 = scmp.ne.s32.totalorder %s223, %s224
      %p235 = scmp.eq.s32.totalorder %s31, 0
      %p236 = por %p234, %p235
      %p237 = scmp.ne.s32.totalorder %s223, %s224
      %p238 = scmp.eq.s32.totalorder %s32, 3
      %p239 = por %p237, %p238
      %p241 = scmp.ne.s32.totalorder %s224, %s240
      %p242 = scmp.eq.s32.totalorder %s32, 0
      %p243 = por %p241, %p242
      %s244 = ssub.s32 %s34, %s41
      %p245 = scmp.eq.s32.totalorder %s244, 0
      %s247 = sadd.s32 %s246, 1
      %s248 = scalar_select %p245, %s246, %s247
      %p251 = pneg %p245
      %p252 = scmp.eq.s32.totalorder %s26, 3
      %p253 = por %p251, %p252
      %p254 = scmp.ne.s32.totalorder %s246, %s249
      %p255 = scmp.eq.s32.totalorder %s26, 0
      %p256 = por %p254, %p255
      %p257 = scmp.ne.s32.totalorder %s246, %s249
      %p258 = scmp.eq.s32.totalorder %s31, 3
      %p259 = por %p257, %p258
      %p260 = scmp.ne.s32.totalorder %s249, %s250
      %p261 = scmp.eq.s32.totalorder %s31, 0
      %p262 = por %p260, %p261
      %p263 = scmp.ne.s32.totalorder %s249, %s250
      %p264 = scmp.eq.s32.totalorder %s32, 3
      %p265 = por %p263, %p264
      %p267 = scmp.ne.s32.totalorder %s250, %s266
      %p268 = scmp.eq.s32.totalorder %s32, 0
      %p269 = por %p267, %p268
      %s270 = ssub.s32 %s34, %s41
      %p271 = scmp.eq.s32.totalorder %s270, 0
      %s273 = sadd.s32 %s272, 1
      %s274 = scalar_select %p271, %s272, %s273
      %p277 = pneg %p271
      %p278 = scmp.eq.s32.totalorder %s26, 3
      %p279 = por %p277, %p278
      %p280 = scmp.ne.s32.totalorder %s272, %s275
      %p281 = scmp.eq.s32.totalorder %s26, 0
      %p282 = por %p280, %p281
      %p283 = scmp.ne.s32.totalorder %s272, %s275
      %p284 = scmp.eq.s32.totalorder %s31, 3
      %p285 = por %p283, %p284
      %p286 = scmp.ne.s32.totalorder %s275, %s276
      %p287 = scmp.eq.s32.totalorder %s31, 0
      %p288 = por %p286, %p287
      %p289 = scmp.ne.s32.totalorder %s275, %s276
      %p290 = scmp.eq.s32.totalorder %s32, 3
      %p291 = por %p289, %p290
      %p293 = scmp.ne.s32.totalorder %s276, %s292
      %p294 = scmp.eq.s32.totalorder %s32, 0
      %p295 = por %p293, %p294
      %s296 = ssub.s32 %s34, %s41
      %p297 = scmp.eq.s32.totalorder %s296, 0
      %s299 = sadd.s32 %s298, 1
      %s300 = scalar_select %p297, %s298, %s299
      %p303 = pneg %p297
      %p304 = scmp.eq.s32.totalorder %s26, 3
      %p305 = por %p303, %p304
      %p306 = scmp.ne.s32.totalorder %s298, %s301
      %p307 = scmp.eq.s32.totalorder %s26, 0
      %p308 = por %p306, %p307
      %p309 = scmp.ne.s32.totalorder %s298, %s301
      %p310 = scmp.eq.s32.totalorder %s31, 3
      %p311 = por %p309, %p310
      %p312 = scmp.ne.s32.totalorder %s301, %s302
      %p313 = scmp.eq.s32.totalorder %s31, 0
      %p314 = por %p312, %p313
      %p315 = scmp.ne.s32.totalorder %s301, %s302
      %p316 = scmp.eq.s32.totalorder %s32, 3
      %p317 = por %p315, %p316
      %p319 = scmp.ne.s32.totalorder %s302, %s318
      %p320 = scmp.eq.s32.totalorder %s32, 0
      %p321 = por %p319, %p320
      %s322 = ssub.s32 %s34, %s41
      %p323 = scmp.eq.s32.totalorder %s322, 0
      %s325 = sadd.s32 %s324, 1
      %s326 = scalar_select %p323, %s324, %s325
      %p329 = pneg %p323
      %p330 = scmp.eq.s32.totalorder %s26, 3
      %p331 = por %p329, %p330
      %p332 = scmp.ne.s32.totalorder %s324, %s327
      %p333 = scmp.eq.s32.totalorder %s26, 0
      %p334 = por %p332, %p333
      %p335 = scmp.ne.s32.totalorder %s324, %s327
      %p336 = scmp.eq.s32.totalorder %s31, 3
      %p337 = por %p335, %p336
      %p338 = scmp.ne.s32.totalorder %s327, %s328
      %p339 = scmp.eq.s32.totalorder %s31, 0
      %p340 = por %p338, %p339
      %p341 = scmp.ne.s32.totalorder %s327, %s328
      %p342 = scmp.eq.s32.totalorder %s32, 3
      %p343 = por %p341, %p342
      %p345 = scmp.ne.s32.totalorder %s328, %s344
      %p346 = scmp.eq.s32.totalorder %s32, 0
      %p347 = por %p345, %p346
      %s348 = ssub.s32 %s34, %s41
      %p349 = scmp.eq.s32.totalorder %s348, 0
      %s351 = sadd.s32 %s350, 1
      %s352 = scalar_select %p349, %s350, %s351
      %p355 = pneg %p349
      %p356 = scmp.eq.s32.totalorder %s26, 3
      %p357 = por %p355, %p356
      %p358 = scmp.ne.s32.totalorder %s350, %s353
      %p359 = scmp.eq.s32.totalorder %s26, 0
      %p360 = por %p358, %p359
      %p361 = scmp.ne.s32.totalorder %s350, %s353
      %p362 = scmp.eq.s32.totalorder %s31, 3
      %p363 = por %p361, %p362
      %p364 = scmp.ne.s32.totalorder %s353, %s354
      %p365 = scmp.eq.s32.totalorder %s31, 0
      %p366 = por %p364, %p365
      %p367 = scmp.ne.s32.totalorder %s353, %s354
      %p368 = scmp.eq.s32.totalorder %s32, 3
      %p369 = por %p367, %p368
      %p371 = scmp.ne.s32.totalorder %s354, %s370
      %p372 = scmp.eq.s32.totalorder %s32, 0
      %p373 = por %p371, %p372
      %s374 = ssub.s32 %s34, %s41
      %p375 = scmp.eq.s32.totalorder %s374, 0
      %s377 = sadd.s32 %s376, 1
      %s378 = scalar_select %p375, %s376, %s377
      %p381 = pneg %p375
      %p382 = scmp.eq.s32.totalorder %s26, 3
      %p383 = por %p381, %p382
      %p384 = scmp.ne.s32.totalorder %s376, %s379
      %p385 = scmp.eq.s32.totalorder %s26, 0
      %p386 = por %p384, %p385
      %p387 = scmp.ne.s32.totalorder %s376, %s379
      %p388 = scmp.eq.s32.totalorder %s31, 3
      %p389 = por %p387, %p388
      %p390 = scmp.ne.s32.totalorder %s379, %s380
      %p391 = scmp.eq.s32.totalorder %s31, 0
      %p392 = por %p390, %p391
      %p393 = scmp.ne.s32.totalorder %s379, %s380
      %p394 = scmp.eq.s32.totalorder %s32, 3
      %p395 = por %p393, %p394
      %p397 = scmp.ne.s32.totalorder %s380, %s396
      %p398 = scmp.eq.s32.totalorder %s32, 0
      %p399 = por %p397, %p398
      %s400 = ssub.s32 %s34, %s41
      %p401 = scmp.eq.s32.totalorder %s400, 0
      %s403 = sadd.s32 %s402, 1
      %s404 = scalar_select %p401, %s402, %s403
      %p407 = pneg %p401
      %p408 = scmp.eq.s32.totalorder %s26, 3
      %p409 = por %p407, %p408
      %p410 = scmp.ne.s32.totalorder %s402, %s405
      %p411 = scmp.eq.s32.totalorder %s26, 0
      %p412 = por %p410, %p411
      %p413 = scmp.ne.s32.totalorder %s402, %s405
      %p414 = scmp.eq.s32.totalorder %s31, 3
      %p415 = por %p413, %p414
      %p416 = scmp.ne.s32.totalorder %s405, %s406
      %p417 = scmp.eq.s32.totalorder %s31, 0
      %p418 = por %p416, %p417
      %p419 = scmp.ne.s32.totalorder %s405, %s406
      %p420 = scmp.eq.s32.totalorder %s32, 3
      %p421 = por %p419, %p420
      %p423 = scmp.ne.s32.totalorder %s406, %s422
      %p424 = scmp.eq.s32.totalorder %s32, 0
      %p425 = por %p423, %p424
      %s427 = sadd.s32 %s426, 1
      %p430 = scmp.eq.s32.totalorder %s26, 3
      %p431 = scmp.ne.s32.totalorder %s426, %s428
      %p432 = scmp.eq.s32.totalorder %s26, 0
      %p433 = por %p431, %p432
      %p434 = scmp.ne.s32.totalorder %s426, %s428
      %p435 = scmp.eq.s32.totalorder %s31, 3
      %p436 = por %p434, %p435
      %p437 = scmp.ne.s32.totalorder %s428, %s429
      %p438 = scmp.eq.s32.totalorder %s31, 0
      %p439 = por %p437, %p438
      %p440 = scmp.ne.s32.totalorder %s428, %s429
      %p441 = scmp.eq.s32.totalorder %s32, 3
      %p442 = por %p440, %p441
      %p444 = scmp.ne.s32.totalorder %s429, %s443
      %p445 = scmp.eq.s32.totalorder %s32, 0
      %p446 = por %p444, %p445
      %s448 = sadd.s32 %s447, 1
      %p451 = scmp.eq.s32.totalorder %s26, 3
      %p452 = scmp.ne.s32.totalorder %s447, %s449
      %p453 = scmp.eq.s32.totalorder %s26, 0
      %p454 = por %p452, %p453
      %p455 = scmp.ne.s32.totalorder %s447, %s449
      %p456 = scmp.eq.s32.totalorder %s31, 3
      %p457 = por %p455, %p456
      %p458 = scmp.ne.s32.totalorder %s449, %s450
      %p459 = scmp.eq.s32.totalorder %s31, 0
      %p460 = por %p458, %p459
      %p461 = scmp.ne.s32.totalorder %s449, %s450
      %p462 = scmp.eq.s32.totalorder %s32, 3
      %p463 = por %p461, %p462
      %p465 = scmp.ne.s32.totalorder %s450, %s464
      %p466 = scmp.eq.s32.totalorder %s32, 0
      %p467 = por %p465, %p466
      %s468 = ssub.s32 %s33, %s45
      %p469 = scmp.eq.s32.totalorder %s468, 0
      %s471 = sadd.s32 %s470, 1
      %s472 = scalar_select %p469, %s470, %s471
      %p475 = pneg %p469
      %p476 = scmp.eq.s32.totalorder %s26, 3
      %p477 = por %p475, %p476
      %p478 = scmp.ne.s32.totalorder %s470, %s473
      %p479 = scmp.eq.s32.totalorder %s26, 0
      %p480 = por %p478, %p479
      %p481 = scmp.ne.s32.totalorder %s470, %s473
      %p482 = scmp.eq.s32.totalorder %s31, 3
      %p483 = por %p481, %p482
      %p484 = scmp.ne.s32.totalorder %s473, %s474
      %p485 = scmp.eq.s32.totalorder %s31, 0
      %p486 = por %p484, %p485
      %p487 = scmp.ne.s32.totalorder %s473, %s474
      %p488 = scmp.eq.s32.totalorder %s32, 3
      %p489 = por %p487, %p488
      %p491 = scmp.ne.s32.totalorder %s474, %s490
      %p492 = scmp.eq.s32.totalorder %s32, 0
      %p493 = por %p491, %p492
      %p494 = scmp.le.s32.totalorder 1, %s26
      %p495 = scmp.lt.s32.totalorder %s26, 5
      %p496 = pnand %p494, %p495
      %p497 = pneg %p496
      // Predicated region
      $region9: #{tpu_custom_call.1} parent=5 // pred_check
        _
      $region10: #{tpu_custom_call.1} parent=5 // pred_check_branch
        %499 = sbr.rel (%p496) target = $region12
      $region11: #{tpu_custom_call.1} parent=5 // pred_region
        %s500 = ssub.s32 %s26, 1
        // Predicated region
        $region13: #{tpu_custom_call.1} parent=11 // pred_check
          %p501 = pneg %p85
        $region14: #{tpu_custom_call.1} parent=11 // pred_check_branch
          %503 = sbr.rel (%p501) target = $region16
        $region15: #{tpu_custom_call.1} parent=11 // pred_region
          _
        $region16: #{tpu_custom_call.1} parent=11 // pred_fallthru
          _
        // Predicated region
        $region17: #{tpu_custom_call.1} parent=11 // pred_check
          %p504 = pneg %p106
        $region18: #{tpu_custom_call.1} parent=11 // pred_check_branch
          %506 = sbr.rel (%p504) target = $region20
        $region19: #{tpu_custom_call.1} parent=11 // pred_region
          _
        $region20: #{tpu_custom_call.1} parent=11 // pred_fallthru
          _
        // Predicated region
        $region21: #{tpu_custom_call.1} parent=11 // pred_check
          %p507 = pneg %p439
        $region22: #{tpu_custom_call.1} parent=11 // pred_check_branch
          %509 = sbr.rel (%p507) target = $region24
        $region23: #{tpu_custom_call.1} parent=11 // pred_region
          _
        $region24: #{tpu_custom_call.1} parent=11 // pred_fallthru
          _
        // Predicated region
        $region25: #{tpu_custom_call.1} parent=11 // pred_check
          %p510 = pneg %p460
        $region26: #{tpu_custom_call.1} parent=11 // pred_check_branch
          %512 = sbr.rel (%p510) target = $region28
        $region27: #{tpu_custom_call.1} parent=11 // pred_region
          _
        $region28: #{tpu_custom_call.1} parent=11 // pred_fallthru
          _
      $region12: #{tpu_custom_call.1} parent=5 // pred_fallthru
        _
      %p513 = scmp.lt.s32.totalorder %s26, 4
      // Predicated region
      $region29: #{tpu_custom_call.1} parent=5 // pred_check
        %p514 = pneg %p513
      $region30: #{tpu_custom_call.1} parent=5 // pred_check_branch
        %516 = sbr.rel (%p514) target = $region32
      $region31: #{tpu_custom_call.1} parent=5 // pred_region
        // Predicated region
        $region33: #{tpu_custom_call.1} parent=31 // pred_check
          %p517 = pneg %p58
        $region34: #{tpu_custom_call.1} parent=31 // pred_check_branch
          %519 = sbr.rel (%p517) target = $region36
        $region35: #{tpu_custom_call.1} parent=31 // pred_region
          %p520 = scmp.lt.s32.totalorder %s33, 1
          %s521 = scalar_select %p520, %s33, 1
          %s522 = smul.addr %s521, 4
          %s523 = scalar_lea.vmem %s0, %s522
        $region36: #{tpu_custom_call.1} parent=31 // pred_fallthru
          _
        // Predicated region
        $region37: #{tpu_custom_call.1} parent=31 // pred_check
          %p524 = pneg %p126
        $region38: #{tpu_custom_call.1} parent=31 // pred_check_branch
          %526 = sbr.rel (%p524) target = $region40
        $region39: #{tpu_custom_call.1} parent=31 // pred_region
          %p527 = scmp.lt.s32.totalorder %s34, 1
          %s528 = scalar_select %p527, %s34, 1
          %s529 = smul.addr %s528, 4
          %s530 = smul.addr %s529, 4
          %s531 = scalar_lea.vmem %s3, %s530
        $region40: #{tpu_custom_call.1} parent=31 // pred_fallthru
          _
        // Predicated region
        $region41: #{tpu_custom_call.1} parent=31 // pred_check
          %p532 = pneg %p152
        $region42: #{tpu_custom_call.1} parent=31 // pred_check_branch
          %534 = sbr.rel (%p532) target = $region44
        $region43: #{tpu_custom_call.1} parent=31 // pred_region
          %p535 = scmp.lt.s32.totalorder %s34, 1
          %s536 = scalar_select %p535, %s34, 1
          %s537 = scalar_lea.vmem %s4, %s536
        $region44: #{tpu_custom_call.1} parent=31 // pred_fallthru
          _
        // Predicated region
        $region45: #{tpu_custom_call.1} parent=31 // pred_check
          %p538 = pneg %p178
        $region46: #{tpu_custom_call.1} parent=31 // pred_check_branch
          %540 = sbr.rel (%p538) target = $region48
        $region47: #{tpu_custom_call.1} parent=31 // pred_region
          %p541 = scmp.lt.s32.totalorder %s34, 1
          %s542 = scalar_select %p541, %s34, 1
          %s543 = smul.addr %s542, 4
          %s544 = smul.addr %s543, 4
          %s545 = scalar_lea.vmem %s5, %s544
        $region48: #{tpu_custom_call.1} parent=31 // pred_fallthru
          _
        // Predicated region
        $region49: #{tpu_custom_call.1} parent=31 // pred_check
          %p546 = pneg %p204
        $region50: #{tpu_custom_call.1} parent=31 // pred_check_branch
          %548 = sbr.rel (%p546) target = $region52
        $region51: #{tpu_custom_call.1} parent=31 // pred_region
          %p549 = scmp.lt.s32.totalorder %s34, 1
          %s550 = scalar_select %p549, %s34, 1
          %s551 = scalar_lea.vmem %s6, %s550
        $region52: #{tpu_custom_call.1} parent=31 // pred_fallthru
          _
        // Predicated region
        $region53: #{tpu_custom_call.1} parent=31 // pred_check
          %p552 = pneg %p230
        $region54: #{tpu_custom_call.1} parent=31 // pred_check_branch
          %554 = sbr.rel (%p552) target = $region56
        $region55: #{tpu_custom_call.1} parent=31 // pred_region
          %p555 = scmp.lt.s32.totalorder %s34, 1
          %s556 = scalar_select %p555, %s34, 1
          %s557 = scalar_lea.vmem %s7, %s556
        $region56: #{tpu_custom_call.1} parent=31 // pred_fallthru
          _
        // Predicated region
        $region57: #{tpu_custom_call.1} parent=31 // pred_check
          %p558 = pneg %p256
        $region58: #{tpu_custom_call.1} parent=31 // pred_check_branch
          %560 = sbr.rel (%p558) target = $region60
        $region59: #{tpu_custom_call.1} parent=31 // pred_region
          %p561 = scmp.lt.s32.totalorder %s34, 1
          %s562 = scalar_select %p561, %s34, 1
          %s563 = scalar_lea.vmem %s8, %s562
        $region60: #{tpu_custom_call.1} parent=31 // pred_fallthru
          _
        // Predicated region
        $region61: #{tpu_custom_call.1} parent=31 // pred_check
          %p564 = pneg %p282
        $region62: #{tpu_custom_call.1} parent=31 // pred_check_branch
          %566 = sbr.rel (%p564) target = $region64
        $region63: #{tpu_custom_call.1} parent=31 // pred_region
          %p567 = scmp.lt.s32.totalorder %s34, 1
          %s568 = scalar_select %p567, %s34, 1
          %s569 = smul.addr %s568, 64
          %s570 = smul.addr %s569, 4
          %s571 = scalar_lea.vmem %s9, %s570
        $region64: #{tpu_custom_call.1} parent=31 // pred_fallthru
          _
        // Predicated region
        $region65: #{tpu_custom_call.1} parent=31 // pred_check
          %p572 = pneg %p308
        $region66: #{tpu_custom_call.1} parent=31 // pred_check_branch
          %574 = sbr.rel (%p572) target = $region68
        $region67: #{tpu_custom_call.1} parent=31 // pred_region
          %p575 = scmp.lt.s32.totalorder %s34, 1
          %s576 = scalar_select %p575, %s34, 1
          %s577 = smul.addr %s576, 16
          %s578 = scalar_lea.vmem %s10, %s577
        $region68: #{tpu_custom_call.1} parent=31 // pred_fallthru
          _
        // Predicated region
        $region69: #{tpu_custom_call.1} parent=31 // pred_check
          %p579 = pneg %p334
        $region70: #{tpu_custom_call.1} parent=31 // pred_check_branch
          %581 = sbr.rel (%p579) target = $region72
        $region71: #{tpu_custom_call.1} parent=31 // pred_region
          %p582 = scmp.lt.s32.totalorder %s34, 1
          %s583 = scalar_select %p582, %s34, 1
          %s584 = smul.addr %s583, 256
          %s585 = smul.addr %s584, 4
          %s586 = scalar_lea.vmem %s11, %s585
        $region72: #{tpu_custom_call.1} parent=31 // pred_fallthru
          _
        // Predicated region
        $region73: #{tpu_custom_call.1} parent=31 // pred_check
          %p587 = pneg %p360
        $region74: #{tpu_custom_call.1} parent=31 // pred_check_branch
          %589 = sbr.rel (%p587) target = $region76
        $region75: #{tpu_custom_call.1} parent=31 // pred_region
          %p590 = scmp.lt.s32.totalorder %s34, 1
          %s591 = scalar_select %p590, %s34, 1
          %s592 = scalar_lea.vmem %s12, %s591
        $region76: #{tpu_custom_call.1} parent=31 // pred_fallthru
          _
        // Predicated region
        $region77: #{tpu_custom_call.1} parent=31 // pred_check
          %p593 = pneg %p386
        $region78: #{tpu_custom_call.1} parent=31 // pred_check_branch
          %595 = sbr.rel (%p593) target = $region80
        $region79: #{tpu_custom_call.1} parent=31 // pred_region
          %p596 = scmp.lt.s32.totalorder %s34, 1
          %s597 = scalar_select %p596, %s34, 1
          %s598 = scalar_lea.vmem %s13, %s597
        $region80: #{tpu_custom_call.1} parent=31 // pred_fallthru
          _
        // Predicated region
        $region81: #{tpu_custom_call.1} parent=31 // pred_check
          %p599 = pneg %p412
        $region82: #{tpu_custom_call.1} parent=31 // pred_check_branch
          %601 = sbr.rel (%p599) target = $region84
        $region83: #{tpu_custom_call.1} parent=31 // pred_region
          %p602 = scmp.lt.s32.totalorder %s34, 1
          %s603 = scalar_select %p602, %s34, 1
          %s604 = scalar_lea.vmem %s14, %s603
        $region84: #{tpu_custom_call.1} parent=31 // pred_fallthru
          _
      $region32: #{tpu_custom_call.1} parent=5 // pred_fallthru
        _
      %p605 = scmp.le.s32.totalorder 1, %s26
      %p606 = scmp.lt.s32.totalorder %s26, 5
      %p607 = pnand %p605, %p606
      %p608 = pneg %p607
      // Predicated region
      $region85: #{tpu_custom_call.1} parent=5 // pred_check
        _
      $region86: #{tpu_custom_call.1} parent=5 // pred_check_branch
        %610 = sbr.rel (%p607) target = $region88
      $region87: #{tpu_custom_call.1} parent=5 // pred_region
        %s611 = ssub.s32 %s26, 1
        %p612 = scmp.lt.s32.totalorder %s35, 1
        %s613 = scalar_select %p612, %s35, 1
        %s614 = smul.addr %s613, 4
        %s615 = scalar_lea.vmem %s0, %s614
        %p616 = pneg %p64
        %p617 = pneg %p61
        %p618 = pneg %p85
        %p619 = pneg %p82
        %p620 = pneg %p106
        %p621 = pneg %p103
        %p622 = scmp.lt.s32.totalorder %s36, 1
        %s623 = scalar_select %p622, %s36, 1
        %s624 = smul.addr %s623, 4
        %s625 = smul.addr %s624, 4
        %s626 = scalar_lea.vmem %s3, %s625
        %p627 = pneg %p132
        %p628 = pneg %p129
        %p629 = scmp.lt.s32.totalorder %s36, 1
        %s630 = scalar_select %p629, %s36, 1
        %s631 = scalar_lea.vmem %s4, %s630
        %p632 = pneg %p158
        %p633 = pneg %p155
        %p634 = scmp.lt.s32.totalorder %s36, 1
        %s635 = scalar_select %p634, %s36, 1
        %s636 = smul.addr %s635, 4
        %s637 = smul.addr %s636, 4
        %s638 = scalar_lea.vmem %s5, %s637
        %p639 = pneg %p184
        %p640 = pneg %p181
        %p641 = scmp.lt.s32.totalorder %s36, 1
        %s642 = scalar_select %p641, %s36, 1
        %s643 = scalar_lea.vmem %s6, %s642
        %p644 = pneg %p210
        %p645 = pneg %p207
        %p646 = scmp.lt.s32.totalorder %s36, 1
        %s647 = scalar_select %p646, %s36, 1
        %s648 = scalar_lea.vmem %s7, %s647
        %p649 = pneg %p236
        %p650 = pneg %p233
        %p651 = scmp.lt.s32.totalorder %s36, 1
        %s652 = scalar_select %p651, %s36, 1
        %s653 = scalar_lea.vmem %s8, %s652
        %p654 = pneg %p262
        %p655 = pneg %p259
        %p656 = scmp.lt.s32.totalorder %s36, 1
        %s657 = scalar_select %p656, %s36, 1
        %s658 = smul.addr %s657, 64
        %s659 = smul.addr %s658, 4
        %s660 = scalar_lea.vmem %s9, %s659
        %p661 = pneg %p288
        %p662 = pneg %p285
        %p663 = scmp.lt.s32.totalorder %s36, 1
        %s664 = scalar_select %p663, %s36, 1
        %s665 = smul.addr %s664, 16
        %s666 = scalar_lea.vmem %s10, %s665
        %p667 = pneg %p314
        %p668 = pneg %p311
        %p669 = scmp.lt.s32.totalorder %s36, 1
        %s670 = scalar_select %p669, %s36, 1
        %s671 = smul.addr %s670, 256
        %s672 = smul.addr %s671, 4
        %s673 = scalar_lea.vmem %s11, %s672
        %p674 = pneg %p340
        %p675 = pneg %p337
        %p676 = scmp.lt.s32.totalorder %s36, 1
        %s677 = scalar_select %p676, %s36, 1
        %s678 = scalar_lea.vmem %s12, %s677
        %p679 = pneg %p366
        %p680 = pneg %p363
        %p681 = scmp.lt.s32.totalorder %s36, 1
        %s682 = scalar_select %p681, %s36, 1
        %s683 = scalar_lea.vmem %s13, %s682
        %p684 = pneg %p392
        %p685 = pneg %p389
        %p686 = scmp.lt.s32.totalorder %s36, 1
        %s687 = scalar_select %p686, %s36, 1
        %s688 = scalar_lea.vmem %s14, %s687
        %p689 = pneg %p418
        %p690 = pneg %p415
        %p691 = pneg %p439
        %p692 = pneg %p436
        %p693 = pneg %p460
        %p694 = pneg %p457
        %p695 = pneg %p486
        %p696 = pneg %p483
        %s697 = sand.u32 %s473, 1
        %s698 = scalar_lea.sflag [#allocation4], %s697
        %s699 = sand.u32 %s473, 1
        %s700 = scalar_lea.vmem [#allocation3], %s699
        %p701 = scmp.lt.s32.totalorder %s35, 1
        %s702 = scalar_select %p701, %s35, 1
        %s703 = smul.addr %s702, 4
        %s704 = scalar_lea.vmem %s0, %s703
        %p705 = scmp.lt.s32.totalorder %s36, 1
        %s706 = scalar_select %p705, %s36, 1
        %s707 = smul.addr %s706, 4
        %s708 = smul.addr %s707, 4
        %s709 = scalar_lea.vmem %s3, %s708
        %p710 = scmp.lt.s32.totalorder %s36, 1
        %s711 = scalar_select %p710, %s36, 1
        %s712 = scalar_lea.vmem %s4, %s711
        %p713 = scmp.lt.s32.totalorder %s36, 1
        %s714 = scalar_select %p713, %s36, 1
        %s715 = smul.addr %s714, 4
        %s716 = smul.addr %s715, 4
        %s717 = scalar_lea.vmem %s5, %s716
        %p718 = scmp.lt.s32.totalorder %s36, 1
        %s719 = scalar_select %p718, %s36, 1
        %s720 = scalar_lea.vmem %s6, %s719
        %p721 = scmp.lt.s32.totalorder %s36, 1
        %s722 = scalar_select %p721, %s36, 1
        %s723 = scalar_lea.vmem %s7, %s722
        %p724 = scmp.lt.s32.totalorder %s36, 1
        %s725 = scalar_select %p724, %s36, 1
        %s726 = scalar_lea.vmem %s8, %s725
        %p727 = scmp.lt.s32.totalorder %s36, 1
        %s728 = scalar_select %p727, %s36, 1
        %s729 = smul.addr %s728, 64
        %s730 = smul.addr %s729, 4
        %s731 = scalar_lea.vmem %s9, %s730
        %p732 = scmp.lt.s32.totalorder %s36, 1
        %s733 = scalar_select %p732, %s36, 1
        %s734 = smul.addr %s733, 16
        %s735 = scalar_lea.vmem %s10, %s734
        %p736 = scmp.lt.s32.totalorder %s36, 1
        %s737 = scalar_select %p736, %s36, 1
        %s738 = smul.addr %s737, 256
        %s739 = smul.addr %s738, 4
        %s740 = scalar_lea.vmem %s11, %s739
        %p741 = scmp.lt.s32.totalorder %s36, 1
        %s742 = scalar_select %p741, %s36, 1
        %s743 = scalar_lea.vmem %s12, %s742
        %p744 = scmp.lt.s32.totalorder %s36, 1
        %s745 = scalar_select %p744, %s36, 1
        %s746 = scalar_lea.vmem %s13, %s745
        %p747 = scmp.lt.s32.totalorder %s36, 1
        %s748 = scalar_select %p747, %s36, 1
        %s749 = scalar_lea.vmem %s14, %s748
        %p751 = scmp.eq.s32.totalorder %s36, 0
        // Predicated region
        $region89: #{tpu_custom_call.1} parent=87 // pred_check
          %p752 = pneg %p751
        $region90: #{tpu_custom_call.1} parent=87 // pred_check_branch
          %754 = sbr.rel (%p752) target = $region92
        $region91: #{tpu_custom_call.1} parent=87 // pred_region
          %v755 = vld [vmem:[%s704] sm:$0xf]
          %v756 = vld [vmem:[%s2] sm:$0xf]
          %v757 = vld [vmem:[%s2 + $0x4] sm:$0xf]
          %v760 = vunpack.c.l.b16 %v756
          %v761 = vunpack.c.l.b16 %v757
          %v762 = vpack.c.b16 %v761, %v760
          %vm764 = vcmask 130048
          %v766 = vsel %vm764, %v755, 0
          %768 = vmatprep.subr.bf16.mxu0 0
          %769 = vmatpush1.bf16.msra.mxu0 0
          %770 = vmatprep.subr.bf16.mxu0 0
          %771 = vmatpush1.bf16.msra.mxu0 0
          %772 = vmatprep.subr.bf16.mxu0 0
          %773 = vmatpush1.bf16.msra.mxu0 0
          %774 = vmatprep.subr.bf16.mxu0 0
          %775 = vmatpush1.bf16.msra.mxu0 0
          %776 = vmatprep.subr.bf16.mxu0 0
          %777 = vmatpush1.bf16.msra.mxu0 0
          %778 = vmatprep.subr.bf16.mxu0 0
          %779 = vmatpush1.bf16.msra.mxu0 0
          %780 = vmatprep.subr.bf16.mxu0 0
          %781 = vmatpush1.bf16.msra.mxu0 0
          %782 = vmatprep.subr.bf16.mxu0 0
          %783 = vmatpush1.bf16.msra.mxu0 %v762
          %784 = vmatprep.subr.bf16.mxu0 0
          %785 = vmatpush2.bf16.msra.mxu0 0
          %786 = vmatprep.subr.bf16.mxu0 0
          %787 = vmatpush2.bf16.msra.mxu0 0
          %788 = vmatprep.subr.bf16.mxu0 0
          %789 = vmatpush2.bf16.msra.mxu0 0
          %790 = vmatprep.subr.bf16.mxu0 0
          %791 = vmatpush2.bf16.msra.mxu0 0
          %792 = vmatprep.subr.bf16.mxu0 0
          %793 = vmatpush2.bf16.msra.mxu0 0
          %794 = vmatprep.subr.bf16.mxu0 0
          %795 = vmatpush2.bf16.msra.mxu0 0
          %796 = vmatprep.subr.bf16.mxu0 0
          %797 = vmatpush2.bf16.msra.mxu0 0
          %798 = vmatprep.subr.bf16.mxu0 0
          %799 = vmatpush2.bf16.msra.mxu0 0
          %800 = vmatprep.mubr.bf16.mxu0 0
          %801 = vmatmul.mubr.bf16.gmra.mxu0 %v766
          %v802 = vpop.f32.mrf.mxu0
          %v803 = vadd.f32 0.0, %v802
          %v804 = vpop.f32.mrf.mxu0
          %v805 = vpop.f32.mrf.mxu0
          %v806 = vpop.f32.mrf.mxu0
          %807 = vdwg.mxu0
          %v808 = vld [vmem:[%s1] sm:$0xff]
          %v809 = vadd.f32 %v803, %v808
          %v810 = vmax.f32 %v809, 0.0
          %vm811 = vcmask 261120
          %812 = vst.msk [vmem:[#allocation2] sm:$0xff] %vm811, %v810
        $region92: #{tpu_custom_call.1} parent=87 // pred_fallthru
          _
        %v813 = vld [vmem:[#allocation2] sm:$0xff]
        %v814 = vpack.c.bf16 %v813, %v813
        %v815 = vld [vmem:[%s709] sm:$0xf]
        %v816 = vld [vmem:[%s709 + $0x4] sm:$0xf]
        %v817 = vld [vmem:[%s709 + $0x8] sm:$0xf]
        %v818 = vld [vmem:[%s709 + $0xc] sm:$0xf]
        %v819 = vld [vmem:[%s712] sm:$0x1]
        %v821 = vlaneseq
        %v822 = vshrl.u32 %v821, 7
        %v823 = vsub.s32 0, %v822
        %v824 = vrot.slane %v819, %v823
        %v830 = vunpack.c.l.b16 %v815
        %v831 = vunpack.c.l.b16 %v816
        %v832 = vunpack.c.l.b16 %v817
        %v833 = vunpack.c.l.b16 %v818
        %v834 = vpack.c.b16 %v831, %v830
        %v835 = vpack.c.b16 %v833, %v832
        %vm838 = vcmask 261120
        %v840 = vsel %vm838, %v814, 0
        %842 = vmatprep.subr.bf16.mxu0 0
        %843 = vmatpush1.bf16.msra.mxu0 0
        %844 = vmatprep.subr.bf16.mxu0 0
        %845 = vmatpush1.bf16.msra.mxu0 0
        %846 = vmatprep.subr.bf16.mxu0 0
        %847 = vmatpush1.bf16.msra.mxu0 0
        %848 = vmatprep.subr.bf16.mxu0 0
        %849 = vmatpush1.bf16.msra.mxu0 0
        %850 = vmatprep.subr.bf16.mxu0 0
        %851 = vmatpush1.bf16.msra.mxu0 0
        %852 = vmatprep.subr.bf16.mxu0 0
        %853 = vmatpush1.bf16.msra.mxu0 0
        %854 = vmatprep.subr.bf16.mxu0 0
        %855 = vmatpush1.bf16.msra.mxu0 %v835
        %856 = vmatprep.subr.bf16.mxu0 0
        %857 = vmatpush1.bf16.msra.mxu0 %v834
        %858 = vmatprep.subr.bf16.mxu0 0
        %859 = vmatpush2.bf16.msra.mxu0 0
        %860 = vmatprep.subr.bf16.mxu0 0
        %861 = vmatpush2.bf16.msra.mxu0 0
        %862 = vmatprep.subr.bf16.mxu0 0
        %863 = vmatpush2.bf16.msra.mxu0 0
        %864 = vmatprep.subr.bf16.mxu0 0
        %865 = vmatpush2.bf16.msra.mxu0 0
        %866 = vmatprep.subr.bf16.mxu0 0
        %867 = vmatpush2.bf16.msra.mxu0 0
        %868 = vmatprep.subr.bf16.mxu0 0
        %869 = vmatpush2.bf16.msra.mxu0 0
        %870 = vmatprep.subr.bf16.mxu0 0
        %871 = vmatpush2.bf16.msra.mxu0 0
        %872 = vmatprep.subr.bf16.mxu0 0
        %873 = vmatpush2.bf16.msra.mxu0 0
        %874 = vmatprep.mubr.bf16.mxu0 0
        %875 = vmatmul.mubr.bf16.gmra.mxu0 %v840
        %v876 = vpop.f32.mrf.mxu0
        %v877 = vadd.f32 %v824, %v876
        %v878 = vpop.f32.mrf.mxu0
        %v879 = vpop.f32.mrf.mxu0
        %v880 = vpop.f32.mrf.mxu0
        %881 = vdwg.mxu0
        %v882 = vpack.c.bf16 %v877, %v877
        %884 = vrot.lane.b32.xlu0 %v882, 120
        %v885 = vpop.permute.xlu0 %884
        %886 = vrot.lane.b32.xlu0 %v882, 112
        %v887 = vpop.permute.xlu0 %886
        %888 = vrot.lane.b32.xlu0 %v882, 104
        %v889 = vpop.permute.xlu0 %888
        %890 = vrot.lane.b32.xlu0 %v882, 96
        %v891 = vpop.permute.xlu0 %890
        %vm892 = vcmask 64512
        %v894 = vsel %vm892, %v882, 0
        %v897 = vsel %vm892, %v891, 0
        %899 = vmatprep.subr.bf16.mxu0 0
        %900 = vmatpush1.bf16.xpose.msra.mxu0 0
        %901 = vmatprep.subr.bf16.mxu0 0
        %902 = vmatpush1.bf16.xpose.msra.mxu0 0
        %903 = vmatprep.subr.bf16.mxu0 0
        %904 = vmatpush1.bf16.xpose.msra.mxu0 0
        %905 = vmatprep.subr.bf16.mxu0 0
        %906 = vmatpush1.bf16.xpose.msra.mxu0 0
        %907 = vmatprep.subr.bf16.mxu0 0
        %908 = vmatpush1.bf16.xpose.msra.mxu0 0
        %909 = vmatprep.subr.bf16.mxu0 0
        %910 = vmatpush1.bf16.xpose.msra.mxu0 0
        %911 = vmatprep.subr.bf16.mxu0 0
        %912 = vmatpush1.bf16.xpose.msra.mxu0 0
        %913 = vmatprep.subr.bf16.mxu0 0
        %914 = vmatpush1.bf16.xpose.msra.mxu0 %v897
        %915 = vmatprep.subr.bf16.mxu0 0
        %916 = vmatpush2.bf16.xpose.msra.mxu0 0
        %917 = vmatprep.subr.bf16.mxu0 0
        %918 = vmatpush2.bf16.xpose.msra.mxu0 0
        %919 = vmatprep.subr.bf16.mxu0 0
        %920 = vmatpush2.bf16.xpose.msra.mxu0 0
        %921 = vmatprep.subr.bf16.mxu0 0
        %922 = vmatpush2.bf16.xpose.msra.mxu0 0
        %923 = vmatprep.subr.bf16.mxu0 0
        %924 = vmatpush2.bf16.xpose.msra.mxu0 0
        %925 = vmatprep.subr.bf16.mxu0 0
        %926 = vmatpush2.bf16.xpose.msra.mxu0 0
        %927 = vmatprep.subr.bf16.mxu0 0
        %928 = vmatpush2.bf16.xpose.msra.mxu0 0
        %929 = vmatprep.subr.bf16.mxu0 0
        %930 = vmatpush2.bf16.xpose.msra.mxu0 0
        %931 = vmatprep.mubr.bf16.mxu0 0
        %932 = vmatmul.mubr.bf16.gmra.mxu0 %v894
        %v933 = vpop.f32.mrf.mxu0
        %v934 = vadd.f32 0.0, %v933
        %v935 = vpop.f32.mrf.mxu0
        %v936 = vpop.f32.mrf.mxu0
        %v937 = vpop.f32.mrf.mxu0
        %938 = vdwg.mxu0
        %939 = vrot.lane.b32.xlu0 %v885, 96
        %v940 = vpop.permute.xlu0 %939
        %v942 = vsel %vm892, %v885, 0
        %v945 = vsel %vm892, %v940, 0
        %947 = vmatprep.subr.bf16.mxu0 0
        %948 = vmatpush1.bf16.xpose.msra.mxu0 0
        %949 = vmatprep.subr.bf16.mxu0 0
        %950 = vmatpush1.bf16.xpose.msra.mxu0 0
        %951 = vmatprep.subr.bf16.mxu0 0
        %952 = vmatpush1.bf16.xpose.msra.mxu0 0
        %953 = vmatprep.subr.bf16.mxu0 0
        %954 = vmatpush1.bf16.xpose.msra.mxu0 0
        %955 = vmatprep.subr.bf16.mxu0 0
        %956 = vmatpush1.bf16.xpose.msra.mxu0 0
        %957 = vmatprep.subr.bf16.mxu0 0
        %958 = vmatpush1.bf16.xpose.msra.mxu0 0
        %959 = vmatprep.subr.bf16.mxu0 0
        %960 = vmatpush1.bf16.xpose.msra.mxu0 0
        %961 = vmatprep.subr.bf16.mxu0 0
        %962 = vmatpush1.bf16.xpose.msra.mxu0 %v945
        %963 = vmatprep.subr.bf16.mxu0 0
        %964 = vmatpush2.bf16.xpose.msra.mxu0 0
        %965 = vmatprep.subr.bf16.mxu0 0
        %966 = vmatpush2.bf16.xpose.msra.mxu0 0
        %967 = vmatprep.subr.bf16.mxu0 0
        %968 = vmatpush2.bf16.xpose.msra.mxu0 0
        %969 = vmatprep.subr.bf16.mxu0 0
        %970 = vmatpush2.bf16.xpose.msra.mxu0 0
        %971 = vmatprep.subr.bf16.mxu0 0
        %972 = vmatpush2.bf16.xpose.msra.mxu0 0
        %973 = vmatprep.subr.bf16.mxu0 0
        %974 = vmatpush2.bf16.xpose.msra.mxu0 0
        %975 = vmatprep.subr.bf16.mxu0 0
        %976 = vmatpush2.bf16.xpose.msra.mxu0 0
        %977 = vmatprep.subr.bf16.mxu0 0
        %978 = vmatpush2.bf16.xpose.msra.mxu0 0
        %979 = vmatprep.mubr.bf16.mxu0 0
        %980 = vmatmul.mubr.bf16.gmra.mxu0 %v942
        %v981 = vpop.f32.mrf.mxu0
        %v982 = vadd.f32 0.0, %v981
        %v983 = vpop.f32.mrf.mxu0
        %v984 = vpop.f32.mrf.mxu0
        %v985 = vpop.f32.mrf.mxu0
        %986 = vdwg.mxu0
        %987 = vrot.lane.b32.xlu0 %v887, 96
        %v988 = vpop.permute.xlu0 %987
        %v990 = vsel %vm892, %v887, 0
        %v993 = vsel %vm892, %v988, 0
        %995 = vmatprep.subr.bf16.mxu0 0
        %996 = vmatpush1.bf16.xpose.msra.mxu0 0
        %997 = vmatprep.subr.bf16.mxu0 0
        %998 = vmatpush1.bf16.xpose.msra.mxu0 0
        %999 = vmatprep.subr.bf16.mxu0 0
        %1000 = vmatpush1.bf16.xpose.msra.mxu0 0
        %1001 = vmatprep.subr.bf16.mxu0 0
        %1002 = vmatpush1.bf16.xpose.msra.mxu0 0
        %1003 = vmatprep.subr.bf16.mxu0 0
        %1004 = vmatpush1.bf16.xpose.msra.mxu0 0
        %1005 = vmatprep.subr.bf16.mxu0 0
        %1006 = vmatpush1.bf16.xpose.msra.mxu0 0
        %1007 = vmatprep.subr.bf16.mxu0 0
        %1008 = vmatpush1.bf16.xpose.msra.mxu0 0
        %1009 = vmatprep.subr.bf16.mxu0 0
        %1010 = vmatpush1.bf16.xpose.msra.mxu0 %v993
        %1011 = vmatprep.subr.bf16.mxu0 0
        %1012 = vmatpush2.bf16.xpose.msra.mxu0 0
        %1013 = vmatprep.subr.bf16.mxu0 0
        %1014 = vmatpush2.bf16.xpose.msra.mxu0 0
        %1015 = vmatprep.subr.bf16.mxu0 0
        %1016 = vmatpush2.bf16.xpose.msra.mxu0 0
        %1017 = vmatprep.subr.bf16.mxu0 0
        %1018 = vmatpush2.bf16.xpose.msra.mxu0 0
        %1019 = vmatprep.subr.bf16.mxu0 0
        %1020 = vmatpush2.bf16.xpose.msra.mxu0 0
        %1021 = vmatprep.subr.bf16.mxu0 0
        %1022 = vmatpush2.bf16.xpose.msra.mxu0 0
        %1023 = vmatprep.subr.bf16.mxu0 0
        %1024 = vmatpush2.bf16.xpose.msra.mxu0 0
        %1025 = vmatprep.subr.bf16.mxu0 0
        %1026 = vmatpush2.bf16.xpose.msra.mxu0 0
        %1027 = vmatprep.mubr.bf16.mxu0 0
        %1028 = vmatmul.mubr.bf16.gmra.mxu0 %v990
        %v1029 = vpop.f32.mrf.mxu0
        %v1030 = vadd.f32 0.0, %v1029
        %v1031 = vpop.f32.mrf.mxu0
        %v1032 = vpop.f32.mrf.mxu0
        %v1033 = vpop.f32.mrf.mxu0
        %1034 = vdwg.mxu0
        %1035 = vrot.lane.b32.xlu0 %v889, 96
        %v1036 = vpop.permute.xlu0 %1035
        %v1038 = vsel %vm892, %v889, 0
        %v1041 = vsel %vm892, %v1036, 0
        %1043 = vmatprep.subr.bf16.mxu0 0
        %1044 = vmatpush1.bf16.xpose.msra.mxu0 0
        %1045 = vmatprep.subr.bf16.mxu0 0
        %1046 = vmatpush1.bf16.xpose.msra.mxu0 0
        %1047 = vmatprep.subr.bf16.mxu0 0
        %1048 = vmatpush1.bf16.xpose.msra.mxu0 0
        %1049 = vmatprep.subr.bf16.mxu0 0
        %1050 = vmatpush1.bf16.xpose.msra.mxu0 0
        %1051 = vmatprep.subr.bf16.mxu0 0
        %1052 = vmatpush1.bf16.xpose.msra.mxu0 0
        %1053 = vmatprep.subr.bf16.mxu0 0
        %1054 = vmatpush1.bf16.xpose.msra.mxu0 0
        %1055 = vmatprep.subr.bf16.mxu0 0
        %1056 = vmatpush1.bf16.xpose.msra.mxu0 0
        %1057 = vmatprep.subr.bf16.mxu0 0
        %1058 = vmatpush1.bf16.xpose.msra.mxu0 %v1041
        %1059 = vmatprep.subr.bf16.mxu0 0
        %1060 = vmatpush2.bf16.xpose.msra.mxu0 0
        %1061 = vmatprep.subr.bf16.mxu0 0
        %1062 = vmatpush2.bf16.xpose.msra.mxu0 0
        %1063 = vmatprep.subr.bf16.mxu0 0
        %1064 = vmatpush2.bf16.xpose.msra.mxu0 0
        %1065 = vmatprep.subr.bf16.mxu0 0
        %1066 = vmatpush2.bf16.xpose.msra.mxu0 0
        %1067 = vmatprep.subr.bf16.mxu0 0
        %1068 = vmatpush2.bf16.xpose.msra.mxu0 0
        %1069 = vmatprep.subr.bf16.mxu0 0
        %1070 = vmatpush2.bf16.xpose.msra.mxu0 0
        %1071 = vmatprep.subr.bf16.mxu0 0
        %1072 = vmatpush2.bf16.xpose.msra.mxu0 0
        %1073 = vmatprep.subr.bf16.mxu0 0
        %1074 = vmatpush2.bf16.xpose.msra.mxu0 0
        %1075 = vmatprep.mubr.bf16.mxu0 0
        %1076 = vmatmul.mubr.bf16.gmra.mxu0 %v1038
        %v1077 = vpop.f32.mrf.mxu0
        %v1078 = vadd.f32 0.0, %v1077
        %v1079 = vpop.f32.mrf.mxu0
        %v1080 = vpop.f32.mrf.mxu0
        %v1081 = vpop.f32.mrf.mxu0
        %1082 = vdwg.mxu0
        %v1083 = vsel %vm892, %v934, -inf
        %1084 = vmax.xlane.f32.xlu0 %v1083
        %v1085 = vpop.xlane.xlu0 %1084
        %v1086 = vsel %vm892, %v982, -inf
        %1087 = vmax.xlane.f32.xlu0 %v1086
        %v1088 = vpop.xlane.xlu0 %1087
        %v1089 = vsel %vm892, %v1030, -inf
        %1090 = vmax.xlane.f32.xlu0 %v1089
        %v1091 = vpop.xlane.xlu0 %1090
        %v1092 = vsel %vm892, %v1078, -inf
        %1093 = vmax.xlane.f32.xlu0 %v1092
        %v1094 = vpop.xlane.xlu0 %1093
        %v1095 = vsub.f32 %v934, %v1085
        %v1096 = vsub.f32 %v982, %v1088
        %v1097 = vsub.f32 %v1030, %v1091
        %v1098 = vsub.f32 %v1078, %v1094
        %v1099 = vmul.f32 %v1095, 1.442695
        %v1100 = vpow.pop %v1099
        %v1101 = vmul.f32 %v1096, 1.442695
        %v1102 = vpow.pop %v1101
        %v1103 = vmul.f32 %v1097, 1.442695
        %v1104 = vpow.pop %v1103
        %v1105 = vmul.f32 %v1098, 1.442695
        %v1106 = vpow.pop %v1105
        %v1107 = vsel %vm892, %v1100, 0.0
        %1108 = vadd.xlane.f32.xlu0 %v1107
        %v1109 = vpop.xlane.xlu0 %1108
        %v1110 = vsel %vm892, %v1102, 0.0
        %1111 = vadd.xlane.f32.xlu0 %v1110
        %v1112 = vpop.xlane.xlu0 %1111
        %v1113 = vsel %vm892, %v1104, 0.0
        %1114 = vadd.xlane.f32.xlu0 %v1113
        %v1115 = vpop.xlane.xlu0 %1114
        %v1116 = vsel %vm892, %v1106, 0.0
        %1117 = vadd.xlane.f32.xlu0 %v1116
        %v1118 = vpop.xlane.xlu0 %1117
        %v1119 = vrcp.pop %v1109
        %v1120 = vrcp.pop %v1112
        %v1121 = vrcp.pop %v1115
        %v1122 = vrcp.pop %v1118
        %v1123 = vmul.f32 %v1100, %v1119
        %v1124 = vmul.f32 %v1102, %v1120
        %v1125 = vmul.f32 %v1104, %v1121
        %v1126 = vmul.f32 %v1106, %v1122
        %v1127 = vpack.c.bf16 %v1123, %v1123
        %v1128 = vpack.c.bf16 %v1124, %v1124
        %v1129 = vpack.c.bf16 %v1125, %v1125
        %v1130 = vpack.c.bf16 %v1126, %v1126
        %1131 = vrot.lane.b32.xlu0 %v882, 64
        %v1132 = vpop.permute.xlu0 %1131
        %v1134 = vsel %vm892, %v1127, 0
        %vm1136 = vcmask 1043456
        %v1138 = vsel %vm1136, %v1132, 0
        %1140 = vmatprep.subr.bf16.mxu0 0
        %1141 = vmatpush1.bf16.msra.mxu0 0
        %1142 = vmatprep.subr.bf16.mxu0 0
        %1143 = vmatpush1.bf16.msra.mxu0 0
        %1144 = vmatprep.subr.bf16.mxu0 0
        %1145 = vmatpush1.bf16.msra.mxu0 0
        %1146 = vmatprep.subr.bf16.mxu0 0
        %1147 = vmatpush1.bf16.msra.mxu0 0
        %1148 = vmatprep.subr.bf16.mxu0 0
        %1149 = vmatpush1.bf16.msra.mxu0 0
        %1150 = vmatprep.subr.bf16.mxu0 0
        %1151 = vmatpush1.bf16.msra.mxu0 0
        %1152 = vmatprep.subr.bf16.mxu0 0
        %1153 = vmatpush1.bf16.msra.mxu0 0
        %1154 = vmatprep.subr.bf16.mxu0 0
        %1155 = vmatpush1.bf16.msra.mxu0 %v1138
        %1156 = vmatprep.subr.bf16.mxu0 0
        %1157 = vmatpush2.bf16.msra.mxu0 0
        %1158 = vmatprep.subr.bf16.mxu0 0
        %1159 = vmatpush2.bf16.msra.mxu0 0
        %1160 = vmatprep.subr.bf16.mxu0 0
        %1161 = vmatpush2.bf16.msra.mxu0 0
        %1162 = vmatprep.subr.bf16.mxu0 0
        %1163 = vmatpush2.bf16.msra.mxu0 0
        %1164 = vmatprep.subr.bf16.mxu0 0
        %1165 = vmatpush2.bf16.msra.mxu0 0
        %1166 = vmatprep.subr.bf16.mxu0 0
        %1167 = vmatpush2.bf16.msra.mxu0 0
        %1168 = vmatprep.subr.bf16.mxu0 0
        %1169 = vmatpush2.bf16.msra.mxu0 0
        %1170 = vmatprep.subr.bf16.mxu0 0
        %1171 = vmatpush2.bf16.msra.mxu0 0
        %1172 = vmatprep.mubr.bf16.mxu0 0
        %1173 = vmatmul.mubr.bf16.gmra.mxu0 %v1134
        %v1174 = vpop.f32.mrf.mxu0
        %v1175 = vadd.f32 0.0, %v1174
        %v1176 = vpop.f32.mrf.mxu0
        %v1177 = vpop.f32.mrf.mxu0
        %v1178 = vpop.f32.mrf.mxu0
        %1179 = vdwg.mxu0
        %1180 = vrot.lane.b32.xlu0 %v885, 64
        %v1181 = vpop.permute.xlu0 %1180
        %v1183 = vsel %vm892, %v1128, 0
        %v1186 = vsel %vm1136, %v1181, 0
        %1188 = vmatprep.subr.bf16.mxu0 0
        %1189 = vmatpush1.bf16.msra.mxu0 0
        %1190 = vmatprep.subr.bf16.mxu0 0
        %1191 = vmatpush1.bf16.msra.mxu0 0
        %1192 = vmatprep.subr.bf16.mxu0 0
        %1193 = vmatpush1.bf16.msra.mxu0 0
        %1194 = vmatprep.subr.bf16.mxu0 0
        %1195 = vmatpush1.bf16.msra.mxu0 0
        %1196 = vmatprep.subr.bf16.mxu0 0
        %1197 = vmatpush1.bf16.msra.mxu0 0
        %1198 = vmatprep.subr.bf16.mxu0 0
        %1199 = vmatpush1.bf16.msra.mxu0 0
        %1200 = vmatprep.subr.bf16.mxu0 0
        %1201 = vmatpush1.bf16.msra.mxu0 0
        %1202 = vmatprep.subr.bf16.mxu0 0
        %1203 = vmatpush1.bf16.msra.mxu0 %v1186
        %1204 = vmatprep.subr.bf16.mxu0 0
        %1205 = vmatpush2.bf16.msra.mxu0 0
        %1206 = vmatprep.subr.bf16.mxu0 0
        %1207 = vmatpush2.bf16.msra.mxu0 0
        %1208 = vmatprep.subr.bf16.mxu0 0
        %1209 = vmatpush2.bf16.msra.mxu0 0
        %1210 = vmatprep.subr.bf16.mxu0 0
        %1211 = vmatpush2.bf16.msra.mxu0 0
        %1212 = vmatprep.subr.bf16.mxu0 0
        %1213 = vmatpush2.bf16.msra.mxu0 0
        %1214 = vmatprep.subr.bf16.mxu0 0
        %1215 = vmatpush2.bf16.msra.mxu0 0
        %1216 = vmatprep.subr.bf16.mxu0 0
        %1217 = vmatpush2.bf16.msra.mxu0 0
        %1218 = vmatprep.subr.bf16.mxu0 0
        %1219 = vmatpush2.bf16.msra.mxu0 0
        %1220 = vmatprep.mubr.bf16.mxu0 0
        %1221 = vmatmul.mubr.bf16.gmra.mxu0 %v1183
        %v1222 = vpop.f32.mrf.mxu0
        %v1223 = vadd.f32 0.0, %v1222
        %v1224 = vpop.f32.mrf.mxu0
        %v1225 = vpop.f32.mrf.mxu0
        %v1226 = vpop.f32.mrf.mxu0
        %1227 = vdwg.mxu0
        %1228 = vrot.lane.b32.xlu0 %v887, 64
        %v1229 = vpop.permute.xlu0 %1228
        %v1231 = vsel %vm892, %v1129, 0
        %v1234 = vsel %vm1136, %v1229, 0
        %1236 = vmatprep.subr.bf16.mxu0 0
        %1237 = vmatpush1.bf16.msra.mxu0 0
        %1238 = vmatprep.subr.bf16.mxu0 0
        %1239 = vmatpush1.bf16.msra.mxu0 0
        %1240 = vmatprep.subr.bf16.mxu0 0
        %1241 = vmatpush1.bf16.msra.mxu0 0
        %1242 = vmatprep.subr.bf16.mxu0 0
        %1243 = vmatpush1.bf16.msra.mxu0 0
        %1244 = vmatprep.subr.bf16.mxu0 0
        %1245 = vmatpush1.bf16.msra.mxu0 0
        %1246 = vmatprep.subr.bf16.mxu0 0
        %1247 = vmatpush1.bf16.msra.mxu0 0
        %1248 = vmatprep.subr.bf16.mxu0 0
        %1249 = vmatpush1.bf16.msra.mxu0 0
        %1250 = vmatprep.subr.bf16.mxu0 0
        %1251 = vmatpush1.bf16.msra.mxu0 %v1234
        %1252 = vmatprep.subr.bf16.mxu0 0
        %1253 = vmatpush2.bf16.msra.mxu0 0
        %1254 = vmatprep.subr.bf16.mxu0 0
        %1255 = vmatpush2.bf16.msra.mxu0 0
        %1256 = vmatprep.subr.bf16.mxu0 0
        %1257 = vmatpush2.bf16.msra.mxu0 0
        %1258 = vmatprep.subr.bf16.mxu0 0
        %1259 = vmatpush2.bf16.msra.mxu0 0
        %1260 = vmatprep.subr.bf16.mxu0 0
        %1261 = vmatpush2.bf16.msra.mxu0 0
        %1262 = vmatprep.subr.bf16.mxu0 0
        %1263 = vmatpush2.bf16.msra.mxu0 0
        %1264 = vmatprep.subr.bf16.mxu0 0
        %1265 = vmatpush2.bf16.msra.mxu0 0
        %1266 = vmatprep.subr.bf16.mxu0 0
        %1267 = vmatpush2.bf16.msra.mxu0 0
        %1268 = vmatprep.mubr.bf16.mxu0 0
        %1269 = vmatmul.mubr.bf16.gmra.mxu0 %v1231
        %v1270 = vpop.f32.mrf.mxu0
        %v1271 = vadd.f32 0.0, %v1270
        %v1272 = vpop.f32.mrf.mxu0
        %v1273 = vpop.f32.mrf.mxu0
        %v1274 = vpop.f32.mrf.mxu0
        %1275 = vdwg.mxu0
        %1276 = vrot.lane.b32.xlu0 %v889, 64
        %v1277 = vpop.permute.xlu0 %1276
        %v1279 = vsel %vm892, %v1130, 0
        %v1282 = vsel %vm1136, %v1277, 0
        %1284 = vmatprep.subr.bf16.mxu0 0
        %1285 = vmatpush1.bf16.msra.mxu0 0
        %1286 = vmatprep.subr.bf16.mxu0 0
        %1287 = vmatpush1.bf16.msra.mxu0 0
        %1288 = vmatprep.subr.bf16.mxu0 0
        %1289 = vmatpush1.bf16.msra.mxu0 0
        %1290 = vmatprep.subr.bf16.mxu0 0
        %1291 = vmatpush1.bf16.msra.mxu0 0
        %1292 = vmatprep.subr.bf16.mxu0 0
        %1293 = vmatpush1.bf16.msra.mxu0 0
        %1294 = vmatprep.subr.bf16.mxu0 0
        %1295 = vmatpush1.bf16.msra.mxu0 0
        %1296 = vmatprep.subr.bf16.mxu0 0
        %1297 = vmatpush1.bf16.msra.mxu0 0
        %1298 = vmatprep.subr.bf16.mxu0 0
        %1299 = vmatpush1.bf16.msra.mxu0 %v1282
        %1300 = vmatprep.subr.bf16.mxu0 0
        %1301 = vmatpush2.bf16.msra.mxu0 0
        %1302 = vmatprep.subr.bf16.mxu0 0
        %1303 = vmatpush2.bf16.msra.mxu0 0
        %1304 = vmatprep.subr.bf16.mxu0 0
        %1305 = vmatpush2.bf16.msra.mxu0 0
        %1306 = vmatprep.subr.bf16.mxu0 0
        %1307 = vmatpush2.bf16.msra.mxu0 0
        %1308 = vmatprep.subr.bf16.mxu0 0
        %1309 = vmatpush2.bf16.msra.mxu0 0
        %1310 = vmatprep.subr.bf16.mxu0 0
        %1311 = vmatpush2.bf16.msra.mxu0 0
        %1312 = vmatprep.subr.bf16.mxu0 0
        %1313 = vmatpush2.bf16.msra.mxu0 0
        %1314 = vmatprep.subr.bf16.mxu0 0
        %1315 = vmatpush2.bf16.msra.mxu0 0
        %1316 = vmatprep.mubr.bf16.mxu0 0
        %1317 = vmatmul.mubr.bf16.gmra.mxu0 %v1279
        %v1318 = vpop.f32.mrf.mxu0
        %v1319 = vadd.f32 0.0, %v1318
        %v1320 = vpop.f32.mrf.mxu0
        %v1321 = vpop.f32.mrf.mxu0
        %v1322 = vpop.f32.mrf.mxu0
        %1323 = vdwg.mxu0
        %v1324 = vpack.c.bf16 %v1175, %v1175
        %v1325 = vpack.c.bf16 %v1223, %v1223
        %v1326 = vpack.c.bf16 %v1271, %v1271
        %v1327 = vpack.c.bf16 %v1319, %v1319
        %v1328 = vld [vmem:[%s717] sm:$0xf]
        %v1329 = vld [vmem:[%s717 + $0x4] sm:$0xf]
        %v1330 = vld [vmem:[%s717 + $0x8] sm:$0xf]
        %v1331 = vld [vmem:[%s717 + $0xc] sm:$0xf]
        %v1333 = vsel %vm892, %v1324, 0
        %v1336 = vsel %vm1136, %v1328, 0
        %1338 = vmatprep.subr.bf16.mxu0 0
        %1339 = vmatpush1.bf16.msra.mxu0 0
        %1340 = vmatprep.subr.bf16.mxu0 0
        %1341 = vmatpush1.bf16.msra.mxu0 0
        %1342 = vmatprep.subr.bf16.mxu0 0
        %1343 = vmatpush1.bf16.msra.mxu0 0
        %1344 = vmatprep.subr.bf16.mxu0 0
        %1345 = vmatpush1.bf16.msra.mxu0 0
        %1346 = vmatprep.subr.bf16.mxu0 0
        %1347 = vmatpush1.bf16.msra.mxu0 0
        %1348 = vmatprep.subr.bf16.mxu0 0
        %1349 = vmatpush1.bf16.msra.mxu0 0
        %1350 = vmatprep.subr.bf16.mxu0 0
        %1351 = vmatpush1.bf16.msra.mxu0 0
        %1352 = vmatprep.subr.bf16.mxu0 0
        %1353 = vmatpush1.bf16.msra.mxu0 %v1336
        %1354 = vmatprep.subr.bf16.mxu0 0
        %1355 = vmatpush2.bf16.msra.mxu0 0
        %1356 = vmatprep.subr.bf16.mxu0 0
        %1357 = vmatpush2.bf16.msra.mxu0 0
        %1358 = vmatprep.subr.bf16.mxu0 0
        %1359 = vmatpush2.bf16.msra.mxu0 0
        %1360 = vmatprep.subr.bf16.mxu0 0
        %1361 = vmatpush2.bf16.msra.mxu0 0
        %1362 = vmatprep.subr.bf16.mxu0 0
        %1363 = vmatpush2.bf16.msra.mxu0 0
        %1364 = vmatprep.subr.bf16.mxu0 0
        %1365 = vmatpush2.bf16.msra.mxu0 0
        %1366 = vmatprep.subr.bf16.mxu0 0
        %1367 = vmatpush2.bf16.msra.mxu0 0
        %1368 = vmatprep.subr.bf16.mxu0 0
        %1369 = vmatpush2.bf16.msra.mxu0 0
        %1370 = vmatprep.mubr.bf16.mxu0 0
        %1371 = vmatmul.mubr.bf16.gmra.mxu0 %v1333
        %v1372 = vpop.f32.mrf.mxu0
        %v1373 = vadd.f32 0.0, %v1372
        %v1374 = vpop.f32.mrf.mxu0
        %v1375 = vpop.f32.mrf.mxu0
        %v1376 = vpop.f32.mrf.mxu0
        %1377 = vdwg.mxu0
        %v1379 = vsel %vm892, %v1325, 0
        %v1382 = vsel %vm1136, %v1329, 0
        %1384 = vmatprep.subr.bf16.mxu0 0
        %1385 = vmatpush1.bf16.msra.mxu0 0
        %1386 = vmatprep.subr.bf16.mxu0 0
        %1387 = vmatpush1.bf16.msra.mxu0 0
        %1388 = vmatprep.subr.bf16.mxu0 0
        %1389 = vmatpush1.bf16.msra.mxu0 0
        %1390 = vmatprep.subr.bf16.mxu0 0
        %1391 = vmatpush1.bf16.msra.mxu0 0
        %1392 = vmatprep.subr.bf16.mxu0 0
        %1393 = vmatpush1.bf16.msra.mxu0 0
        %1394 = vmatprep.subr.bf16.mxu0 0
        %1395 = vmatpush1.bf16.msra.mxu0 0
        %1396 = vmatprep.subr.bf16.mxu0 0
        %1397 = vmatpush1.bf16.msra.mxu0 0
        %1398 = vmatprep.subr.bf16.mxu0 0
        %1399 = vmatpush1.bf16.msra.mxu0 %v1382
        %1400 = vmatprep.subr.bf16.mxu0 0
        %1401 = vmatpush2.bf16.msra.mxu0 0
        %1402 = vmatprep.subr.bf16.mxu0 0
        %1403 = vmatpush2.bf16.msra.mxu0 0
        %1404 = vmatprep.subr.bf16.mxu0 0
        %1405 = vmatpush2.bf16.msra.mxu0 0
        %1406 = vmatprep.subr.bf16.mxu0 0
        %1407 = vmatpush2.bf16.msra.mxu0 0
        %1408 = vmatprep.subr.bf16.mxu0 0
        %1409 = vmatpush2.bf16.msra.mxu0 0
        %1410 = vmatprep.subr.bf16.mxu0 0
        %1411 = vmatpush2.bf16.msra.mxu0 0
        %1412 = vmatprep.subr.bf16.mxu0 0
        %1413 = vmatpush2.bf16.msra.mxu0 0
        %1414 = vmatprep.subr.bf16.mxu0 0
        %1415 = vmatpush2.bf16.msra.mxu0 0
        %1416 = vmatprep.mubr.bf16.mxu0 0
        %1417 = vmatmul.mubr.bf16.gmra.mxu0 %v1379
        %v1418 = vpop.f32.mrf.mxu0
        %v1419 = vadd.f32 0.0, %v1418
        %v1420 = vpop.f32.mrf.mxu0
        %v1421 = vpop.f32.mrf.mxu0
        %v1422 = vpop.f32.mrf.mxu0
        %1423 = vdwg.mxu0
        %v1425 = vsel %vm892, %v1326, 0
        %v1428 = vsel %vm1136, %v1330, 0
        %1430 = vmatprep.subr.bf16.mxu0 0
        %1431 = vmatpush1.bf16.msra.mxu0 0
        %1432 = vmatprep.subr.bf16.mxu0 0
        %1433 = vmatpush1.bf16.msra.mxu0 0
        %1434 = vmatprep.subr.bf16.mxu0 0
        %1435 = vmatpush1.bf16.msra.mxu0 0
        %1436 = vmatprep.subr.bf16.mxu0 0
        %1437 = vmatpush1.bf16.msra.mxu0 0
        %1438 = vmatprep.subr.bf16.mxu0 0
        %1439 = vmatpush1.bf16.msra.mxu0 0
        %1440 = vmatprep.subr.bf16.mxu0 0
        %1441 = vmatpush1.bf16.msra.mxu0 0
        %1442 = vmatprep.subr.bf16.mxu0 0
        %1443 = vmatpush1.bf16.msra.mxu0 0
        %1444 = vmatprep.subr.bf16.mxu0 0
        %1445 = vmatpush1.bf16.msra.mxu0 %v1428
        %1446 = vmatprep.subr.bf16.mxu0 0
        %1447 = vmatpush2.bf16.msra.mxu0 0
        %1448 = vmatprep.subr.bf16.mxu0 0
        %1449 = vmatpush2.bf16.msra.mxu0 0
        %1450 = vmatprep.subr.bf16.mxu0 0
        %1451 = vmatpush2.bf16.msra.mxu0 0
        %1452 = vmatprep.subr.bf16.mxu0 0
        %1453 = vmatpush2.bf16.msra.mxu0 0
        %1454 = vmatprep.subr.bf16.mxu0 0
        %1455 = vmatpush2.bf16.msra.mxu0 0
        %1456 = vmatprep.subr.bf16.mxu0 0
        %1457 = vmatpush2.bf16.msra.mxu0 0
        %1458 = vmatprep.subr.bf16.mxu0 0
        %1459 = vmatpush2.bf16.msra.mxu0 0
        %1460 = vmatprep.subr.bf16.mxu0 0
        %1461 = vmatpush2.bf16.msra.mxu0 0
        %1462 = vmatprep.mubr.bf16.mxu0 0
        %1463 = vmatmul.mubr.bf16.gmra.mxu0 %v1425
        %v1464 = vpop.f32.mrf.mxu0
        %v1465 = vadd.f32 0.0, %v1464
        %v1466 = vpop.f32.mrf.mxu0
        %v1467 = vpop.f32.mrf.mxu0
        %v1468 = vpop.f32.mrf.mxu0
        %1469 = vdwg.mxu0
        %v1471 = vsel %vm892, %v1327, 0
        %v1474 = vsel %vm1136, %v1331, 0
        %1476 = vmatprep.subr.bf16.mxu0 0
        %1477 = vmatpush1.bf16.msra.mxu0 0
        %1478 = vmatprep.subr.bf16.mxu0 0
        %1479 = vmatpush1.bf16.msra.mxu0 0
        %1480 = vmatprep.subr.bf16.mxu0 0
        %1481 = vmatpush1.bf16.msra.mxu0 0
        %1482 = vmatprep.subr.bf16.mxu0 0
        %1483 = vmatpush1.bf16.msra.mxu0 0
        %1484 = vmatprep.subr.bf16.mxu0 0
        %1485 = vmatpush1.bf16.msra.mxu0 0
        %1486 = vmatprep.subr.bf16.mxu0 0
        %1487 = vmatpush1.bf16.msra.mxu0 0
        %1488 = vmatprep.subr.bf16.mxu0 0
        %1489 = vmatpush1.bf16.msra.mxu0 0
        %1490 = vmatprep.subr.bf16.mxu0 0
        %1491 = vmatpush1.bf16.msra.mxu0 %v1474
        %1492 = vmatprep.subr.bf16.mxu0 0
        %1493 = vmatpush2.bf16.msra.mxu0 0
        %1494 = vmatprep.subr.bf16.mxu0 0
        %1495 = vmatpush2.bf16.msra.mxu0 0
        %1496 = vmatprep.subr.bf16.mxu0 0
        %1497 = vmatpush2.bf16.msra.mxu0 0
        %1498 = vmatprep.subr.bf16.mxu0 0
        %1499 = vmatpush2.bf16.msra.mxu0 0
        %1500 = vmatprep.subr.bf16.mxu0 0
        %1501 = vmatpush2.bf16.msra.mxu0 0
        %1502 = vmatprep.subr.bf16.mxu0 0
        %1503 = vmatpush2.bf16.msra.mxu0 0
        %1504 = vmatprep.subr.bf16.mxu0 0
        %1505 = vmatpush2.bf16.msra.mxu0 0
        %1506 = vmatprep.subr.bf16.mxu0 0
        %1507 = vmatpush2.bf16.msra.mxu0 0
        %1508 = vmatprep.mubr.bf16.mxu0 0
        %1509 = vmatmul.mubr.bf16.gmra.mxu0 %v1471
        %v1510 = vpop.f32.mrf.mxu0
        %v1511 = vadd.f32 0.0, %v1510
        %v1512 = vpop.f32.mrf.mxu0
        %v1513 = vpop.f32.mrf.mxu0
        %v1514 = vpop.f32.mrf.mxu0
        %1515 = vdwg.mxu0
        %v1516 = vadd.f32 %v1373, %v1419
        %v1517 = vadd.f32 %v1516, %v1465
        %v1518 = vadd.f32 %v1517, %v1511
        %v1519 = vld [vmem:[%s720] sm:$0x1]
        %v1521 = vlaneseq
        %v1522 = vshrl.u32 %v1521, 7
        %v1523 = vsub.s32 0, %v1522
        %v1524 = vrot.slane %v1519, %v1523
        %v1526 = vadd.f32 %v1518, %v1524
        %v1527 = vadd.f32 %v813, %v1526
        %v1528 = vld [vmem:[%s723] sm:$0x1]
        %v1529 = vld [vmem:[%s726] sm:$0x1]
        %v1530 = vsel %vm838, %v1527, 0.0
        %1531 = vadd.xlane.f32.xlu0 %v1530
        %v1532 = vpop.xlane.xlu0 %1531
        %v1533 = vrcp.pop 32.0
        %v1534 = vmul.f32 %v1532, %v1533
        %v1535 = vsub.f32 %v1527, %v1534
        %v1536 = vmul.f32 %v1535, %v1535
        %v1537 = vsel %vm838, %v1536, 0.0
        %1538 = vadd.xlane.f32.xlu0 %v1537
        %v1539 = vpop.xlane.xlu0 %1538
        %v1540 = vmul.f32 %v1539, %v1533
        %v1541 = vadd.f32 %v1540, 1e-05
        %v1542 = vrsqrt.pop %v1541
        %v1543 = vmul.f32 %v1535, %v1542
        %v1545 = vlaneseq
        %v1546 = vshrl.u32 %v1545, 7
        %v1547 = vsub.s32 0, %v1546
        %v1548 = vrot.slane %v1528, %v1547
        %v1550 = vmul.f32 %v1543, %v1548
        %v1552 = vlaneseq
        %v1553 = vshrl.u32 %v1552, 7
        %v1554 = vsub.s32 0, %v1553
        %v1555 = vrot.slane %v1529, %v1554
        %v1557 = vadd.f32 %v1550, %v1555
        %v1558 = vpack.c.bf16 %v1557, %v1557
        %v1559 = vld [vmem:[%s731] sm:$0xff]
        %v1560 = vld [vmem:[%s731 + $0x8] sm:$0xff]
        %v1561 = vld [vmem:[%s731 + $0x10] sm:$0xff]
        %v1562 = vld [vmem:[%s731 + $0x18] sm:$0xff]
        %v1563 = vld [vmem:[%s731 + $0x20] sm:$0xff]
        %v1564 = vld [vmem:[%s731 + $0x28] sm:$0xff]
        %v1565 = vld [vmem:[%s731 + $0x30] sm:$0xff]
        %v1566 = vld [vmem:[%s731 + $0x38] sm:$0xff]
        %v1567 = vld [vmem:[%s731 + $0x40] sm:$0xff]
        %v1568 = vld [vmem:[%s731 + $0x48] sm:$0xff]
        %v1569 = vld [vmem:[%s731 + $0x50] sm:$0xff]
        %v1570 = vld [vmem:[%s731 + $0x58] sm:$0xff]
        %v1571 = vld [vmem:[%s731 + $0x60] sm:$0xff]
        %v1572 = vld [vmem:[%s731 + $0x68] sm:$0xff]
        %v1573 = vld [vmem:[%s731 + $0x70] sm:$0xff]
        %v1574 = vld [vmem:[%s731 + $0x78] sm:$0xff]
        %v1575 = vld [vmem:[%s731 + $0x80] sm:$0xff]
        %v1576 = vld [vmem:[%s731 + $0x88] sm:$0xff]
        %v1577 = vld [vmem:[%s731 + $0x90] sm:$0xff]
        %v1578 = vld [vmem:[%s731 + $0x98] sm:$0xff]
        %v1579 = vld [vmem:[%s731 + $0xa0] sm:$0xff]
        %v1580 = vld [vmem:[%s731 + $0xa8] sm:$0xff]
        %v1581 = vld [vmem:[%s731 + $0xb0] sm:$0xff]
        %v1582 = vld [vmem:[%s731 + $0xb8] sm:$0xff]
        %v1583 = vld [vmem:[%s731 + $0xc0] sm:$0xff]
        %v1584 = vld [vmem:[%s731 + $0xc8] sm:$0xff]
        %v1585 = vld [vmem:[%s731 + $0xd0] sm:$0xff]
        %v1586 = vld [vmem:[%s731 + $0xd8] sm:$0xff]
        %v1587 = vld [vmem:[%s731 + $0xe0] sm:$0xff]
        %v1588 = vld [vmem:[%s731 + $0xe8] sm:$0xff]
        %v1589 = vld [vmem:[%s731 + $0xf0] sm:$0xff]
        %v1590 = vld [vmem:[%s731 + $0xf8] sm:$0xff]
        %v1591 = vld [vmem:[%s735] sm:$0xff]
        %v1592 = vld [vmem:[%s735 + $0x8] sm:$0xff]
        %v1595 = vlaneseq
        %v1596 = vshrl.u32 %v1595, 7
        %v1597 = vsub.s32 0, %v1596
        %v1598 = vrot.slane %v1591, %v1597
        %v1599 = vlaneseq
        %v1600 = vshrl.u32 %v1599, 7
        %v1601 = vsub.s32 1, %v1600
        %v1602 = vrot.slane %v1591, %v1601
        %v1603 = vlaneseq
        %v1604 = vshrl.u32 %v1603, 7
        %v1605 = vsub.s32 2, %v1604
        %v1606 = vrot.slane %v1591, %v1605
        %v1607 = vlaneseq
        %v1608 = vshrl.u32 %v1607, 7
        %v1609 = vsub.s32 3, %v1608
        %v1610 = vrot.slane %v1591, %v1609
        %v1611 = vlaneseq
        %v1612 = vshrl.u32 %v1611, 7
        %v1613 = vsub.s32 4, %v1612
        %v1614 = vrot.slane %v1591, %v1613
        %v1615 = vlaneseq
        %v1616 = vshrl.u32 %v1615, 7
        %v1617 = vsub.s32 5, %v1616
        %v1618 = vrot.slane %v1591, %v1617
        %v1619 = vlaneseq
        %v1620 = vshrl.u32 %v1619, 7
        %v1621 = vsub.s32 6, %v1620
        %v1622 = vrot.slane %v1591, %v1621
        %v1623 = vlaneseq
        %v1624 = vshrl.u32 %v1623, 7
        %v1625 = vsub.s32 7, %v1624
        %v1626 = vrot.slane %v1591, %v1625
        %v1627 = vlaneseq
        %v1628 = vshrl.u32 %v1627, 7
        %v1629 = vsub.s32 0, %v1628
        %v1630 = vrot.slane %v1592, %v1629
        %v1631 = vlaneseq
        %v1632 = vshrl.u32 %v1631, 7
        %v1633 = vsub.s32 1, %v1632
        %v1634 = vrot.slane %v1592, %v1633
        %v1635 = vlaneseq
        %v1636 = vshrl.u32 %v1635, 7
        %v1637 = vsub.s32 2, %v1636
        %v1638 = vrot.slane %v1592, %v1637
        %v1639 = vlaneseq
        %v1640 = vshrl.u32 %v1639, 7
        %v1641 = vsub.s32 3, %v1640
        %v1642 = vrot.slane %v1592, %v1641
        %v1643 = vlaneseq
        %v1644 = vshrl.u32 %v1643, 7
        %v1645 = vsub.s32 4, %v1644
        %v1646 = vrot.slane %v1592, %v1645
        %v1647 = vlaneseq
        %v1648 = vshrl.u32 %v1647, 7
        %v1649 = vsub.s32 5, %v1648
        %v1650 = vrot.slane %v1592, %v1649
        %v1651 = vlaneseq
        %v1652 = vshrl.u32 %v1651, 7
        %v1653 = vsub.s32 6, %v1652
        %v1654 = vrot.slane %v1592, %v1653
        %v1655 = vlaneseq
        %v1656 = vshrl.u32 %v1655, 7
        %v1657 = vsub.s32 7, %v1656
        %v1658 = vrot.slane %v1592, %v1657
        %v1707 = vunpack.c.l.b16 %v1559
        %v1708 = vunpack.c.h.b16 %v1559
        %v1709 = vunpack.c.l.b16 %v1560
        %v1710 = vunpack.c.h.b16 %v1560
        %v1711 = vunpack.c.l.b16 %v1561
        %v1712 = vunpack.c.h.b16 %v1561
        %v1713 = vunpack.c.l.b16 %v1562
        %v1714 = vunpack.c.h.b16 %v1562
        %v1715 = vunpack.c.l.b16 %v1563
        %v1716 = vunpack.c.h.b16 %v1563
        %v1717 = vunpack.c.l.b16 %v1564
        %v1718 = vunpack.c.h.b16 %v1564
        %v1719 = vunpack.c.l.b16 %v1565
        %v1720 = vunpack.c.h.b16 %v1565
        %v1721 = vunpack.c.l.b16 %v1566
        %v1722 = vunpack.c.h.b16 %v1566
        %v1723 = vunpack.c.l.b16 %v1567
        %v1724 = vunpack.c.h.b16 %v1567
        %v1725 = vunpack.c.l.b16 %v1568
        %v1726 = vunpack.c.h.b16 %v1568
        %v1727 = vunpack.c.l.b16 %v1569
        %v1728 = vunpack.c.h.b16 %v1569
        %v1729 = vunpack.c.l.b16 %v1570
        %v1730 = vunpack.c.h.b16 %v1570
        %v1731 = vunpack.c.l.b16 %v1571
        %v1732 = vunpack.c.h.b16 %v1571
        %v1733 = vunpack.c.l.b16 %v1572
        %v1734 = vunpack.c.h.b16 %v1572
        %v1735 = vunpack.c.l.b16 %v1573
        %v1736 = vunpack.c.h.b16 %v1573
        %v1737 = vunpack.c.l.b16 %v1574
        %v1738 = vunpack.c.h.b16 %v1574
        %v1739 = vunpack.c.l.b16 %v1575
        %v1740 = vunpack.c.h.b16 %v1575
        %v1741 = vunpack.c.l.b16 %v1576
        %v1742 = vunpack.c.h.b16 %v1576
        %v1743 = vunpack.c.l.b16 %v1577
        %v1744 = vunpack.c.h.b16 %v1577
        %v1745 = vunpack.c.l.b16 %v1578
        %v1746 = vunpack.c.h.b16 %v1578
        %v1747 = vunpack.c.l.b16 %v1579
        %v1748 = vunpack.c.h.b16 %v1579
        %v1749 = vunpack.c.l.b16 %v1580
        %v1750 = vunpack.c.h.b16 %v1580
        %v1751 = vunpack.c.l.b16 %v1581
        %v1752 = vunpack.c.h.b16 %v1581
        %v1753 = vunpack.c.l.b16 %v1582
        %v1754 = vunpack.c.h.b16 %v1582
        %v1755 = vunpack.c.l.b16 %v1583
        %v1756 = vunpack.c.h.b16 %v1583
        %v1757 = vunpack.c.l.b16 %v1584
        %v1758 = vunpack.c.h.b16 %v1584
        %v1759 = vunpack.c.l.b16 %v1585
        %v1760 = vunpack.c.h.b16 %v1585
        %v1761 = vunpack.c.l.b16 %v1586
        %v1762 = vunpack.c.h.b16 %v1586
        %v1763 = vunpack.c.l.b16 %v1587
        %v1764 = vunpack.c.h.b16 %v1587
        %v1765 = vunpack.c.l.b16 %v1588
        %v1766 = vunpack.c.h.b16 %v1588
        %v1767 = vunpack.c.l.b16 %v1589
        %v1768 = vunpack.c.h.b16 %v1589
        %v1769 = vunpack.c.l.b16 %v1590
        %v1770 = vunpack.c.h.b16 %v1590
        %v1771 = vpack.c.b16 %v1723, %v1707
        %v1772 = vpack.c.b16 %v1724, %v1708
        %v1773 = vpack.c.b16 %v1725, %v1709
        %v1774 = vpack.c.b16 %v1726, %v1710
        %v1775 = vpack.c.b16 %v1727, %v1711
        %v1776 = vpack.c.b16 %v1728, %v1712
        %v1777 = vpack.c.b16 %v1729, %v1713
        %v1778 = vpack.c.b16 %v1730, %v1714
        %v1779 = vpack.c.b16 %v1731, %v1715
        %v1780 = vpack.c.b16 %v1732, %v1716
        %v1781 = vpack.c.b16 %v1733, %v1717
        %v1782 = vpack.c.b16 %v1734, %v1718
        %v1783 = vpack.c.b16 %v1735, %v1719
        %v1784 = vpack.c.b16 %v1736, %v1720
        %v1785 = vpack.c.b16 %v1737, %v1721
        %v1786 = vpack.c.b16 %v1738, %v1722
        %v1787 = vpack.c.b16 %v1755, %v1739
        %v1788 = vpack.c.b16 %v1756, %v1740
        %v1789 = vpack.c.b16 %v1757, %v1741
        %v1790 = vpack.c.b16 %v1758, %v1742
        %v1791 = vpack.c.b16 %v1759, %v1743
        %v1792 = vpack.c.b16 %v1760, %v1744
        %v1793 = vpack.c.b16 %v1761, %v1745
        %v1794 = vpack.c.b16 %v1762, %v1746
        %v1795 = vpack.c.b16 %v1763, %v1747
        %v1796 = vpack.c.b16 %v1764, %v1748
        %v1797 = vpack.c.b16 %v1765, %v1749
        %v1798 = vpack.c.b16 %v1766, %v1750
        %v1799 = vpack.c.b16 %v1767, %v1751
        %v1800 = vpack.c.b16 %v1768, %v1752
        %v1801 = vpack.c.b16 %v1769, %v1753
        %v1802 = vpack.c.b16 %v1770, %v1754
        %v1836 = vsel %vm838, %v1558, 0
        %1838 = vmatprep.subr.bf16.mxu0 0
        %1839 = vmatpush1.bf16.msra.mxu0 0
        %1840 = vmatprep.subr.bf16.mxu0 0
        %1841 = vmatpush1.bf16.msra.mxu0 0
        %1842 = vmatprep.subr.bf16.mxu0 0
        %1843 = vmatpush1.bf16.msra.mxu0 0
        %1844 = vmatprep.subr.bf16.mxu0 0
        %1845 = vmatpush1.bf16.msra.mxu0 0
        %1846 = vmatprep.subr.bf16.mxu0 0
        %1847 = vmatpush1.bf16.msra.mxu0 0
        %1848 = vmatprep.subr.bf16.mxu0 0
        %1849 = vmatpush1.bf16.msra.mxu0 0
        %1850 = vmatprep.subr.bf16.mxu0 %v1788
        %1851 = vmatpush1.bf16.msra.mxu0 %v1787
        %1852 = vmatprep.subr.bf16.mxu0 %v1772
        %1853 = vmatpush1.bf16.msra.mxu0 %v1771
        %1854 = vmatprep.subr.bf16.mxu0 0
        %1855 = vmatpush2.bf16.msra.mxu0 0
        %1856 = vmatprep.subr.bf16.mxu0 0
        %1857 = vmatpush2.bf16.msra.mxu0 0
        %1858 = vmatprep.subr.bf16.mxu0 0
        %1859 = vmatpush2.bf16.msra.mxu0 0
        %1860 = vmatprep.subr.bf16.mxu0 0
        %1861 = vmatpush2.bf16.msra.mxu0 0
        %1862 = vmatprep.subr.bf16.mxu0 0
        %1863 = vmatpush2.bf16.msra.mxu0 0
        %1864 = vmatprep.subr.bf16.mxu0 0
        %1865 = vmatpush2.bf16.msra.mxu0 0
        %1866 = vmatprep.subr.bf16.mxu0 0
        %1867 = vmatpush2.bf16.msra.mxu0 0
        %1868 = vmatprep.subr.bf16.mxu0 0
        %1869 = vmatpush2.bf16.msra.mxu0 0
        %1870 = vmatprep.mubr.bf16.mxu0 0
        %1871 = vmatmul.mubr.bf16.gmra.mxu0 %v1836
        %v1872 = vpop.f32.mrf.mxu0
        %v1873 = vadd.f32 %v1598, %v1872
        %v1874 = vpop.f32.mrf.mxu0
        %v1875 = vadd.f32 %v1602, %v1874
        %v1876 = vpop.f32.mrf.mxu0
        %v1877 = vpop.f32.mrf.mxu0
        %1878 = vdwg.mxu0
        %1879 = vmatprep.subr.bf16.mxu0 0
        %1880 = vmatpush1.bf16.msra.mxu0 0
        %1881 = vmatprep.subr.bf16.mxu0 0
        %1882 = vmatpush1.bf16.msra.mxu0 0
        %1883 = vmatprep.subr.bf16.mxu0 0
        %1884 = vmatpush1.bf16.msra.mxu0 0
        %1885 = vmatprep.subr.bf16.mxu0 0
        %1886 = vmatpush1.bf16.msra.mxu0 0
        %1887 = vmatprep.subr.bf16.mxu0 0
        %1888 = vmatpush1.bf16.msra.mxu0 0
        %1889 = vmatprep.subr.bf16.mxu0 0
        %1890 = vmatpush1.bf16.msra.mxu0 0
        %1891 = vmatprep.subr.bf16.mxu0 %v1790
        %1892 = vmatpush1.bf16.msra.mxu0 %v1789
        %1893 = vmatprep.subr.bf16.mxu0 %v1774
        %1894 = vmatpush1.bf16.msra.mxu0 %v1773
        %1895 = vmatprep.subr.bf16.mxu0 0
        %1896 = vmatpush2.bf16.msra.mxu0 0
        %1897 = vmatprep.subr.bf16.mxu0 0
        %1898 = vmatpush2.bf16.msra.mxu0 0
        %1899 = vmatprep.subr.bf16.mxu0 0
        %1900 = vmatpush2.bf16.msra.mxu0 0
        %1901 = vmatprep.subr.bf16.mxu0 0
        %1902 = vmatpush2.bf16.msra.mxu0 0
        %1903 = vmatprep.subr.bf16.mxu0 0
        %1904 = vmatpush2.bf16.msra.mxu0 0
        %1905 = vmatprep.subr.bf16.mxu0 0
        %1906 = vmatpush2.bf16.msra.mxu0 0
        %1907 = vmatprep.subr.bf16.mxu0 0
        %1908 = vmatpush2.bf16.msra.mxu0 0
        %1909 = vmatprep.subr.bf16.mxu0 0
        %1910 = vmatpush2.bf16.msra.mxu0 0
        %1911 = vmatprep.mubr.bf16.mxu0 0
        %1912 = vmatmul.mubr.bf16.gmra.mxu0 %v1836
        %v1913 = vpop.f32.mrf.mxu0
        %v1914 = vadd.f32 %v1606, %v1913
        %v1915 = vpop.f32.mrf.mxu0
        %v1916 = vadd.f32 %v1610, %v1915
        %v1917 = vpop.f32.mrf.mxu0
        %v1918 = vpop.f32.mrf.mxu0
        %1919 = vdwg.mxu0
        %1920 = vmatprep.subr.bf16.mxu0 0
        %1921 = vmatpush1.bf16.msra.mxu0 0
        %1922 = vmatprep.subr.bf16.mxu0 0
        %1923 = vmatpush1.bf16.msra.mxu0 0
        %1924 = vmatprep.subr.bf16.mxu0 0
        %1925 = vmatpush1.bf16.msra.mxu0 0
        %1926 = vmatprep.subr.bf16.mxu0 0
        %1927 = vmatpush1.bf16.msra.mxu0 0
        %1928 = vmatprep.subr.bf16.mxu0 0
        %1929 = vmatpush1.bf16.msra.mxu0 0
        %1930 = vmatprep.subr.bf16.mxu0 0
        %1931 = vmatpush1.bf16.msra.mxu0 0
        %1932 = vmatprep.subr.bf16.mxu0 %v1792
        %1933 = vmatpush1.bf16.msra.mxu0 %v1791
        %1934 = vmatprep.subr.bf16.mxu0 %v1776
        %1935 = vmatpush1.bf16.msra.mxu0 %v1775
        %1936 = vmatprep.subr.bf16.mxu0 0
        %1937 = vmatpush2.bf16.msra.mxu0 0
        %1938 = vmatprep.subr.bf16.mxu0 0
        %1939 = vmatpush2.bf16.msra.mxu0 0
        %1940 = vmatprep.subr.bf16.mxu0 0
        %1941 = vmatpush2.bf16.msra.mxu0 0
        %1942 = vmatprep.subr.bf16.mxu0 0
        %1943 = vmatpush2.bf16.msra.mxu0 0
        %1944 = vmatprep.subr.bf16.mxu0 0
        %1945 = vmatpush2.bf16.msra.mxu0 0
        %1946 = vmatprep.subr.bf16.mxu0 0
        %1947 = vmatpush2.bf16.msra.mxu0 0
        %1948 = vmatprep.subr.bf16.mxu0 0
        %1949 = vmatpush2.bf16.msra.mxu0 0
        %1950 = vmatprep.subr.bf16.mxu0 0
        %1951 = vmatpush2.bf16.msra.mxu0 0
        %1952 = vmatprep.mubr.bf16.mxu0 0
        %1953 = vmatmul.mubr.bf16.gmra.mxu0 %v1836
        %v1954 = vpop.f32.mrf.mxu0
        %v1955 = vadd.f32 %v1614, %v1954
        %v1956 = vpop.f32.mrf.mxu0
        %v1957 = vadd.f32 %v1618, %v1956
        %v1958 = vpop.f32.mrf.mxu0
        %v1959 = vpop.f32.mrf.mxu0
        %1960 = vdwg.mxu0
        %1961 = vmatprep.subr.bf16.mxu0 0
        %1962 = vmatpush1.bf16.msra.mxu0 0
        %1963 = vmatprep.subr.bf16.mxu0 0
        %1964 = vmatpush1.bf16.msra.mxu0 0
        %1965 = vmatprep.subr.bf16.mxu0 0
        %1966 = vmatpush1.bf16.msra.mxu0 0
        %1967 = vmatprep.subr.bf16.mxu0 0
        %1968 = vmatpush1.bf16.msra.mxu0 0
        %1969 = vmatprep.subr.bf16.mxu0 0
        %1970 = vmatpush1.bf16.msra.mxu0 0
        %1971 = vmatprep.subr.bf16.mxu0 0
        %1972 = vmatpush1.bf16.msra.mxu0 0
        %1973 = vmatprep.subr.bf16.mxu0 %v1794
        %1974 = vmatpush1.bf16.msra.mxu0 %v1793
        %1975 = vmatprep.subr.bf16.mxu0 %v1778
        %1976 = vmatpush1.bf16.msra.mxu0 %v1777
        %1977 = vmatprep.subr.bf16.mxu0 0
        %1978 = vmatpush2.bf16.msra.mxu0 0
        %1979 = vmatprep.subr.bf16.mxu0 0
        %1980 = vmatpush2.bf16.msra.mxu0 0
        %1981 = vmatprep.subr.bf16.mxu0 0
        %1982 = vmatpush2.bf16.msra.mxu0 0
        %1983 = vmatprep.subr.bf16.mxu0 0
        %1984 = vmatpush2.bf16.msra.mxu0 0
        %1985 = vmatprep.subr.bf16.mxu0 0
        %1986 = vmatpush2.bf16.msra.mxu0 0
        %1987 = vmatprep.subr.bf16.mxu0 0
        %1988 = vmatpush2.bf16.msra.mxu0 0
        %1989 = vmatprep.subr.bf16.mxu0 0
        %1990 = vmatpush2.bf16.msra.mxu0 0
        %1991 = vmatprep.subr.bf16.mxu0 0
        %1992 = vmatpush2.bf16.msra.mxu0 0
        %1993 = vmatprep.mubr.bf16.mxu0 0
        %1994 = vmatmul.mubr.bf16.gmra.mxu0 %v1836
        %v1995 = vpop.f32.mrf.mxu0
        %v1996 = vadd.f32 %v1622, %v1995
        %v1997 = vpop.f32.mrf.mxu0
        %v1998 = vadd.f32 %v1626, %v1997
        %v1999 = vpop.f32.mrf.mxu0
        %v2000 = vpop.f32.mrf.mxu0
        %2001 = vdwg.mxu0
        %2002 = vmatprep.subr.bf16.mxu0 0
        %2003 = vmatpush1.bf16.msra.mxu0 0
        %2004 = vmatprep.subr.bf16.mxu0 0
        %2005 = vmatpush1.bf16.msra.mxu0 0
        %2006 = vmatprep.subr.bf16.mxu0 0
        %2007 = vmatpush1.bf16.msra.mxu0 0
        %2008 = vmatprep.subr.bf16.mxu0 0
        %2009 = vmatpush1.bf16.msra.mxu0 0
        %2010 = vmatprep.subr.bf16.mxu0 0
        %2011 = vmatpush1.bf16.msra.mxu0 0
        %2012 = vmatprep.subr.bf16.mxu0 0
        %2013 = vmatpush1.bf16.msra.mxu0 0
        %2014 = vmatprep.subr.bf16.mxu0 %v1796
        %2015 = vmatpush1.bf16.msra.mxu0 %v1795
        %2016 = vmatprep.subr.bf16.mxu0 %v1780
        %2017 = vmatpush1.bf16.msra.mxu0 %v1779
        %2018 = vmatprep.subr.bf16.mxu0 0
        %2019 = vmatpush2.bf16.msra.mxu0 0
        %2020 = vmatprep.subr.bf16.mxu0 0
        %2021 = vmatpush2.bf16.msra.mxu0 0
        %2022 = vmatprep.subr.bf16.mxu0 0
        %2023 = vmatpush2.bf16.msra.mxu0 0
        %2024 = vmatprep.subr.bf16.mxu0 0
        %2025 = vmatpush2.bf16.msra.mxu0 0
        %2026 = vmatprep.subr.bf16.mxu0 0
        %2027 = vmatpush2.bf16.msra.mxu0 0
        %2028 = vmatprep.subr.bf16.mxu0 0
        %2029 = vmatpush2.bf16.msra.mxu0 0
        %2030 = vmatprep.subr.bf16.mxu0 0
        %2031 = vmatpush2.bf16.msra.mxu0 0
        %2032 = vmatprep.subr.bf16.mxu0 0
        %2033 = vmatpush2.bf16.msra.mxu0 0
        %2034 = vmatprep.mubr.bf16.mxu0 0
        %2035 = vmatmul.mubr.bf16.gmra.mxu0 %v1836
        %v2036 = vpop.f32.mrf.mxu0
        %v2037 = vadd.f32 %v1630, %v2036
        %v2038 = vpop.f32.mrf.mxu0
        %v2039 = vadd.f32 %v1634, %v2038
        %v2040 = vpop.f32.mrf.mxu0
        %v2041 = vpop.f32.mrf.mxu0
        %2042 = vdwg.mxu0
        %2043 = vmatprep.subr.bf16.mxu0 0
        %2044 = vmatpush1.bf16.msra.mxu0 0
        %2045 = vmatprep.subr.bf16.mxu0 0
        %2046 = vmatpush1.bf16.msra.mxu0 0
        %2047 = vmatprep.subr.bf16.mxu0 0
        %2048 = vmatpush1.bf16.msra.mxu0 0
        %2049 = vmatprep.subr.bf16.mxu0 0
        %2050 = vmatpush1.bf16.msra.mxu0 0
        %2051 = vmatprep.subr.bf16.mxu0 0
        %2052 = vmatpush1.bf16.msra.mxu0 0
        %2053 = vmatprep.subr.bf16.mxu0 0
        %2054 = vmatpush1.bf16.msra.mxu0 0
        %2055 = vmatprep.subr.bf16.mxu0 %v1798
        %2056 = vmatpush1.bf16.msra.mxu0 %v1797
        %2057 = vmatprep.subr.bf16.mxu0 %v1782
        %2058 = vmatpush1.bf16.msra.mxu0 %v1781
        %2059 = vmatprep.subr.bf16.mxu0 0
        %2060 = vmatpush2.bf16.msra.mxu0 0
        %2061 = vmatprep.subr.bf16.mxu0 0
        %2062 = vmatpush2.bf16.msra.mxu0 0
        %2063 = vmatprep.subr.bf16.mxu0 0
        %2064 = vmatpush2.bf16.msra.mxu0 0
        %2065 = vmatprep.subr.bf16.mxu0 0
        %2066 = vmatpush2.bf16.msra.mxu0 0
        %2067 = vmatprep.subr.bf16.mxu0 0
        %2068 = vmatpush2.bf16.msra.mxu0 0
        %2069 = vmatprep.subr.bf16.mxu0 0
        %2070 = vmatpush2.bf16.msra.mxu0 0
        %2071 = vmatprep.subr.bf16.mxu0 0
        %2072 = vmatpush2.bf16.msra.mxu0 0
        %2073 = vmatprep.subr.bf16.mxu0 0
        %2074 = vmatpush2.bf16.msra.mxu0 0
        %2075 = vmatprep.mubr.bf16.mxu0 0
        %2076 = vmatmul.mubr.bf16.gmra.mxu0 %v1836
        %v2077 = vpop.f32.mrf.mxu0
        %v2078 = vadd.f32 %v1638, %v2077
        %v2079 = vpop.f32.mrf.mxu0
        %v2080 = vadd.f32 %v1642, %v2079
        %v2081 = vpop.f32.mrf.mxu0
        %v2082 = vpop.f32.mrf.mxu0
        %2083 = vdwg.mxu0
        %2084 = vmatprep.subr.bf16.mxu0 0
        %2085 = vmatpush1.bf16.msra.mxu0 0
        %2086 = vmatprep.subr.bf16.mxu0 0
        %2087 = vmatpush1.bf16.msra.mxu0 0
        %2088 = vmatprep.subr.bf16.mxu0 0
        %2089 = vmatpush1.bf16.msra.mxu0 0
        %2090 = vmatprep.subr.bf16.mxu0 0
        %2091 = vmatpush1.bf16.msra.mxu0 0
        %2092 = vmatprep.subr.bf16.mxu0 0
        %2093 = vmatpush1.bf16.msra.mxu0 0
        %2094 = vmatprep.subr.bf16.mxu0 0
        %2095 = vmatpush1.bf16.msra.mxu0 0
        %2096 = vmatprep.subr.bf16.mxu0 %v1800
        %2097 = vmatpush1.bf16.msra.mxu0 %v1799
        %2098 = vmatprep.subr.bf16.mxu0 %v1784
        %2099 = vmatpush1.bf16.msra.mxu0 %v1783
        %2100 = vmatprep.subr.bf16.mxu0 0
        %2101 = vmatpush2.bf16.msra.mxu0 0
        %2102 = vmatprep.subr.bf16.mxu0 0
        %2103 = vmatpush2.bf16.msra.mxu0 0
        %2104 = vmatprep.subr.bf16.mxu0 0
        %2105 = vmatpush2.bf16.msra.mxu0 0
        %2106 = vmatprep.subr.bf16.mxu0 0
        %2107 = vmatpush2.bf16.msra.mxu0 0
        %2108 = vmatprep.subr.bf16.mxu0 0
        %2109 = vmatpush2.bf16.msra.mxu0 0
        %2110 = vmatprep.subr.bf16.mxu0 0
        %2111 = vmatpush2.bf16.msra.mxu0 0
        %2112 = vmatprep.subr.bf16.mxu0 0
        %2113 = vmatpush2.bf16.msra.mxu0 0
        %2114 = vmatprep.subr.bf16.mxu0 0
        %2115 = vmatpush2.bf16.msra.mxu0 0
        %2116 = vmatprep.mubr.bf16.mxu0 0
        %2117 = vmatmul.mubr.bf16.gmra.mxu0 %v1836
        %v2118 = vpop.f32.mrf.mxu0
        %v2119 = vadd.f32 %v1646, %v2118
        %v2120 = vpop.f32.mrf.mxu0
        %v2121 = vadd.f32 %v1650, %v2120
        %v2122 = vpop.f32.mrf.mxu0
        %v2123 = vpop.f32.mrf.mxu0
        %2124 = vdwg.mxu0
        %2125 = vmatprep.subr.bf16.mxu0 0
        %2126 = vmatpush1.bf16.msra.mxu0 0
        %2127 = vmatprep.subr.bf16.mxu0 0
        %2128 = vmatpush1.bf16.msra.mxu0 0
        %2129 = vmatprep.subr.bf16.mxu0 0
        %2130 = vmatpush1.bf16.msra.mxu0 0
        %2131 = vmatprep.subr.bf16.mxu0 0
        %2132 = vmatpush1.bf16.msra.mxu0 0
        %2133 = vmatprep.subr.bf16.mxu0 0
        %2134 = vmatpush1.bf16.msra.mxu0 0
        %2135 = vmatprep.subr.bf16.mxu0 0
        %2136 = vmatpush1.bf16.msra.mxu0 0
        %2137 = vmatprep.subr.bf16.mxu0 %v1802
        %2138 = vmatpush1.bf16.msra.mxu0 %v1801
        %2139 = vmatprep.subr.bf16.mxu0 %v1786
        %2140 = vmatpush1.bf16.msra.mxu0 %v1785
        %2141 = vmatprep.subr.bf16.mxu0 0
        %2142 = vmatpush2.bf16.msra.mxu0 0
        %2143 = vmatprep.subr.bf16.mxu0 0
        %2144 = vmatpush2.bf16.msra.mxu0 0
        %2145 = vmatprep.subr.bf16.mxu0 0
        %2146 = vmatpush2.bf16.msra.mxu0 0
        %2147 = vmatprep.subr.bf16.mxu0 0
        %2148 = vmatpush2.bf16.msra.mxu0 0
        %2149 = vmatprep.subr.bf16.mxu0 0
        %2150 = vmatpush2.bf16.msra.mxu0 0
        %2151 = vmatprep.subr.bf16.mxu0 0
        %2152 = vmatpush2.bf16.msra.mxu0 0
        %2153 = vmatprep.subr.bf16.mxu0 0
        %2154 = vmatpush2.bf16.msra.mxu0 0
        %2155 = vmatprep.subr.bf16.mxu0 0
        %2156 = vmatpush2.bf16.msra.mxu0 0
        %2157 = vmatprep.mubr.bf16.mxu0 0
        %2158 = vmatmul.mubr.bf16.gmra.mxu0 %v1836
        %v2159 = vpop.f32.mrf.mxu0
        %v2160 = vadd.f32 %v1654, %v2159
        %v2161 = vpop.f32.mrf.mxu0
        %v2162 = vadd.f32 %v1658, %v2161
        %v2163 = vpop.f32.mrf.mxu0
        %v2164 = vpop.f32.mrf.mxu0
        %2165 = vdwg.mxu0
        %v2166 = vmax.f32 %v1873, 0.0
        %v2167 = vmax.f32 %v1875, 0.0
        %v2168 = vmax.f32 %v1914, 0.0
        %v2169 = vmax.f32 %v1916, 0.0
        %v2170 = vmax.f32 %v1955, 0.0
        %v2171 = vmax.f32 %v1957, 0.0
        %v2172 = vmax.f32 %v1996, 0.0
        %v2173 = vmax.f32 %v1998, 0.0
        %v2174 = vmax.f32 %v2037, 0.0
        %v2175 = vmax.f32 %v2039, 0.0
        %v2176 = vmax.f32 %v2078, 0.0
        %v2177 = vmax.f32 %v2080, 0.0
        %v2178 = vmax.f32 %v2119, 0.0
        %v2179 = vmax.f32 %v2121, 0.0
        %v2180 = vmax.f32 %v2160, 0.0
        %v2181 = vmax.f32 %v2162, 0.0
        %v2182 = vpack.c.bf16 %v2166, %v2166
        %v2183 = vpack.c.bf16 %v2167, %v2167
        %v2184 = vpack.c.bf16 %v2168, %v2168
        %v2185 = vpack.c.bf16 %v2169, %v2169
        %v2186 = vpack.c.bf16 %v2170, %v2170
        %v2187 = vpack.c.bf16 %v2171, %v2171
        %v2188 = vpack.c.bf16 %v2172, %v2172
        %v2189 = vpack.c.bf16 %v2173, %v2173
        %v2190 = vpack.c.bf16 %v2174, %v2174
        %v2191 = vpack.c.bf16 %v2175, %v2175
        %v2192 = vpack.c.bf16 %v2176, %v2176
        %v2193 = vpack.c.bf16 %v2177, %v2177
        %v2194 = vpack.c.bf16 %v2178, %v2178
        %v2195 = vpack.c.bf16 %v2179, %v2179
        %v2196 = vpack.c.bf16 %v2180, %v2180
        %v2197 = vpack.c.bf16 %v2181, %v2181
        %v2198 = vld [vmem:[%s740] sm:$0xf]
        %v2199 = vld [vmem:[%s740 + $0x4] sm:$0xf]
        %v2200 = vld [vmem:[%s740 + $0x8] sm:$0xf]
        %v2201 = vld [vmem:[%s740 + $0xc] sm:$0xf]
        %v2202 = vld [vmem:[%s740 + $0x10] sm:$0xf]
        %v2203 = vld [vmem:[%s740 + $0x14] sm:$0xf]
        %v2204 = vld [vmem:[%s740 + $0x18] sm:$0xf]
        %v2205 = vld [vmem:[%s740 + $0x1c] sm:$0xf]
        %v2206 = vld [vmem:[%s740 + $0x20] sm:$0xf]
        %v2207 = vld [vmem:[%s740 + $0x24] sm:$0xf]
        %v2208 = vld [vmem:[%s740 + $0x28] sm:$0xf]
        %v2209 = vld [vmem:[%s740 + $0x2c] sm:$0xf]
        %v2210 = vld [vmem:[%s740 + $0x30] sm:$0xf]
        %v2211 = vld [vmem:[%s740 + $0x34] sm:$0xf]
        %v2212 = vld [vmem:[%s740 + $0x38] sm:$0xf]
        %v2213 = vld [vmem:[%s740 + $0x3c] sm:$0xf]
        %v2214 = vld [vmem:[%s740 + $0x40] sm:$0xf]
        %v2215 = vld [vmem:[%s740 + $0x44] sm:$0xf]
        %v2216 = vld [vmem:[%s740 + $0x48] sm:$0xf]
        %v2217 = vld [vmem:[%s740 + $0x4c] sm:$0xf]
        %v2218 = vld [vmem:[%s740 + $0x50] sm:$0xf]
        %v2219 = vld [vmem:[%s740 + $0x54] sm:$0xf]
        %v2220 = vld [vmem:[%s740 + $0x58] sm:$0xf]
        %v2221 = vld [vmem:[%s740 + $0x5c] sm:$0xf]
        %v2222 = vld [vmem:[%s740 + $0x60] sm:$0xf]
        %v2223 = vld [vmem:[%s740 + $0x64] sm:$0xf]
        %v2224 = vld [vmem:[%s740 + $0x68] sm:$0xf]
        %v2225 = vld [vmem:[%s740 + $0x6c] sm:$0xf]
        %v2226 = vld [vmem:[%s740 + $0x70] sm:$0xf]
        %v2227 = vld [vmem:[%s740 + $0x74] sm:$0xf]
        %v2228 = vld [vmem:[%s740 + $0x78] sm:$0xf]
        %v2229 = vld [vmem:[%s740 + $0x7c] sm:$0xf]
        %v2230 = vld [vmem:[%s740 + $0x80] sm:$0xf]
        %v2231 = vld [vmem:[%s740 + $0x84] sm:$0xf]
        %v2232 = vld [vmem:[%s740 + $0x88] sm:$0xf]
        %v2233 = vld [vmem:[%s740 + $0x8c] sm:$0xf]
        %v2234 = vld [vmem:[%s740 + $0x90] sm:$0xf]
        %v2235 = vld [vmem:[%s740 + $0x94] sm:$0xf]
        %v2236 = vld [vmem:[%s740 + $0x98] sm:$0xf]
        %v2237 = vld [vmem:[%s740 + $0x9c] sm:$0xf]
        %v2238 = vld [vmem:[%s740 + $0xa0] sm:$0xf]
        %v2239 = vld [vmem:[%s740 + $0xa4] sm:$0xf]
        %v2240 = vld [vmem:[%s740 + $0xa8] sm:$0xf]
        %v2241 = vld [vmem:[%s740 + $0xac] sm:$0xf]
        %v2242 = vld [vmem:[%s740 + $0xb0] sm:$0xf]
        %v2243 = vld [vmem:[%s740 + $0xb4] sm:$0xf]
        %v2244 = vld [vmem:[%s740 + $0xb8] sm:$0xf]
        %v2245 = vld [vmem:[%s740 + $0xbc] sm:$0xf]
        %v2246 = vld [vmem:[%s740 + $0xc0] sm:$0xf]
        %v2247 = vld [vmem:[%s740 + $0xc4] sm:$0xf]
        %v2248 = vld [vmem:[%s740 + $0xc8] sm:$0xf]
        %v2249 = vld [vmem:[%s740 + $0xcc] sm:$0xf]
        %v2250 = vld [vmem:[%s740 + $0xd0] sm:$0xf]
        %v2251 = vld [vmem:[%s740 + $0xd4] sm:$0xf]
        %v2252 = vld [vmem:[%s740 + $0xd8] sm:$0xf]
        %v2253 = vld [vmem:[%s740 + $0xdc] sm:$0xf]
        %v2254 = vld [vmem:[%s740 + $0xe0] sm:$0xf]
        %v2255 = vld [vmem:[%s740 + $0xe4] sm:$0xf]
        %v2256 = vld [vmem:[%s740 + $0xe8] sm:$0xf]
        %v2257 = vld [vmem:[%s740 + $0xec] sm:$0xf]
        %v2258 = vld [vmem:[%s740 + $0xf0] sm:$0xf]
        %v2259 = vld [vmem:[%s740 + $0xf4] sm:$0xf]
        %v2260 = vld [vmem:[%s740 + $0xf8] sm:$0xf]
        %v2261 = vld [vmem:[%s740 + $0xfc] sm:$0xf]
        %v2262 = vld [vmem:[%s740 + $0x100] sm:$0xf]
        %v2263 = vld [vmem:[%s740 + $0x104] sm:$0xf]
        %v2264 = vld [vmem:[%s740 + $0x108] sm:$0xf]
        %v2265 = vld [vmem:[%s740 + $0x10c] sm:$0xf]
        %v2266 = vld [vmem:[%s740 + $0x110] sm:$0xf]
        %v2267 = vld [vmem:[%s740 + $0x114] sm:$0xf]
        %v2268 = vld [vmem:[%s740 + $0x118] sm:$0xf]
        %v2269 = vld [vmem:[%s740 + $0x11c] sm:$0xf]
        %v2270 = vld [vmem:[%s740 + $0x120] sm:$0xf]
        %v2271 = vld [vmem:[%s740 + $0x124] sm:$0xf]
        %v2272 = vld [vmem:[%s740 + $0x128] sm:$0xf]
        %v2273 = vld [vmem:[%s740 + $0x12c] sm:$0xf]
        %v2274 = vld [vmem:[%s740 + $0x130] sm:$0xf]
        %v2275 = vld [vmem:[%s740 + $0x134] sm:$0xf]
        %v2276 = vld [vmem:[%s740 + $0x138] sm:$0xf]
        %v2277 = vld [vmem:[%s740 + $0x13c] sm:$0xf]
        %v2278 = vld [vmem:[%s740 + $0x140] sm:$0xf]
        %v2279 = vld [vmem:[%s740 + $0x144] sm:$0xf]
        %v2280 = vld [vmem:[%s740 + $0x148] sm:$0xf]
        %v2281 = vld [vmem:[%s740 + $0x14c] sm:$0xf]
        %v2282 = vld [vmem:[%s740 + $0x150] sm:$0xf]
        %v2283 = vld [vmem:[%s740 + $0x154] sm:$0xf]
        %v2284 = vld [vmem:[%s740 + $0x158] sm:$0xf]
        %v2285 = vld [vmem:[%s740 + $0x15c] sm:$0xf]
        %v2286 = vld [vmem:[%s740 + $0x160] sm:$0xf]
        %v2287 = vld [vmem:[%s740 + $0x164] sm:$0xf]
        %v2288 = vld [vmem:[%s740 + $0x168] sm:$0xf]
        %v2289 = vld [vmem:[%s740 + $0x16c] sm:$0xf]
        %v2290 = vld [vmem:[%s740 + $0x170] sm:$0xf]
        %v2291 = vld [vmem:[%s740 + $0x174] sm:$0xf]
        %v2292 = vld [vmem:[%s740 + $0x178] sm:$0xf]
        %v2293 = vld [vmem:[%s740 + $0x17c] sm:$0xf]
        %v2294 = vld [vmem:[%s740 + $0x180] sm:$0xf]
        %v2295 = vld [vmem:[%s740 + $0x184] sm:$0xf]
        %v2296 = vld [vmem:[%s740 + $0x188] sm:$0xf]
        %v2297 = vld [vmem:[%s740 + $0x18c] sm:$0xf]
        %v2298 = vld [vmem:[%s740 + $0x190] sm:$0xf]
        %v2299 = vld [vmem:[%s740 + $0x194] sm:$0xf]
        %v2300 = vld [vmem:[%s740 + $0x198] sm:$0xf]
        %v2301 = vld [vmem:[%s740 + $0x19c] sm:$0xf]
        %v2302 = vld [vmem:[%s740 + $0x1a0] sm:$0xf]
        %v2303 = vld [vmem:[%s740 + $0x1a4] sm:$0xf]
        %v2304 = vld [vmem:[%s740 + $0x1a8] sm:$0xf]
        %v2305 = vld [vmem:[%s740 + $0x1ac] sm:$0xf]
        %v2306 = vld [vmem:[%s740 + $0x1b0] sm:$0xf]
        %v2307 = vld [vmem:[%s740 + $0x1b4] sm:$0xf]
        %v2308 = vld [vmem:[%s740 + $0x1b8] sm:$0xf]
        %v2309 = vld [vmem:[%s740 + $0x1bc] sm:$0xf]
        %v2310 = vld [vmem:[%s740 + $0x1c0] sm:$0xf]
        %v2311 = vld [vmem:[%s740 + $0x1c4] sm:$0xf]
        %v2312 = vld [vmem:[%s740 + $0x1c8] sm:$0xf]
        %v2313 = vld [vmem:[%s740 + $0x1cc] sm:$0xf]
        %v2314 = vld [vmem:[%s740 + $0x1d0] sm:$0xf]
        %v2315 = vld [vmem:[%s740 + $0x1d4] sm:$0xf]
        %v2316 = vld [vmem:[%s740 + $0x1d8] sm:$0xf]
        %v2317 = vld [vmem:[%s740 + $0x1dc] sm:$0xf]
        %v2318 = vld [vmem:[%s740 + $0x1e0] sm:$0xf]
        %v2319 = vld [vmem:[%s740 + $0x1e4] sm:$0xf]
        %v2320 = vld [vmem:[%s740 + $0x1e8] sm:$0xf]
        %v2321 = vld [vmem:[%s740 + $0x1ec] sm:$0xf]
        %v2322 = vld [vmem:[%s740 + $0x1f0] sm:$0xf]
        %v2323 = vld [vmem:[%s740 + $0x1f4] sm:$0xf]
        %v2324 = vld [vmem:[%s740 + $0x1f8] sm:$0xf]
        %v2325 = vld [vmem:[%s740 + $0x1fc] sm:$0xf]
        %v2326 = vld [vmem:[%s740 + $0x200] sm:$0xf]
        %v2327 = vld [vmem:[%s740 + $0x204] sm:$0xf]
        %v2328 = vld [vmem:[%s740 + $0x208] sm:$0xf]
        %v2329 = vld [vmem:[%s740 + $0x20c] sm:$0xf]
        %v2330 = vld [vmem:[%s740 + $0x210] sm:$0xf]
        %v2331 = vld [vmem:[%s740 + $0x214] sm:$0xf]
        %v2332 = vld [vmem:[%s740 + $0x218] sm:$0xf]
        %v2333 = vld [vmem:[%s740 + $0x21c] sm:$0xf]
        %v2334 = vld [vmem:[%s740 + $0x220] sm:$0xf]
        %v2335 = vld [vmem:[%s740 + $0x224] sm:$0xf]
        %v2336 = vld [vmem:[%s740 + $0x228] sm:$0xf]
        %v2337 = vld [vmem:[%s740 + $0x22c] sm:$0xf]
        %v2338 = vld [vmem:[%s740 + $0x230] sm:$0xf]
        %v2339 = vld [vmem:[%s740 + $0x234] sm:$0xf]
        %v2340 = vld [vmem:[%s740 + $0x238] sm:$0xf]
        %v2341 = vld [vmem:[%s740 + $0x23c] sm:$0xf]
        %v2342 = vld [vmem:[%s740 + $0x240] sm:$0xf]
        %v2343 = vld [vmem:[%s740 + $0x244] sm:$0xf]
        %v2344 = vld [vmem:[%s740 + $0x248] sm:$0xf]
        %v2345 = vld [vmem:[%s740 + $0x24c] sm:$0xf]
        %v2346 = vld [vmem:[%s740 + $0x250] sm:$0xf]
        %v2347 = vld [vmem:[%s740 + $0x254] sm:$0xf]
        %v2348 = vld [vmem:[%s740 + $0x258] sm:$0xf]
        %v2349 = vld [vmem:[%s740 + $0x25c] sm:$0xf]
        %v2350 = vld [vmem:[%s740 + $0x260] sm:$0xf]
        %v2351 = vld [vmem:[%s740 + $0x264] sm:$0xf]
        %v2352 = vld [vmem:[%s740 + $0x268] sm:$0xf]
        %v2353 = vld [vmem:[%s740 + $0x26c] sm:$0xf]
        %v2354 = vld [vmem:[%s740 + $0x270] sm:$0xf]
        %v2355 = vld [vmem:[%s740 + $0x274] sm:$0xf]
        %v2356 = vld [vmem:[%s740 + $0x278] sm:$0xf]
        %v2357 = vld [vmem:[%s740 + $0x27c] sm:$0xf]
        %v2358 = vld [vmem:[%s740 + $0x280] sm:$0xf]
        %v2359 = vld [vmem:[%s740 + $0x284] sm:$0xf]
        %v2360 = vld [vmem:[%s740 + $0x288] sm:$0xf]
        %v2361 = vld [vmem:[%s740 + $0x28c] sm:$0xf]
        %v2362 = vld [vmem:[%s740 + $0x290] sm:$0xf]
        %v2363 = vld [vmem:[%s740 + $0x294] sm:$0xf]
        %v2364 = vld [vmem:[%s740 + $0x298] sm:$0xf]
        %v2365 = vld [vmem:[%s740 + $0x29c] sm:$0xf]
        %v2366 = vld [vmem:[%s740 + $0x2a0] sm:$0xf]
        %v2367 = vld [vmem:[%s740 + $0x2a4] sm:$0xf]
        %v2368 = vld [vmem:[%s740 + $0x2a8] sm:$0xf]
        %v2369 = vld [vmem:[%s740 + $0x2ac] sm:$0xf]
        %v2370 = vld [vmem:[%s740 + $0x2b0] sm:$0xf]
        %v2371 = vld [vmem:[%s740 + $0x2b4] sm:$0xf]
        %v2372 = vld [vmem:[%s740 + $0x2b8] sm:$0xf]
        %v2373 = vld [vmem:[%s740 + $0x2bc] sm:$0xf]
        %v2374 = vld [vmem:[%s740 + $0x2c0] sm:$0xf]
        %v2375 = vld [vmem:[%s740 + $0x2c4] sm:$0xf]
        %v2376 = vld [vmem:[%s740 + $0x2c8] sm:$0xf]
        %v2377 = vld [vmem:[%s740 + $0x2cc] sm:$0xf]
        %v2378 = vld [vmem:[%s740 + $0x2d0] sm:$0xf]
        %v2379 = vld [vmem:[%s740 + $0x2d4] sm:$0xf]
        %v2380 = vld [vmem:[%s740 + $0x2d8] sm:$0xf]
        %v2381 = vld [vmem:[%s740 + $0x2dc] sm:$0xf]
        %v2382 = vld [vmem:[%s740 + $0x2e0] sm:$0xf]
        %v2383 = vld [vmem:[%s740 + $0x2e4] sm:$0xf]
        %v2384 = vld [vmem:[%s740 + $0x2e8] sm:$0xf]
        %v2385 = vld [vmem:[%s740 + $0x2ec] sm:$0xf]
        %v2386 = vld [vmem:[%s740 + $0x2f0] sm:$0xf]
        %v2387 = vld [vmem:[%s740 + $0x2f4] sm:$0xf]
        %v2388 = vld [vmem:[%s740 + $0x2f8] sm:$0xf]
        %v2389 = vld [vmem:[%s740 + $0x2fc] sm:$0xf]
        %v2390 = vld [vmem:[%s740 + $0x300] sm:$0xf]
        %v2391 = vld [vmem:[%s740 + $0x304] sm:$0xf]
        %v2392 = vld [vmem:[%s740 + $0x308] sm:$0xf]
        %v2393 = vld [vmem:[%s740 + $0x30c] sm:$0xf]
        %v2394 = vld [vmem:[%s740 + $0x310] sm:$0xf]
        %v2395 = vld [vmem:[%s740 + $0x314] sm:$0xf]
        %v2396 = vld [vmem:[%s740 + $0x318] sm:$0xf]
        %v2397 = vld [vmem:[%s740 + $0x31c] sm:$0xf]
        %v2398 = vld [vmem:[%s740 + $0x320] sm:$0xf]
        %v2399 = vld [vmem:[%s740 + $0x324] sm:$0xf]
        %v2400 = vld [vmem:[%s740 + $0x328] sm:$0xf]
        %v2401 = vld [vmem:[%s740 + $0x32c] sm:$0xf]
        %v2402 = vld [vmem:[%s740 + $0x330] sm:$0xf]
        %v2403 = vld [vmem:[%s740 + $0x334] sm:$0xf]
        %v2404 = vld [vmem:[%s740 + $0x338] sm:$0xf]
        %v2405 = vld [vmem:[%s740 + $0x33c] sm:$0xf]
        %v2406 = vld [vmem:[%s740 + $0x340] sm:$0xf]
        %v2407 = vld [vmem:[%s740 + $0x344] sm:$0xf]
        %v2408 = vld [vmem:[%s740 + $0x348] sm:$0xf]
        %v2409 = vld [vmem:[%s740 + $0x34c] sm:$0xf]
        %v2410 = vld [vmem:[%s740 + $0x350] sm:$0xf]
        %v2411 = vld [vmem:[%s740 + $0x354] sm:$0xf]
        %v2412 = vld [vmem:[%s740 + $0x358] sm:$0xf]
        %v2413 = vld [vmem:[%s740 + $0x35c] sm:$0xf]
        %v2414 = vld [vmem:[%s740 + $0x360] sm:$0xf]
        %v2415 = vld [vmem:[%s740 + $0x364] sm:$0xf]
        %v2416 = vld [vmem:[%s740 + $0x368] sm:$0xf]
        %v2417 = vld [vmem:[%s740 + $0x36c] sm:$0xf]
        %v2418 = vld [vmem:[%s740 + $0x370] sm:$0xf]
        %v2419 = vld [vmem:[%s740 + $0x374] sm:$0xf]
        %v2420 = vld [vmem:[%s740 + $0x378] sm:$0xf]
        %v2421 = vld [vmem:[%s740 + $0x37c] sm:$0xf]
        %v2422 = vld [vmem:[%s740 + $0x380] sm:$0xf]
        %v2423 = vld [vmem:[%s740 + $0x384] sm:$0xf]
        %v2424 = vld [vmem:[%s740 + $0x388] sm:$0xf]
        %v2425 = vld [vmem:[%s740 + $0x38c] sm:$0xf]
        %v2426 = vld [vmem:[%s740 + $0x390] sm:$0xf]
        %v2427 = vld [vmem:[%s740 + $0x394] sm:$0xf]
        %v2428 = vld [vmem:[%s740 + $0x398] sm:$0xf]
        %v2429 = vld [vmem:[%s740 + $0x39c] sm:$0xf]
        %v2430 = vld [vmem:[%s740 + $0x3a0] sm:$0xf]
        %v2431 = vld [vmem:[%s740 + $0x3a4] sm:$0xf]
        %v2432 = vld [vmem:[%s740 + $0x3a8] sm:$0xf]
        %v2433 = vld [vmem:[%s740 + $0x3ac] sm:$0xf]
        %v2434 = vld [vmem:[%s740 + $0x3b0] sm:$0xf]
        %v2435 = vld [vmem:[%s740 + $0x3b4] sm:$0xf]
        %v2436 = vld [vmem:[%s740 + $0x3b8] sm:$0xf]
        %v2437 = vld [vmem:[%s740 + $0x3bc] sm:$0xf]
        %v2438 = vld [vmem:[%s740 + $0x3c0] sm:$0xf]
        %v2439 = vld [vmem:[%s740 + $0x3c4] sm:$0xf]
        %v2440 = vld [vmem:[%s740 + $0x3c8] sm:$0xf]
        %v2441 = vld [vmem:[%s740 + $0x3cc] sm:$0xf]
        %v2442 = vld [vmem:[%s740 + $0x3d0] sm:$0xf]
        %v2443 = vld [vmem:[%s740 + $0x3d4] sm:$0xf]
        %v2444 = vld [vmem:[%s740 + $0x3d8] sm:$0xf]
        %v2445 = vld [vmem:[%s740 + $0x3dc] sm:$0xf]
        %v2446 = vld [vmem:[%s740 + $0x3e0] sm:$0xf]
        %v2447 = vld [vmem:[%s740 + $0x3e4] sm:$0xf]
        %v2448 = vld [vmem:[%s740 + $0x3e8] sm:$0xf]
        %v2449 = vld [vmem:[%s740 + $0x3ec] sm:$0xf]
        %v2450 = vld [vmem:[%s740 + $0x3f0] sm:$0xf]
        %v2451 = vld [vmem:[%s740 + $0x3f4] sm:$0xf]
        %v2452 = vld [vmem:[%s740 + $0x3f8] sm:$0xf]
        %v2453 = vld [vmem:[%s740 + $0x3fc] sm:$0xf]
        %v2454 = vld [vmem:[%s743] sm:$0x1]
        %v2456 = vlaneseq
        %v2457 = vshrl.u32 %v2456, 7
        %v2458 = vsub.s32 0, %v2457
        %v2459 = vrot.slane %v2454, %v2458
        %v2717 = vunpack.c.l.b16 %v2198
        %v2718 = vunpack.c.l.b16 %v2199
        %v2719 = vunpack.c.l.b16 %v2200
        %v2720 = vunpack.c.l.b16 %v2201
        %v2721 = vunpack.c.l.b16 %v2202
        %v2722 = vunpack.c.l.b16 %v2203
        %v2723 = vunpack.c.l.b16 %v2204
        %v2724 = vunpack.c.l.b16 %v2205
        %v2725 = vunpack.c.l.b16 %v2206
        %v2726 = vunpack.c.l.b16 %v2207
        %v2727 = vunpack.c.l.b16 %v2208
        %v2728 = vunpack.c.l.b16 %v2209
        %v2729 = vunpack.c.l.b16 %v2210
        %v2730 = vunpack.c.l.b16 %v2211
        %v2731 = vunpack.c.l.b16 %v2212
        %v2732 = vunpack.c.l.b16 %v2213
        %v2733 = vunpack.c.l.b16 %v2214
        %v2734 = vunpack.c.l.b16 %v2215
        %v2735 = vunpack.c.l.b16 %v2216
        %v2736 = vunpack.c.l.b16 %v2217
        %v2737 = vunpack.c.l.b16 %v2218
        %v2738 = vunpack.c.l.b16 %v2219
        %v2739 = vunpack.c.l.b16 %v2220
        %v2740 = vunpack.c.l.b16 %v2221
        %v2741 = vunpack.c.l.b16 %v2222
        %v2742 = vunpack.c.l.b16 %v2223
        %v2743 = vunpack.c.l.b16 %v2224
        %v2744 = vunpack.c.l.b16 %v2225
        %v2745 = vunpack.c.l.b16 %v2226
        %v2746 = vunpack.c.l.b16 %v2227
        %v2747 = vunpack.c.l.b16 %v2228
        %v2748 = vunpack.c.l.b16 %v2229
        %v2749 = vunpack.c.l.b16 %v2230
        %v2750 = vunpack.c.l.b16 %v2231
        %v2751 = vunpack.c.l.b16 %v2232
        %v2752 = vunpack.c.l.b16 %v2233
        %v2753 = vunpack.c.l.b16 %v2234
        %v2754 = vunpack.c.l.b16 %v2235
        %v2755 = vunpack.c.l.b16 %v2236
        %v2756 = vunpack.c.l.b16 %v2237
        %v2757 = vunpack.c.l.b16 %v2238
        %v2758 = vunpack.c.l.b16 %v2239
        %v2759 = vunpack.c.l.b16 %v2240
        %v2760 = vunpack.c.l.b16 %v2241
        %v2761 = vunpack.c.l.b16 %v2242
        %v2762 = vunpack.c.l.b16 %v2243
        %v2763 = vunpack.c.l.b16 %v2244
        %v2764 = vunpack.c.l.b16 %v2245
        %v2765 = vunpack.c.l.b16 %v2246
        %v2766 = vunpack.c.l.b16 %v2247
        %v2767 = vunpack.c.l.b16 %v2248
        %v2768 = vunpack.c.l.b16 %v2249
        %v2769 = vunpack.c.l.b16 %v2250
        %v2770 = vunpack.c.l.b16 %v2251
        %v2771 = vunpack.c.l.b16 %v2252
        %v2772 = vunpack.c.l.b16 %v2253
        %v2773 = vunpack.c.l.b16 %v2254
        %v2774 = vunpack.c.l.b16 %v2255
        %v2775 = vunpack.c.l.b16 %v2256
        %v2776 = vunpack.c.l.b16 %v2257
        %v2777 = vunpack.c.l.b16 %v2258
        %v2778 = vunpack.c.l.b16 %v2259
        %v2779 = vunpack.c.l.b16 %v2260
        %v2780 = vunpack.c.l.b16 %v2261
        %v2781 = vunpack.c.l.b16 %v2262
        %v2782 = vunpack.c.l.b16 %v2263
        %v2783 = vunpack.c.l.b16 %v2264
        %v2784 = vunpack.c.l.b16 %v2265
        %v2785 = vunpack.c.l.b16 %v2266
        %v2786 = vunpack.c.l.b16 %v2267
        %v2787 = vunpack.c.l.b16 %v2268
        %v2788 = vunpack.c.l.b16 %v2269
        %v2789 = vunpack.c.l.b16 %v2270
        %v2790 = vunpack.c.l.b16 %v2271
        %v2791 = vunpack.c.l.b16 %v2272
        %v2792 = vunpack.c.l.b16 %v2273
        %v2793 = vunpack.c.l.b16 %v2274
        %v2794 = vunpack.c.l.b16 %v2275
        %v2795 = vunpack.c.l.b16 %v2276
        %v2796 = vunpack.c.l.b16 %v2277
        %v2797 = vunpack.c.l.b16 %v2278
        %v2798 = vunpack.c.l.b16 %v2279
        %v2799 = vunpack.c.l.b16 %v2280
        %v2800 = vunpack.c.l.b16 %v2281
        %v2801 = vunpack.c.l.b16 %v2282
        %v2802 = vunpack.c.l.b16 %v2283
        %v2803 = vunpack.c.l.b16 %v2284
        %v2804 = vunpack.c.l.b16 %v2285
        %v2805 = vunpack.c.l.b16 %v2286
        %v2806 = vunpack.c.l.b16 %v2287
        %v2807 = vunpack.c.l.b16 %v2288
        %v2808 = vunpack.c.l.b16 %v2289
        %v2809 = vunpack.c.l.b16 %v2290
        %v2810 = vunpack.c.l.b16 %v2291
        %v2811 = vunpack.c.l.b16 %v2292
        %v2812 = vunpack.c.l.b16 %v2293
        %v2813 = vunpack.c.l.b16 %v2294
        %v2814 = vunpack.c.l.b16 %v2295
        %v2815 = vunpack.c.l.b16 %v2296
        %v2816 = vunpack.c.l.b16 %v2297
        %v2817 = vunpack.c.l.b16 %v2298
        %v2818 = vunpack.c.l.b16 %v2299
        %v2819 = vunpack.c.l.b16 %v2300
        %v2820 = vunpack.c.l.b16 %v2301
        %v2821 = vunpack.c.l.b16 %v2302
        %v2822 = vunpack.c.l.b16 %v2303
        %v2823 = vunpack.c.l.b16 %v2304
        %v2824 = vunpack.c.l.b16 %v2305
        %v2825 = vunpack.c.l.b16 %v2306
        %v2826 = vunpack.c.l.b16 %v2307
        %v2827 = vunpack.c.l.b16 %v2308
        %v2828 = vunpack.c.l.b16 %v2309
        %v2829 = vunpack.c.l.b16 %v2310
        %v2830 = vunpack.c.l.b16 %v2311
        %v2831 = vunpack.c.l.b16 %v2312
        %v2832 = vunpack.c.l.b16 %v2313
        %v2833 = vunpack.c.l.b16 %v2314
        %v2834 = vunpack.c.l.b16 %v2315
        %v2835 = vunpack.c.l.b16 %v2316
        %v2836 = vunpack.c.l.b16 %v2317
        %v2837 = vunpack.c.l.b16 %v2318
        %v2838 = vunpack.c.l.b16 %v2319
        %v2839 = vunpack.c.l.b16 %v2320
        %v2840 = vunpack.c.l.b16 %v2321
        %v2841 = vunpack.c.l.b16 %v2322
        %v2842 = vunpack.c.l.b16 %v2323
        %v2843 = vunpack.c.l.b16 %v2324
        %v2844 = vunpack.c.l.b16 %v2325
        %v2845 = vunpack.c.l.b16 %v2326
        %v2846 = vunpack.c.l.b16 %v2327
        %v2847 = vunpack.c.l.b16 %v2328
        %v2848 = vunpack.c.l.b16 %v2329
        %v2849 = vunpack.c.l.b16 %v2330
        %v2850 = vunpack.c.l.b16 %v2331
        %v2851 = vunpack.c.l.b16 %v2332
        %v2852 = vunpack.c.l.b16 %v2333
        %v2853 = vunpack.c.l.b16 %v2334
        %v2854 = vunpack.c.l.b16 %v2335
        %v2855 = vunpack.c.l.b16 %v2336
        %v2856 = vunpack.c.l.b16 %v2337
        %v2857 = vunpack.c.l.b16 %v2338
        %v2858 = vunpack.c.l.b16 %v2339
        %v2859 = vunpack.c.l.b16 %v2340
        %v2860 = vunpack.c.l.b16 %v2341
        %v2861 = vunpack.c.l.b16 %v2342
        %v2862 = vunpack.c.l.b16 %v2343
        %v2863 = vunpack.c.l.b16 %v2344
        %v2864 = vunpack.c.l.b16 %v2345
        %v2865 = vunpack.c.l.b16 %v2346
        %v2866 = vunpack.c.l.b16 %v2347
        %v2867 = vunpack.c.l.b16 %v2348
        %v2868 = vunpack.c.l.b16 %v2349
        %v2869 = vunpack.c.l.b16 %v2350
        %v2870 = vunpack.c.l.b16 %v2351
        %v2871 = vunpack.c.l.b16 %v2352
        %v2872 = vunpack.c.l.b16 %v2353
        %v2873 = vunpack.c.l.b16 %v2354
        %v2874 = vunpack.c.l.b16 %v2355
        %v2875 = vunpack.c.l.b16 %v2356
        %v2876 = vunpack.c.l.b16 %v2357
        %v2877 = vunpack.c.l.b16 %v2358
        %v2878 = vunpack.c.l.b16 %v2359
        %v2879 = vunpack.c.l.b16 %v2360
        %v2880 = vunpack.c.l.b16 %v2361
        %v2881 = vunpack.c.l.b16 %v2362
        %v2882 = vunpack.c.l.b16 %v2363
        %v2883 = vunpack.c.l.b16 %v2364
        %v2884 = vunpack.c.l.b16 %v2365
        %v2885 = vunpack.c.l.b16 %v2366
        %v2886 = vunpack.c.l.b16 %v2367
        %v2887 = vunpack.c.l.b16 %v2368
        %v2888 = vunpack.c.l.b16 %v2369
        %v2889 = vunpack.c.l.b16 %v2370
        %v2890 = vunpack.c.l.b16 %v2371
        %v2891 = vunpack.c.l.b16 %v2372
        %v2892 = vunpack.c.l.b16 %v2373
        %v2893 = vunpack.c.l.b16 %v2374
        %v2894 = vunpack.c.l.b16 %v2375
        %v2895 = vunpack.c.l.b16 %v2376
        %v2896 = vunpack.c.l.b16 %v2377
        %v2897 = vunpack.c.l.b16 %v2378
        %v2898 = vunpack.c.l.b16 %v2379
        %v2899 = vunpack.c.l.b16 %v2380
        %v2900 = vunpack.c.l.b16 %v2381
        %v2901 = vunpack.c.l.b16 %v2382
        %v2902 = vunpack.c.l.b16 %v2383
        %v2903 = vunpack.c.l.b16 %v2384
        %v2904 = vunpack.c.l.b16 %v2385
        %v2905 = vunpack.c.l.b16 %v2386
        %v2906 = vunpack.c.l.b16 %v2387
        %v2907 = vunpack.c.l.b16 %v2388
        %v2908 = vunpack.c.l.b16 %v2389
        %v2909 = vunpack.c.l.b16 %v2390
        %v2910 = vunpack.c.l.b16 %v2391
        %v2911 = vunpack.c.l.b16 %v2392
        %v2912 = vunpack.c.l.b16 %v2393
        %v2913 = vunpack.c.l.b16 %v2394
        %v2914 = vunpack.c.l.b16 %v2395
        %v2915 = vunpack.c.l.b16 %v2396
        %v2916 = vunpack.c.l.b16 %v2397
        %v2917 = vunpack.c.l.b16 %v2398
        %v2918 = vunpack.c.l.b16 %v2399
        %v2919 = vunpack.c.l.b16 %v2400
        %v2920 = vunpack.c.l.b16 %v2401
        %v2921 = vunpack.c.l.b16 %v2402
        %v2922 = vunpack.c.l.b16 %v2403
        %v2923 = vunpack.c.l.b16 %v2404
        %v2924 = vunpack.c.l.b16 %v2405
        %v2925 = vunpack.c.l.b16 %v2406
        %v2926 = vunpack.c.l.b16 %v2407
        %v2927 = vunpack.c.l.b16 %v2408
        %v2928 = vunpack.c.l.b16 %v2409
        %v2929 = vunpack.c.l.b16 %v2410
        %v2930 = vunpack.c.l.b16 %v2411
        %v2931 = vunpack.c.l.b16 %v2412
        %v2932 = vunpack.c.l.b16 %v2413
        %v2933 = vunpack.c.l.b16 %v2414
        %v2934 = vunpack.c.l.b16 %v2415
        %v2935 = vunpack.c.l.b16 %v2416
        %v2936 = vunpack.c.l.b16 %v2417
        %v2937 = vunpack.c.l.b16 %v2418
        %v2938 = vunpack.c.l.b16 %v2419
        %v2939 = vunpack.c.l.b16 %v2420
        %v2940 = vunpack.c.l.b16 %v2421
        %v2941 = vunpack.c.l.b16 %v2422
        %v2942 = vunpack.c.l.b16 %v2423
        %v2943 = vunpack.c.l.b16 %v2424
        %v2944 = vunpack.c.l.b16 %v2425
        %v2945 = vunpack.c.l.b16 %v2426
        %v2946 = vunpack.c.l.b16 %v2427
        %v2947 = vunpack.c.l.b16 %v2428
        %v2948 = vunpack.c.l.b16 %v2429
        %v2949 = vunpack.c.l.b16 %v2430
        %v2950 = vunpack.c.l.b16 %v2431
        %v2951 = vunpack.c.l.b16 %v2432
        %v2952 = vunpack.c.l.b16 %v2433
        %v2953 = vunpack.c.l.b16 %v2434
        %v2954 = vunpack.c.l.b16 %v2435
        %v2955 = vunpack.c.l.b16 %v2436
        %v2956 = vunpack.c.l.b16 %v2437
        %v2957 = vunpack.c.l.b16 %v2438
        %v2958 = vunpack.c.l.b16 %v2439
        %v2959 = vunpack.c.l.b16 %v2440
        %v2960 = vunpack.c.l.b16 %v2441
        %v2961 = vunpack.c.l.b16 %v2442
        %v2962 = vunpack.c.l.b16 %v2443
        %v2963 = vunpack.c.l.b16 %v2444
        %v2964 = vunpack.c.l.b16 %v2445
        %v2965 = vunpack.c.l.b16 %v2446
        %v2966 = vunpack.c.l.b16 %v2447
        %v2967 = vunpack.c.l.b16 %v2448
        %v2968 = vunpack.c.l.b16 %v2449
        %v2969 = vunpack.c.l.b16 %v2450
        %v2970 = vunpack.c.l.b16 %v2451
        %v2971 = vunpack.c.l.b16 %v2452
        %v2972 = vunpack.c.l.b16 %v2453
        %v2973 = vpack.c.b16 %v2718, %v2717
        %v2974 = vpack.c.b16 %v2720, %v2719
        %v2975 = vpack.c.b16 %v2722, %v2721
        %v2976 = vpack.c.b16 %v2724, %v2723
        %v2977 = vpack.c.b16 %v2726, %v2725
        %v2978 = vpack.c.b16 %v2728, %v2727
        %v2979 = vpack.c.b16 %v2730, %v2729
        %v2980 = vpack.c.b16 %v2732, %v2731
        %v2981 = vpack.c.b16 %v2734, %v2733
        %v2982 = vpack.c.b16 %v2736, %v2735
        %v2983 = vpack.c.b16 %v2738, %v2737
        %v2984 = vpack.c.b16 %v2740, %v2739
        %v2985 = vpack.c.b16 %v2742, %v2741
        %v2986 = vpack.c.b16 %v2744, %v2743
        %v2987 = vpack.c.b16 %v2746, %v2745
        %v2988 = vpack.c.b16 %v2748, %v2747
        %v2989 = vpack.c.b16 %v2750, %v2749
        %v2990 = vpack.c.b16 %v2752, %v2751
        %v2991 = vpack.c.b16 %v2754, %v2753
        %v2992 = vpack.c.b16 %v2756, %v2755
        %v2993 = vpack.c.b16 %v2758, %v2757
        %v2994 = vpack.c.b16 %v2760, %v2759
        %v2995 = vpack.c.b16 %v2762, %v2761
        %v2996 = vpack.c.b16 %v2764, %v2763
        %v2997 = vpack.c.b16 %v2766, %v2765
        %v2998 = vpack.c.b16 %v2768, %v2767
        %v2999 = vpack.c.b16 %v2770, %v2769
        %v3000 = vpack.c.b16 %v2772, %v2771
        %v3001 = vpack.c.b16 %v2774, %v2773
        %v3002 = vpack.c.b16 %v2776, %v2775
        %v3003 = vpack.c.b16 %v2778, %v2777
        %v3004 = vpack.c.b16 %v2780, %v2779
        %v3005 = vpack.c.b16 %v2782, %v2781
        %v3006 = vpack.c.b16 %v2784, %v2783
        %v3007 = vpack.c.b16 %v2786, %v2785
        %v3008 = vpack.c.b16 %v2788, %v2787
        %v3009 = vpack.c.b16 %v2790, %v2789
        %v3010 = vpack.c.b16 %v2792, %v2791
        %v3011 = vpack.c.b16 %v2794, %v2793
        %v3012 = vpack.c.b16 %v2796, %v2795
        %v3013 = vpack.c.b16 %v2798, %v2797
        %v3014 = vpack.c.b16 %v2800, %v2799
        %v3015 = vpack.c.b16 %v2802, %v2801
        %v3016 = vpack.c.b16 %v2804, %v2803
        %v3017 = vpack.c.b16 %v2806, %v2805
        %v3018 = vpack.c.b16 %v2808, %v2807
        %v3019 = vpack.c.b16 %v2810, %v2809
        %v3020 = vpack.c.b16 %v2812, %v2811
        %v3021 = vpack.c.b16 %v2814, %v2813
        %v3022 = vpack.c.b16 %v2816, %v2815
        %v3023 = vpack.c.b16 %v2818, %v2817
        %v3024 = vpack.c.b16 %v2820, %v2819
        %v3025 = vpack.c.b16 %v2822, %v2821
        %v3026 = vpack.c.b16 %v2824, %v2823
        %v3027 = vpack.c.b16 %v2826, %v2825
        %v3028 = vpack.c.b16 %v2828, %v2827
        %v3029 = vpack.c.b16 %v2830, %v2829
        %v3030 = vpack.c.b16 %v2832, %v2831
        %v3031 = vpack.c.b16 %v2834, %v2833
        %v3032 = vpack.c.b16 %v2836, %v2835
        %v3033 = vpack.c.b16 %v2838, %v2837
        %v3034 = vpack.c.b16 %v2840, %v2839
        %v3035 = vpack.c.b16 %v2842, %v2841
        %v3036 = vpack.c.b16 %v2844, %v2843
        %v3037 = vpack.c.b16 %v2846, %v2845
        %v3038 = vpack.c.b16 %v2848, %v2847
        %v3039 = vpack.c.b16 %v2850, %v2849
        %v3040 = vpack.c.b16 %v2852, %v2851
        %v3041 = vpack.c.b16 %v2854, %v2853
        %v3042 = vpack.c.b16 %v2856, %v2855
        %v3043 = vpack.c.b16 %v2858, %v2857
        %v3044 = vpack.c.b16 %v2860, %v2859
        %v3045 = vpack.c.b16 %v2862, %v2861
        %v3046 = vpack.c.b16 %v2864, %v2863
        %v3047 = vpack.c.b16 %v2866, %v2865
        %v3048 = vpack.c.b16 %v2868, %v2867
        %v3049 = vpack.c.b16 %v2870, %v2869
        %v3050 = vpack.c.b16 %v2872, %v2871
        %v3051 = vpack.c.b16 %v2874, %v2873
        %v3052 = vpack.c.b16 %v2876, %v2875
        %v3053 = vpack.c.b16 %v2878, %v2877
        %v3054 = vpack.c.b16 %v2880, %v2879
        %v3055 = vpack.c.b16 %v2882, %v2881
        %v3056 = vpack.c.b16 %v2884, %v2883
        %v3057 = vpack.c.b16 %v2886, %v2885
        %v3058 = vpack.c.b16 %v2888, %v2887
        %v3059 = vpack.c.b16 %v2890, %v2889
        %v3060 = vpack.c.b16 %v2892, %v2891
        %v3061 = vpack.c.b16 %v2894, %v2893
        %v3062 = vpack.c.b16 %v2896, %v2895
        %v3063 = vpack.c.b16 %v2898, %v2897
        %v3064 = vpack.c.b16 %v2900, %v2899
        %v3065 = vpack.c.b16 %v2902, %v2901
        %v3066 = vpack.c.b16 %v2904, %v2903
        %v3067 = vpack.c.b16 %v2906, %v2905
        %v3068 = vpack.c.b16 %v2908, %v2907
        %v3069 = vpack.c.b16 %v2910, %v2909
        %v3070 = vpack.c.b16 %v2912, %v2911
        %v3071 = vpack.c.b16 %v2914, %v2913
        %v3072 = vpack.c.b16 %v2916, %v2915
        %v3073 = vpack.c.b16 %v2918, %v2917
        %v3074 = vpack.c.b16 %v2920, %v2919
        %v3075 = vpack.c.b16 %v2922, %v2921
        %v3076 = vpack.c.b16 %v2924, %v2923
        %v3077 = vpack.c.b16 %v2926, %v2925
        %v3078 = vpack.c.b16 %v2928, %v2927
        %v3079 = vpack.c.b16 %v2930, %v2929
        %v3080 = vpack.c.b16 %v2932, %v2931
        %v3081 = vpack.c.b16 %v2934, %v2933
        %v3082 = vpack.c.b16 %v2936, %v2935
        %v3083 = vpack.c.b16 %v2938, %v2937
        %v3084 = vpack.c.b16 %v2940, %v2939
        %v3085 = vpack.c.b16 %v2942, %v2941
        %v3086 = vpack.c.b16 %v2944, %v2943
        %v3087 = vpack.c.b16 %v2946, %v2945
        %v3088 = vpack.c.b16 %v2948, %v2947
        %v3089 = vpack.c.b16 %v2950, %v2949
        %v3090 = vpack.c.b16 %v2952, %v2951
        %v3091 = vpack.c.b16 %v2954, %v2953
        %v3092 = vpack.c.b16 %v2956, %v2955
        %v3093 = vpack.c.b16 %v2958, %v2957
        %v3094 = vpack.c.b16 %v2960, %v2959
        %v3095 = vpack.c.b16 %v2962, %v2961
        %v3096 = vpack.c.b16 %v2964, %v2963
        %v3097 = vpack.c.b16 %v2966, %v2965
        %v3098 = vpack.c.b16 %v2968, %v2967
        %v3099 = vpack.c.b16 %v2970, %v2969
        %v3100 = vpack.c.b16 %v2972, %v2971
        %3229 = vmatprep.subr.bf16.mxu0 0
        %3230 = vmatpush1.bf16.msra.mxu0 %v2980
        %3231 = vmatprep.subr.bf16.mxu0 0
        %3232 = vmatpush1.bf16.msra.mxu0 %v2979
        %3233 = vmatprep.subr.bf16.mxu0 0
        %3234 = vmatpush1.bf16.msra.mxu0 %v2978
        %3235 = vmatprep.subr.bf16.mxu0 0
        %3236 = vmatpush1.bf16.msra.mxu0 %v2977
        %3237 = vmatprep.subr.bf16.mxu0 0
        %3238 = vmatpush1.bf16.msra.mxu0 %v2976
        %3239 = vmatprep.subr.bf16.mxu0 0
        %3240 = vmatpush1.bf16.msra.mxu0 %v2975
        %3241 = vmatprep.subr.bf16.mxu0 0
        %3242 = vmatpush1.bf16.msra.mxu0 %v2974
        %3243 = vmatprep.subr.bf16.mxu0 0
        %3244 = vmatpush1.bf16.msra.mxu0 %v2973
        %3245 = vmatprep.subr.bf16.mxu0 0
        %3246 = vmatpush2.bf16.msra.mxu0 %v2988
        %3247 = vmatprep.subr.bf16.mxu0 0
        %3248 = vmatpush2.bf16.msra.mxu0 %v2987
        %3249 = vmatprep.subr.bf16.mxu0 0
        %3250 = vmatpush2.bf16.msra.mxu0 %v2986
        %3251 = vmatprep.subr.bf16.mxu0 0
        %3252 = vmatpush2.bf16.msra.mxu0 %v2985
        %3253 = vmatprep.subr.bf16.mxu0 0
        %3254 = vmatpush2.bf16.msra.mxu0 %v2984
        %3255 = vmatprep.subr.bf16.mxu0 0
        %3256 = vmatpush2.bf16.msra.mxu0 %v2983
        %3257 = vmatprep.subr.bf16.mxu0 0
        %3258 = vmatpush2.bf16.msra.mxu0 %v2982
        %3259 = vmatprep.subr.bf16.mxu0 0
        %3260 = vmatpush2.bf16.msra.mxu0 %v2981
        %3261 = vmatprep.mubr.bf16.mxu0 %v2183
        %3262 = vmatmul.mubr.bf16.gmra.mxu0 %v2182
        %v3263 = vpop.f32.mrf.mxu0
        %v3264 = vadd.f32 %v2459, %v3263
        %v3265 = vpop.f32.mrf.mxu0
        %v3266 = vpop.f32.mrf.mxu0
        %v3267 = vpop.f32.mrf.mxu0
        %3268 = vdwg.mxu0
        %3269 = vmatprep.subr.bf16.mxu0 0
        %3270 = vmatpush1.bf16.msra.mxu0 %v2996
        %3271 = vmatprep.subr.bf16.mxu0 0
        %3272 = vmatpush1.bf16.msra.mxu0 %v2995
        %3273 = vmatprep.subr.bf16.mxu0 0
        %3274 = vmatpush1.bf16.msra.mxu0 %v2994
        %3275 = vmatprep.subr.bf16.mxu0 0
        %3276 = vmatpush1.bf16.msra.mxu0 %v2993
        %3277 = vmatprep.subr.bf16.mxu0 0
        %3278 = vmatpush1.bf16.msra.mxu0 %v2992
        %3279 = vmatprep.subr.bf16.mxu0 0
        %3280 = vmatpush1.bf16.msra.mxu0 %v2991
        %3281 = vmatprep.subr.bf16.mxu0 0
        %3282 = vmatpush1.bf16.msra.mxu0 %v2990
        %3283 = vmatprep.subr.bf16.mxu0 0
        %3284 = vmatpush1.bf16.msra.mxu0 %v2989
        %3285 = vmatprep.subr.bf16.mxu0 0
        %3286 = vmatpush2.bf16.msra.mxu0 %v3004
        %3287 = vmatprep.subr.bf16.mxu0 0
        %3288 = vmatpush2.bf16.msra.mxu0 %v3003
        %3289 = vmatprep.subr.bf16.mxu0 0
        %3290 = vmatpush2.bf16.msra.mxu0 %v3002
        %3291 = vmatprep.subr.bf16.mxu0 0
        %3292 = vmatpush2.bf16.msra.mxu0 %v3001
        %3293 = vmatprep.subr.bf16.mxu0 0
        %3294 = vmatpush2.bf16.msra.mxu0 %v3000
        %3295 = vmatprep.subr.bf16.mxu0 0
        %3296 = vmatpush2.bf16.msra.mxu0 %v2999
        %3297 = vmatprep.subr.bf16.mxu0 0
        %3298 = vmatpush2.bf16.msra.mxu0 %v2998
        %3299 = vmatprep.subr.bf16.mxu0 0
        %3300 = vmatpush2.bf16.msra.mxu0 %v2997
        %3301 = vmatprep.mubr.bf16.mxu0 %v2185
        %3302 = vmatmul.mubr.bf16.gmra.mxu0 %v2184
        %v3303 = vpop.f32.mrf.mxu0
        %v3304 = vadd.f32 %v3264, %v3303
        %v3305 = vpop.f32.mrf.mxu0
        %v3306 = vpop.f32.mrf.mxu0
        %v3307 = vpop.f32.mrf.mxu0
        %3308 = vdwg.mxu0
        %3309 = vmatprep.subr.bf16.mxu0 0
        %3310 = vmatpush1.bf16.msra.mxu0 %v3012
        %3311 = vmatprep.subr.bf16.mxu0 0
        %3312 = vmatpush1.bf16.msra.mxu0 %v3011
        %3313 = vmatprep.subr.bf16.mxu0 0
        %3314 = vmatpush1.bf16.msra.mxu0 %v3010
        %3315 = vmatprep.subr.bf16.mxu0 0
        %3316 = vmatpush1.bf16.msra.mxu0 %v3009
        %3317 = vmatprep.subr.bf16.mxu0 0
        %3318 = vmatpush1.bf16.msra.mxu0 %v3008
        %3319 = vmatprep.subr.bf16.mxu0 0
        %3320 = vmatpush1.bf16.msra.mxu0 %v3007
        %3321 = vmatprep.subr.bf16.mxu0 0
        %3322 = vmatpush1.bf16.msra.mxu0 %v3006
        %3323 = vmatprep.subr.bf16.mxu0 0
        %3324 = vmatpush1.bf16.msra.mxu0 %v3005
        %3325 = vmatprep.subr.bf16.mxu0 0
        %3326 = vmatpush2.bf16.msra.mxu0 %v3020
        %3327 = vmatprep.subr.bf16.mxu0 0
        %3328 = vmatpush2.bf16.msra.mxu0 %v3019
        %3329 = vmatprep.subr.bf16.mxu0 0
        %3330 = vmatpush2.bf16.msra.mxu0 %v3018
        %3331 = vmatprep.subr.bf16.mxu0 0
        %3332 = vmatpush2.bf16.msra.mxu0 %v3017
        %3333 = vmatprep.subr.bf16.mxu0 0
        %3334 = vmatpush2.bf16.msra.mxu0 %v3016
        %3335 = vmatprep.subr.bf16.mxu0 0
        %3336 = vmatpush2.bf16.msra.mxu0 %v3015
        %3337 = vmatprep.subr.bf16.mxu0 0
        %3338 = vmatpush2.bf16.msra.mxu0 %v3014
        %3339 = vmatprep.subr.bf16.mxu0 0
        %3340 = vmatpush2.bf16.msra.mxu0 %v3013
        %3341 = vmatprep.mubr.bf16.mxu0 %v2187
        %3342 = vmatmul.mubr.bf16.gmra.mxu0 %v2186
        %v3343 = vpop.f32.mrf.mxu0
        %v3344 = vadd.f32 %v3304, %v3343
        %v3345 = vpop.f32.mrf.mxu0
        %v3346 = vpop.f32.mrf.mxu0
        %v3347 = vpop.f32.mrf.mxu0
        %3348 = vdwg.mxu0
        %3349 = vmatprep.subr.bf16.mxu0 0
        %3350 = vmatpush1.bf16.msra.mxu0 %v3028
        %3351 = vmatprep.subr.bf16.mxu0 0
        %3352 = vmatpush1.bf16.msra.mxu0 %v3027
        %3353 = vmatprep.subr.bf16.mxu0 0
        %3354 = vmatpush1.bf16.msra.mxu0 %v3026
        %3355 = vmatprep.subr.bf16.mxu0 0
        %3356 = vmatpush1.bf16.msra.mxu0 %v3025
        %3357 = vmatprep.subr.bf16.mxu0 0
        %3358 = vmatpush1.bf16.msra.mxu0 %v3024
        %3359 = vmatprep.subr.bf16.mxu0 0
        %3360 = vmatpush1.bf16.msra.mxu0 %v3023
        %3361 = vmatprep.subr.bf16.mxu0 0
        %3362 = vmatpush1.bf16.msra.mxu0 %v3022
        %3363 = vmatprep.subr.bf16.mxu0 0
        %3364 = vmatpush1.bf16.msra.mxu0 %v3021
        %3365 = vmatprep.subr.bf16.mxu0 0
        %3366 = vmatpush2.bf16.msra.mxu0 %v3036
        %3367 = vmatprep.subr.bf16.mxu0 0
        %3368 = vmatpush2.bf16.msra.mxu0 %v3035
        %3369 = vmatprep.subr.bf16.mxu0 0
        %3370 = vmatpush2.bf16.msra.mxu0 %v3034
        %3371 = vmatprep.subr.bf16.mxu0 0
        %3372 = vmatpush2.bf16.msra.mxu0 %v3033
        %3373 = vmatprep.subr.bf16.mxu0 0
        %3374 = vmatpush2.bf16.msra.mxu0 %v3032
        %3375 = vmatprep.subr.bf16.mxu0 0
        %3376 = vmatpush2.bf16.msra.mxu0 %v3031
        %3377 = vmatprep.subr.bf16.mxu0 0
        %3378 = vmatpush2.bf16.msra.mxu0 %v3030
        %3379 = vmatprep.subr.bf16.mxu0 0
        %3380 = vmatpush2.bf16.msra.mxu0 %v3029
        %3381 = vmatprep.mubr.bf16.mxu0 %v2189
        %3382 = vmatmul.mubr.bf16.gmra.mxu0 %v2188
        %v3383 = vpop.f32.mrf.mxu0
        %v3384 = vadd.f32 %v3344, %v3383
        %v3385 = vpop.f32.mrf.mxu0
        %v3386 = vpop.f32.mrf.mxu0
        %v3387 = vpop.f32.mrf.mxu0
        %3388 = vdwg.mxu0
        %3389 = vmatprep.subr.bf16.mxu0 0
        %3390 = vmatpush1.bf16.msra.mxu0 %v3044
        %3391 = vmatprep.subr.bf16.mxu0 0
        %3392 = vmatpush1.bf16.msra.mxu0 %v3043
        %3393 = vmatprep.subr.bf16.mxu0 0
        %3394 = vmatpush1.bf16.msra.mxu0 %v3042
        %3395 = vmatprep.subr.bf16.mxu0 0
        %3396 = vmatpush1.bf16.msra.mxu0 %v3041
        %3397 = vmatprep.subr.bf16.mxu0 0
        %3398 = vmatpush1.bf16.msra.mxu0 %v3040
        %3399 = vmatprep.subr.bf16.mxu0 0
        %3400 = vmatpush1.bf16.msra.mxu0 %v3039
        %3401 = vmatprep.subr.bf16.mxu0 0
        %3402 = vmatpush1.bf16.msra.mxu0 %v3038
        %3403 = vmatprep.subr.bf16.mxu0 0
        %3404 = vmatpush1.bf16.msra.mxu0 %v3037
        %3405 = vmatprep.subr.bf16.mxu0 0
        %3406 = vmatpush2.bf16.msra.mxu0 %v3052
        %3407 = vmatprep.subr.bf16.mxu0 0
        %3408 = vmatpush2.bf16.msra.mxu0 %v3051
        %3409 = vmatprep.subr.bf16.mxu0 0
        %3410 = vmatpush2.bf16.msra.mxu0 %v3050
        %3411 = vmatprep.subr.bf16.mxu0 0
        %3412 = vmatpush2.bf16.msra.mxu0 %v3049
        %3413 = vmatprep.subr.bf16.mxu0 0
        %3414 = vmatpush2.bf16.msra.mxu0 %v3048
        %3415 = vmatprep.subr.bf16.mxu0 0
        %3416 = vmatpush2.bf16.msra.mxu0 %v3047
        %3417 = vmatprep.subr.bf16.mxu0 0
        %3418 = vmatpush2.bf16.msra.mxu0 %v3046
        %3419 = vmatprep.subr.bf16.mxu0 0
        %3420 = vmatpush2.bf16.msra.mxu0 %v3045
        %3421 = vmatprep.mubr.bf16.mxu0 %v2191
        %3422 = vmatmul.mubr.bf16.gmra.mxu0 %v2190
        %v3423 = vpop.f32.mrf.mxu0
        %v3424 = vadd.f32 %v3384, %v3423
        %v3425 = vpop.f32.mrf.mxu0
        %v3426 = vpop.f32.mrf.mxu0
        %v3427 = vpop.f32.mrf.mxu0
        %3428 = vdwg.mxu0
        %3429 = vmatprep.subr.bf16.mxu0 0
        %3430 = vmatpush1.bf16.msra.mxu0 %v3060
        %3431 = vmatprep.subr.bf16.mxu0 0
        %3432 = vmatpush1.bf16.msra.mxu0 %v3059
        %3433 = vmatprep.subr.bf16.mxu0 0
        %3434 = vmatpush1.bf16.msra.mxu0 %v3058
        %3435 = vmatprep.subr.bf16.mxu0 0
        %3436 = vmatpush1.bf16.msra.mxu0 %v3057
        %3437 = vmatprep.subr.bf16.mxu0 0
        %3438 = vmatpush1.bf16.msra.mxu0 %v3056
        %3439 = vmatprep.subr.bf16.mxu0 0
        %3440 = vmatpush1.bf16.msra.mxu0 %v3055
        %3441 = vmatprep.subr.bf16.mxu0 0
        %3442 = vmatpush1.bf16.msra.mxu0 %v3054
        %3443 = vmatprep.subr.bf16.mxu0 0
        %3444 = vmatpush1.bf16.msra.mxu0 %v3053
        %3445 = vmatprep.subr.bf16.mxu0 0
        %3446 = vmatpush2.bf16.msra.mxu0 %v3068
        %3447 = vmatprep.subr.bf16.mxu0 0
        %3448 = vmatpush2.bf16.msra.mxu0 %v3067
        %3449 = vmatprep.subr.bf16.mxu0 0
        %3450 = vmatpush2.bf16.msra.mxu0 %v3066
        %3451 = vmatprep.subr.bf16.mxu0 0
        %3452 = vmatpush2.bf16.msra.mxu0 %v3065
        %3453 = vmatprep.subr.bf16.mxu0 0
        %3454 = vmatpush2.bf16.msra.mxu0 %v3064
        %3455 = vmatprep.subr.bf16.mxu0 0
        %3456 = vmatpush2.bf16.msra.mxu0 %v3063
        %3457 = vmatprep.subr.bf16.mxu0 0
        %3458 = vmatpush2.bf16.msra.mxu0 %v3062
        %3459 = vmatprep.subr.bf16.mxu0 0
        %3460 = vmatpush2.bf16.msra.mxu0 %v3061
        %3461 = vmatprep.mubr.bf16.mxu0 %v2193
        %3462 = vmatmul.mubr.bf16.gmra.mxu0 %v2192
        %v3463 = vpop.f32.mrf.mxu0
        %v3464 = vadd.f32 %v3424, %v3463
        %v3465 = vpop.f32.mrf.mxu0
        %v3466 = vpop.f32.mrf.mxu0
        %v3467 = vpop.f32.mrf.mxu0
        %3468 = vdwg.mxu0
        %3469 = vmatprep.subr.bf16.mxu0 0
        %3470 = vmatpush1.bf16.msra.mxu0 %v3076
        %3471 = vmatprep.subr.bf16.mxu0 0
        %3472 = vmatpush1.bf16.msra.mxu0 %v3075
        %3473 = vmatprep.subr.bf16.mxu0 0
        %3474 = vmatpush1.bf16.msra.mxu0 %v3074
        %3475 = vmatprep.subr.bf16.mxu0 0
        %3476 = vmatpush1.bf16.msra.mxu0 %v3073
        %3477 = vmatprep.subr.bf16.mxu0 0
        %3478 = vmatpush1.bf16.msra.mxu0 %v3072
        %3479 = vmatprep.subr.bf16.mxu0 0
        %3480 = vmatpush1.bf16.msra.mxu0 %v3071
        %3481 = vmatprep.subr.bf16.mxu0 0
        %3482 = vmatpush1.bf16.msra.mxu0 %v3070
        %3483 = vmatprep.subr.bf16.mxu0 0
        %3484 = vmatpush1.bf16.msra.mxu0 %v3069
        %3485 = vmatprep.subr.bf16.mxu0 0
        %3486 = vmatpush2.bf16.msra.mxu0 %v3084
        %3487 = vmatprep.subr.bf16.mxu0 0
        %3488 = vmatpush2.bf16.msra.mxu0 %v3083
        %3489 = vmatprep.subr.bf16.mxu0 0
        %3490 = vmatpush2.bf16.msra.mxu0 %v3082
        %3491 = vmatprep.subr.bf16.mxu0 0
        %3492 = vmatpush2.bf16.msra.mxu0 %v3081
        %3493 = vmatprep.subr.bf16.mxu0 0
        %3494 = vmatpush2.bf16.msra.mxu0 %v3080
        %3495 = vmatprep.subr.bf16.mxu0 0
        %3496 = vmatpush2.bf16.msra.mxu0 %v3079
        %3497 = vmatprep.subr.bf16.mxu0 0
        %3498 = vmatpush2.bf16.msra.mxu0 %v3078
        %3499 = vmatprep.subr.bf16.mxu0 0
        %3500 = vmatpush2.bf16.msra.mxu0 %v3077
        %3501 = vmatprep.mubr.bf16.mxu0 %v2195
        %3502 = vmatmul.mubr.bf16.gmra.mxu0 %v2194
        %v3503 = vpop.f32.mrf.mxu0
        %v3504 = vadd.f32 %v3464, %v3503
        %v3505 = vpop.f32.mrf.mxu0
        %v3506 = vpop.f32.mrf.mxu0
        %v3507 = vpop.f32.mrf.mxu0
        %3508 = vdwg.mxu0
        %3509 = vmatprep.subr.bf16.mxu0 0
        %3510 = vmatpush1.bf16.msra.mxu0 %v3092
        %3511 = vmatprep.subr.bf16.mxu0 0
        %3512 = vmatpush1.bf16.msra.mxu0 %v3091
        %3513 = vmatprep.subr.bf16.mxu0 0
        %3514 = vmatpush1.bf16.msra.mxu0 %v3090
        %3515 = vmatprep.subr.bf16.mxu0 0
        %3516 = vmatpush1.bf16.msra.mxu0 %v3089
        %3517 = vmatprep.subr.bf16.mxu0 0
        %3518 = vmatpush1.bf16.msra.mxu0 %v3088
        %3519 = vmatprep.subr.bf16.mxu0 0
        %3520 = vmatpush1.bf16.msra.mxu0 %v3087
        %3521 = vmatprep.subr.bf16.mxu0 0
        %3522 = vmatpush1.bf16.msra.mxu0 %v3086
        %3523 = vmatprep.subr.bf16.mxu0 0
        %3524 = vmatpush1.bf16.msra.mxu0 %v3085
        %3525 = vmatprep.subr.bf16.mxu0 0
        %3526 = vmatpush2.bf16.msra.mxu0 %v3100
        %3527 = vmatprep.subr.bf16.mxu0 0
        %3528 = vmatpush2.bf16.msra.mxu0 %v3099
        %3529 = vmatprep.subr.bf16.mxu0 0
        %3530 = vmatpush2.bf16.msra.mxu0 %v3098
        %3531 = vmatprep.subr.bf16.mxu0 0
        %3532 = vmatpush2.bf16.msra.mxu0 %v3097
        %3533 = vmatprep.subr.bf16.mxu0 0
        %3534 = vmatpush2.bf16.msra.mxu0 %v3096
        %3535 = vmatprep.subr.bf16.mxu0 0
        %3536 = vmatpush2.bf16.msra.mxu0 %v3095
        %3537 = vmatprep.subr.bf16.mxu0 0
        %3538 = vmatpush2.bf16.msra.mxu0 %v3094
        %3539 = vmatprep.subr.bf16.mxu0 0
        %3540 = vmatpush2.bf16.msra.mxu0 %v3093
        %3541 = vmatprep.mubr.bf16.mxu0 %v2197
        %3542 = vmatmul.mubr.bf16.gmra.mxu0 %v2196
        %v3543 = vpop.f32.mrf.mxu0
        %v3544 = vadd.f32 %v3504, %v3543
        %v3545 = vpop.f32.mrf.mxu0
        %v3546 = vpop.f32.mrf.mxu0
        %v3547 = vpop.f32.mrf.mxu0
        %3548 = vdwg.mxu0
        %v3549 = vadd.f32 %v1557, %v3544
        %v3550 = vld [vmem:[%s746] sm:$0x1]
        %v3551 = vld [vmem:[%s749] sm:$0x1]
        %v3552 = vsel %vm838, %v3549, 0.0
        %3553 = vadd.xlane.f32.xlu0 %v3552
        %v3554 = vpop.xlane.xlu0 %3553
        %v3555 = vmul.f32 %v3554, %v1533
        %v3556 = vsub.f32 %v3549, %v3555
        %v3557 = vmul.f32 %v3556, %v3556
        %v3558 = vsel %vm838, %v3557, 0.0
        %3559 = vadd.xlane.f32.xlu0 %v3558
        %v3560 = vpop.xlane.xlu0 %3559
        %v3561 = vmul.f32 %v3560, %v1533
        %v3562 = vadd.f32 %v3561, 1e-05
        %v3563 = vrsqrt.pop %v3562
        %v3564 = vmul.f32 %v3556, %v3563
        %v3566 = vlaneseq
        %v3567 = vshrl.u32 %v3566, 7
        %v3568 = vsub.s32 0, %v3567
        %v3569 = vrot.slane %v3550, %v3568
        %v3571 = vmul.f32 %v3564, %v3569
        %v3573 = vlaneseq
        %v3574 = vshrl.u32 %v3573, 7
        %v3575 = vsub.s32 0, %v3574
        %v3576 = vrot.slane %v3551, %v3575
        %v3578 = vadd.f32 %v3571, %v3576
        %3579 = vst.msk [vmem:[#allocation2] sm:$0xff] %vm838, %v3578
        %p3580 = scmp.eq.s32.totalorder %s36, 1
        // Predicated region
        $region93: #{tpu_custom_call.1} parent=87 // pred_check
          %p3581 = pneg %p3580
        $region94: #{tpu_custom_call.1} parent=87 // pred_check_branch
          %3583 = sbr.rel (%p3581) target = $region96
        $region95: #{tpu_custom_call.1} parent=87 // pred_region
          %v3584 = vmax.f32 %v3578, 0.0
          %v3585 = vsel %vm838, %v3584, 0.0
          %v3586 = vrot.slane %v3585, 4
          %v3587 = vadd.f32 %v3585, %v3586
          %v3588 = vrot.slane %v3587, 2
          %v3589 = vadd.f32 %v3587, %v3588
          %v3590 = vrot.slane %v3589, 1
          %v3591 = vadd.f32 %v3589, %v3590
          %v3592 = vrcp.pop 8.0
          %v3593 = vmul.f32 %v3591, %v3592
          %v3594 = vpack.c.bf16 %v3593, %v3593
          %v3595 = vld [vmem:[%s15] sm:$0xf]
          %v3596 = vld [vmem:[%s15 + $0x4] sm:$0xf]
          %v3597 = vld [vmem:[%s15 + $0x8] sm:$0xf]
          %v3598 = vld [vmem:[%s15 + $0xc] sm:$0xf]
          %v3599 = vld [vmem:[%s16] sm:$0x1]
          %v3604 = vunpack.c.l.b16 %v3595
          %v3605 = vunpack.c.l.b16 %v3596
          %v3606 = vunpack.c.l.b16 %v3597
          %v3607 = vunpack.c.l.b16 %v3598
          %v3608 = vpack.c.b16 %v3605, %v3604
          %v3609 = vpack.c.b16 %v3607, %v3606
          %v3613 = vsel %vm838, %v3594, 0
          %3615 = vmatprep.subr.bf16.mxu0 0
          %3616 = vmatpush1.bf16.msra.mxu0 0
          %3617 = vmatprep.subr.bf16.mxu0 0
          %3618 = vmatpush1.bf16.msra.mxu0 0
          %3619 = vmatprep.subr.bf16.mxu0 0
          %3620 = vmatpush1.bf16.msra.mxu0 0
          %3621 = vmatprep.subr.bf16.mxu0 0
          %3622 = vmatpush1.bf16.msra.mxu0 0
          %3623 = vmatprep.subr.bf16.mxu0 0
          %3624 = vmatpush1.bf16.msra.mxu0 0
          %3625 = vmatprep.subr.bf16.mxu0 0
          %3626 = vmatpush1.bf16.msra.mxu0 0
          %3627 = vmatprep.subr.bf16.mxu0 0
          %3628 = vmatpush1.bf16.msra.mxu0 %v3609
          %3629 = vmatprep.subr.bf16.mxu0 0
          %3630 = vmatpush1.bf16.msra.mxu0 %v3608
          %3631 = vmatprep.subr.bf16.mxu0 0
          %3632 = vmatpush2.bf16.msra.mxu0 0
          %3633 = vmatprep.subr.bf16.mxu0 0
          %3634 = vmatpush2.bf16.msra.mxu0 0
          %3635 = vmatprep.subr.bf16.mxu0 0
          %3636 = vmatpush2.bf16.msra.mxu0 0
          %3637 = vmatprep.subr.bf16.mxu0 0
          %3638 = vmatpush2.bf16.msra.mxu0 0
          %3639 = vmatprep.subr.bf16.mxu0 0
          %3640 = vmatpush2.bf16.msra.mxu0 0
          %3641 = vmatprep.subr.bf16.mxu0 0
          %3642 = vmatpush2.bf16.msra.mxu0 0
          %3643 = vmatprep.subr.bf16.mxu0 0
          %3644 = vmatpush2.bf16.msra.mxu0 0
          %3645 = vmatprep.subr.bf16.mxu0 0
          %3646 = vmatpush2.bf16.msra.mxu0 0
          %3647 = vmatprep.mubr.bf16.mxu0 0
          %3648 = vmatmul.mubr.bf16.gmra.mxu0 %v3613
          %v3649 = vpop.f32.mrf.mxu0
          %v3650 = vadd.f32 %v3599, %v3649
          %v3651 = vpop.f32.mrf.mxu0
          %v3652 = vpop.f32.mrf.mxu0
          %v3653 = vpop.f32.mrf.mxu0
          %3654 = vdwg.mxu0
          %vm3655 = vcmask 253952
          %3656 = vst.msk [vmem:[%s700] sm:$0x1] %vm3655, %v3650
        $region96: #{tpu_custom_call.1} parent=87 // pred_fallthru
          _
        %s3657 = sand.u32 %s473, 1
        %s3658 = scalar_lea.sflag [#allocation4], %s3657
        %s3659 = sand.u32 %s473, 1
        %s3660 = scalar_lea.vmem [#allocation3], %s3659
        // Predicated region
        $region97: #{tpu_custom_call.1} parent=87 // pred_check
          %p3661 = pneg %p483
        $region98: #{tpu_custom_call.1} parent=87 // pred_check_branch
          %3663 = sbr.rel (%p3661) target = $region100
        $region99: #{tpu_custom_call.1} parent=87 // pred_region
          %s3665 = ssub.s32 16, 16
          %3666 = vsyncadd %s3658, %s3665
          %s3667 = smul.addr %s35, 16
          %s3668 = scalar_lea.hbm %s17, %s3667
          %s3670 = sshll.u32 %s3660, 4
          %s3671 = int_to_ptr.vmem [resolvable:$true] %s3670
          %3673 = dma.vmem_to_hbm [thread:$0]  %s3671, 16, %s3668, %s3658
        $region100: #{tpu_custom_call.1} parent=87 // pred_fallthru
          _
      $region88: #{tpu_custom_call.1} parent=5 // pred_fallthru
        _
      %p3674 = scmp.le.s32.totalorder 2, %s26
      // Predicated region
      $region101: #{tpu_custom_call.1} parent=5 // pred_check
        %p3675 = pneg %p3674
      $region102: #{tpu_custom_call.1} parent=5 // pred_check_branch
        %3677 = sbr.rel (%p3675) target = $region104
      $region103: #{tpu_custom_call.1} parent=5 // pred_region
        %s3678 = ssub.s32 %s26, 2
        // Predicated region
        $region105: #{tpu_custom_call.1} parent=103 // pred_check
          %p3679 = pneg %p489
        $region106: #{tpu_custom_call.1} parent=103 // pred_check_branch
          %3681 = sbr.rel (%p3679) target = $region108
        $region107: #{tpu_custom_call.1} parent=103 // pred_region
          %s3682 = sand.u32 %s474, 1
          %s3683 = scalar_lea.sflag [#allocation4], %s3682
          %s3684 = sand.u32 %s474, 1
          %s3685 = scalar_lea.vmem [#allocation3], %s3684
          %3686 = dma.done %s3683, 16
        $region108: #{tpu_custom_call.1} parent=103 // pred_fallthru
          _
      $region104: #{tpu_custom_call.1} parent=5 // pred_fallthru
        _
    $region6: #{tpu_custom_call.1} parent=1 // loop_footer
      %s30 = sadd.s32 1, %s26
    $region7: #{tpu_custom_call.1} parent=1 // loop_footer_branch
      %25 = sbr.rel target = $region3
    $region8: #{tpu_custom_call.1} parent=1 // loop_exit
      _
    %3687 = vsyncpa [#allocation4], 1
    %s3688 = scalar_lea.sflag [#allocation4], 1
    %3689 = vsyncpa %s3688, 1

</llo_original>
